<compile_context>
chip_gen: v7x
topology: tpu7x:2x2x1
jax: 0.10.0
libtpu: 0.0.40
codegen_flags: <defaults>
</compile_context>

<pallas_src>
import jax
import jax.numpy as jnp
import numpy as np
from jax.experimental import pallas as pl
from jax.experimental.pallas import tpu as pltpu

INPUT_DIM = 51
LATENT_DIM = 16
SEQ_LEN = 5
BN_EPS = 1e-5
PAD_MAX = 3          # max conv padding (kernel_size 7 -> padding 3)
MAX_CH = 256         # widest channel count in the network

PARAM_ORDER = (
    "w_enc0", "b_enc0", "w_enc1", "b_enc1", "w_enc2", "b_enc2",
    "w_enc_fc", "b_enc_fc",
    "w_dec_fold", "b_dec_fold",          # Linear+Unflatten+ConvT1+BN, pre-folded
    "w_dec1", "b_dec1", "w_dec2", "b_dec2",
)


# ----------------------------------------------------------------------------
# Fused forward kernel (one grid step = one batch element)
# ----------------------------------------------------------------------------
def _fused_fwd_kernel(x_ref,
                      we0, be0, we1, be1, we2, be2,
                      wfce, bfce, wdf, bdf,
                      wd1, bd1, wd2, bd2,
                      o_ref, hbuf):
    L = SEQ_LEN
    P = PAD_MAX

    def conv(cin, w_ref, b_ref, act):
        # "same" conv over the L valid rows stored at hbuf[P:P+L, :cin];
        # pad rows of hbuf are zero.
        k = w_ref.shape[0]
        cout = w_ref.shape[2]
        off = P - k // 2
        acc = jnp.zeros((L, cout), jnp.float32)
        for j in range(k):  # static tap loop -> MXU accumulates in f32
            xs = hbuf[off + j:off + j + L, :cin].astype(jnp.bfloat16)
            acc = acc + jnp.dot(xs, w_ref[j], preferred_element_type=jnp.float32)
        acc = acc + b_ref[...]                      # (1, cout) broadcast, f32
        if act == "relu":
            acc = jnp.maximum(acc, 0.0)
        elif act == "tanh":
            acc = jnp.tanh(acc)
        return acc

    # Zero only the pad rows each step (scratch is uninitialized; valid rows
    # are fully overwritten layer by layer and never read wider than written).
    hbuf[:P, :] = jnp.zeros((P, MAX_CH), jnp.float32)
    hbuf[P + L:, :] = jnp.zeros((P, MAX_CH), jnp.float32)
    hbuf[P:P + L, :INPUT_DIM] = x_ref[0]

    # ------------------------------ encoder ------------------------------
    h = conv(INPUT_DIM, we0, be0, "relu")           # (L, 64)
    hbuf[P:P + L, :64] = h
    h = conv(64, we1, be1, "relu")                  # (L, 128)
    hbuf[P:P + L, :128] = h
    h = conv(128, we2, be2, "relu")                 # (L, 256)
    hbuf[P:P + L, :256] = h

    # Flatten + Linear(1280 -> 16); channel-major flatten order folded into wfce.
    lat = bfce[...]                                 # (1, 16) f32
    for t in range(L):
        row = hbuf[P + t:P + t + 1, :256].astype(jnp.bfloat16)
        lat = lat + jnp.dot(row, wfce[t], preferred_element_type=jnp.float32)
    # Dropout(0.4): identity in eval mode.
    # TODO(synk): training-mode Dropout / batch-stat BatchNorm not implemented.

    # ------------------------------ decoder ------------------------------
    # Linear(16->1280) + Unflatten + ConvTranspose1d(256->128,k=7,p=3) + BN,
    # pre-folded into a single (16 -> L*128) matmul; ReLU applied here.
    dec = jnp.dot(lat.astype(jnp.bfloat16), wdf[...],
                  preferred_element_type=jnp.float32)        # (1, L*128)
    dec = jnp.maximum(dec + bdf[...], 0.0)
    for t in range(L):
        hbuf[P + t:P + t + 1, :128] = dec[:, t * 128:(t + 1) * 128]

    h = conv(128, wd1, bd1, "relu")                 # (L, 64)
    hbuf[P:P + L, :64] = h
    out = conv(64, wd2, bd2, "tanh")                # (L, 51)

    o_ref[0] = out.astype(o_ref.dtype)


# ----------------------------------------------------------------------------
# Wrapper: one pallas_call, grid over batch ("parallel")
# ----------------------------------------------------------------------------
def cnn_autoencoder_forward(x, params):
    """x: (B, L, D) with L=SEQ_LEN, D=INPUT_DIM -> reconstruction (B, L, D)."""
    B, L, D = x.shape
    assert L == SEQ_LEN and D == INPUT_DIM

    args = [params[name] for name in PARAM_ORDER]

    in_specs = [pl.BlockSpec((1, L, D), lambda b: (b, 0, 0))]
    for a in args:
        in_specs.append(pl.BlockSpec(a.shape, (lambda b, nd=a.ndim: (0,) * nd)))

    weight_bytes = int(sum(a.size * a.dtype.itemsize for a in args))
    macs_per_row = (3 * D * 64 + 5 * 64 * 128 + 7 * 128 * 256
                    + 256 * LATENT_DIM + LATENT_DIM * 128
                    + 5 * 128 * 64 + 3 * 64 * D)
    cost = pl.CostEstimate(
        flops=2 * B * L * macs_per_row,
        transcendentals=B * L * D,                       # final tanh
        bytes_accessed=weight_bytes + 2 * B * L * D * 4,
    )

    return pl.pallas_call(
        _fused_fwd_kernel,
        out_shape=jax.ShapeDtypeStruct((B, L, D), jnp.float32),
        grid_spec=pltpu.PrefetchScalarGridSpec(
            num_scalar_prefetch=0,
            grid=(B,),
            in_specs=in_specs,
            out_specs=pl.BlockSpec((1, L, D), lambda b: (b, 0, 0)),
            scratch_shapes=[
                pltpu.VMEM((SEQ_LEN + 2 * PAD_MAX, MAX_CH), jnp.float32),
            ],
        ),
        compiler_params=pltpu.CompilerParams(
            dimension_semantics=("parallel",),
            vmem_limit_bytes=32 * 1024 * 1024,
        ),
        cost_estimate=cost,
    )(x.astype(jnp.float32), *args)


# ----------------------------------------------------------------------------
# Deterministic parameter construction (PyTorch-like uniform init)
#   conv weights -> tap form (k, Cin, Cout) bf16, eval-mode BN folded
#   encoder FC   -> flatten permutation folded, (L, 256, 16) bf16
#   decoder Linear + Unflatten + ConvT1(256->128) + BN -> one (16, L*128) matmul
#   biases       -> f32
# ----------------------------------------------------------------------------
def make_params(key):
    keys = jax.random.split(key, 16)

    def uinit(k, shape, fan_in):
        bound = 1.0 / np.sqrt(fan_in)
        return jax.random.uniform(k, shape, jnp.float32, -bound, bound)

    def bn_identity(c):
        return (jnp.ones((c,), jnp.float32), jnp.zeros((c,), jnp.float32),
                jnp.zeros((c,), jnp.float32), jnp.ones((c,), jnp.float32))

    def fold_bn_taps(w_taps, b, gamma, beta, mean, var, eps=BN_EPS):
        scale = gamma / jnp.sqrt(var + eps)
        return w_taps * scale[None, None, :], (b - mean) * scale + beta

    p = {}

    # ----- encoder convs (Conv1d + eval-mode BN folded) -----
    conv_defs = [(INPUT_DIM, 64, 3), (64, 128, 5), (128, 256, 7)]
    for i, (cin, cout, k) in enumerate(conv_defs):
        w = uinit(keys[2 * i], (cout, cin, k), cin * k)       # torch (Cout,Cin,k)
        b = uinit(keys[2 * i + 1], (cout,), cin * k)
        w_taps = jnp.transpose(w, (2, 1, 0))                  # (k, Cin, Cout)
        g, bt, mu, var = bn_identity(cout)
        w_taps, b = fold_bn_taps(w_taps, b, g, bt, mu, var)
        p[f"w_enc{i}"] = w_taps.astype(jnp.bfloat16)
        p[f"b_enc{i}"] = b.reshape(1, cout)

    # ----- encoder linear (1280 -> 16); torch flat col index = c*L + t -----
    w = uinit(keys[6], (LATENT_DIM, SEQ_LEN * 256), SEQ_LEN * 256)
    b = uinit(keys[7], (LATENT_DIM,), SEQ_LEN * 256)
    w_e = jnp.transpose(w.reshape(LATENT_DIM, 256, SEQ_LEN), (2, 1, 0))  # (L,256,16)
    p["w_enc_fc"] = w_e.astype(jnp.bfloat16)
    p["b_enc_fc"] = b.reshape(1, LATENT_DIM)

    # ----- decoder Linear(16->1280) + Unflatten + ConvT1d(256->128,k=7,p=3) + BN
    #       folded into Wcomb (L,16,128) / Bcomb (L,128) at construction time.
    wl = uinit(keys[8], (SEQ_LEN * 256, LATENT_DIM), LATENT_DIM)   # torch (out,in)
    bl = uinit(keys[9], (SEQ_LEN * 256,), LATENT_DIM)
    wt1 = uinit(keys[10], (256, 128, 7), 256 * 7)                  # torch (Cin,Cout,k)
    bconv1 = uinit(keys[11], (128,), 256 * 7)

    Wd = wl.reshape(256, SEQ_LEN, LATENT_DIM)     # Wd[c, s, k] = wl[c*L+s, k]
    bd = bl.reshape(256, SEQ_LEN)                 # bd[c, s]   = bl[c*L+s]
    K1, P1 = 7, 3
    Wcomb = jnp.zeros((SEQ_LEN, LATENT_DIM, 128), jnp.float32)
    Bcomb = jnp.zeros((SEQ_LEN, 128), jnp.float32) + bconv1[None, :]
    for t in range(SEQ_LEN):
        for j in range(K1):
            s = t + j - P1
            if 0 <= s < SEQ_LEN:
                wtap = wt1[:, :, K1 - 1 - j]                  # (256,128): [c,co]
                Wcomb = Wcomb.at[t].add(
                    jnp.einsum("ck,co->ko", Wd[:, s, :], wtap))
                Bcomb = Bcomb.at[t].add(bd[:, s] @ wtap)
    g, bt, mu, var = bn_identity(128)
    scale = g / jnp.sqrt(var + BN_EPS)
    Wcomb = Wcomb * scale[None, None, :]
    Bcomb = (Bcomb - mu[None, :]) * scale[None, :] + bt[None, :]
    p["w_dec_fold"] = (jnp.transpose(Wcomb, (1, 0, 2))
                       .reshape(LATENT_DIM, SEQ_LEN * 128).astype(jnp.bfloat16))
    p["b_dec_fold"] = Bcomb.reshape(1, SEQ_LEN * 128)

    # ----- remaining transposed convs (stride=1, pad=(k-1)/2 -> equiv Conv1d) -----
    deconv_defs = [(128, 64, 5, True), (64, INPUT_DIM, 3, False)]
    for i, (cin, cout, k, has_bn) in enumerate(deconv_defs):
        wt = uinit(keys[12 + 2 * i], (cin, cout, k), cin * k)  # torch (Cin,Cout,k)
        b = uinit(keys[13 + 2 * i], (cout,), cin * k)
        # w_taps[j, ci, co] = wt[ci, co, k-1-j]  (flip taps, swap channels)
        w_taps = jnp.flip(jnp.transpose(wt, (2, 0, 1)), axis=0)
        if has_bn:
            g, bt, mu, var = bn_identity(cout)
            w_taps, b = fold_bn_taps(w_taps, b, g, bt, mu, var)
        p[f"w_dec{i + 1}"] = w_taps.astype(jnp.bfloat16)
        p[f"b_dec{i + 1}"] = b.reshape(1, cout)

    return p


if __name__ == "__main__":
    key = jax.random.PRNGKey(0)
    pkey, xkey = jax.random.split(key)

    params = make_params(pkey)
    batch = 2
    x = jax.random.normal(xkey, (batch, SEQ_LEN, INPUT_DIM), jnp.float32)

    fwd = jax.jit(lambda inp: cnn_autoencoder_forward(inp, params))
    y = fwd(x)
    jax.block_until_ready(y)

    assert y.shape == (batch, SEQ_LEN, INPUT_DIM), y.shape
    assert bool(jnp.all(jnp.isfinite(y)))
    assert bool(jnp.all(jnp.abs(y) <= 1.0 + 1e-6))  # tanh output range
    print("KERNEL_OK")
</pallas_src>

<mosaic_0001>
module attributes {stable_mosaic.version = 11 : i64} {
  func.func @_fused_fwd_kernel(%arg0: i32, %arg1: memref<1x5x51xf32, #tpu.memory_space<vmem>>, %arg2: memref<3x51x64xbf16, #tpu.memory_space<vmem>>, %arg3: memref<1x64xf32, #tpu.memory_space<vmem>>, %arg4: memref<5x64x128xbf16, #tpu.memory_space<vmem>>, %arg5: memref<1x128xf32, #tpu.memory_space<vmem>>, %arg6: memref<7x128x256xbf16, #tpu.memory_space<vmem>>, %arg7: memref<1x256xf32, #tpu.memory_space<vmem>>, %arg8: memref<5x256x16xbf16, #tpu.memory_space<vmem>>, %arg9: memref<1x16xf32, #tpu.memory_space<vmem>>, %arg10: memref<16x640xbf16, #tpu.memory_space<vmem>>, %arg11: memref<1x640xf32, #tpu.memory_space<vmem>>, %arg12: memref<5x128x64xbf16, #tpu.memory_space<vmem>>, %arg13: memref<1x64xf32, #tpu.memory_space<vmem>>, %arg14: memref<3x64x51xbf16, #tpu.memory_space<vmem>>, %arg15: memref<1x51xf32, #tpu.memory_space<vmem>>, %arg16: memref<1x5x51xf32, #tpu.memory_space<vmem>>, %arg17: memref<11x256xf32, #tpu.memory_space<vmem>>) attributes {dimension_semantics = [#tpu.dimension_semantics<parallel>], iteration_bounds = array<i64: 2>, scalar_prefetch = 0 : i64, scratch_operands = 1 : i64, tpu.core_type = #tpu.core_type<tc>, window_params = [{transform_indices = @transform_0, window_bounds = array<i64: 1, 5, 51>}, {pipeline_mode = #tpu.pipeline_mode<synchronous>, transform_indices = @transform_1, window_bounds = array<i64: 3, 51, 64>}, {pipeline_mode = #tpu.pipeline_mode<synchronous>, transform_indices = @transform_2, window_bounds = array<i64: 1, 64>}, {pipeline_mode = #tpu.pipeline_mode<synchronous>, transform_indices = @transform_3, window_bounds = array<i64: 5, 64, 128>}, {pipeline_mode = #tpu.pipeline_mode<synchronous>, transform_indices = @transform_4, window_bounds = array<i64: 1, 128>}, {pipeline_mode = #tpu.pipeline_mode<synchronous>, transform_indices = @transform_5, window_bounds = array<i64: 7, 128, 256>}, {pipeline_mode = #tpu.pipeline_mode<synchronous>, transform_indices = @transform_6, window_bounds = array<i64: 1, 256>}, {pipeline_mode = #tpu.pipeline_mode<synchronous>, transform_indices = @transform_7, window_bounds = array<i64: 5, 256, 16>}, {pipeline_mode = #tpu.pipeline_mode<synchronous>, transform_indices = @transform_8, window_bounds = array<i64: 1, 16>}, {pipeline_mode = #tpu.pipeline_mode<synchronous>, transform_indices = @transform_9, window_bounds = array<i64: 16, 640>}, {pipeline_mode = #tpu.pipeline_mode<synchronous>, transform_indices = @transform_10, window_bounds = array<i64: 1, 640>}, {pipeline_mode = #tpu.pipeline_mode<synchronous>, transform_indices = @transform_11, window_bounds = array<i64: 5, 128, 64>}, {pipeline_mode = #tpu.pipeline_mode<synchronous>, transform_indices = @transform_12, window_bounds = array<i64: 1, 64>}, {pipeline_mode = #tpu.pipeline_mode<synchronous>, transform_indices = @transform_13, window_bounds = array<i64: 3, 64, 51>}, {pipeline_mode = #tpu.pipeline_mode<synchronous>, transform_indices = @transform_14, window_bounds = array<i64: 1, 51>}, {transform_indices = @transform_15, window_bounds = array<i64: 1, 5, 51>}]} {
    %cst = arith.constant 0.000000e+00 : f32
    %0 = vector.broadcast %cst : f32 to vector<3x256xf32>
    %c0 = arith.constant 0 : index
    %c0_0 = arith.constant 0 : index
    %1 = vector.load %arg17[%c0, %c0_0] : memref<11x256xf32, #tpu.memory_space<vmem>>, vector<3x256xf32>
    tpu.vector_store %arg17[%c0, %c0_0], %0 {strides = array<i32>} : memref<11x256xf32, #tpu.memory_space<vmem>>, vector<3x256xf32>,
    %cst_1 = arith.constant 0.000000e+00 : f32
    %2 = vector.broadcast %cst_1 : f32 to vector<3x256xf32>
    %c8 = arith.constant 8 : index
    %c0_2 = arith.constant 0 : index
    %3 = vector.load %arg17[%c8, %c0_2] : memref<11x256xf32, #tpu.memory_space<vmem>>, vector<3x256xf32>
    tpu.vector_store %arg17[%c8, %c0_2], %2 {strides = array<i32>} : memref<11x256xf32, #tpu.memory_space<vmem>>, vector<3x256xf32>,
    %c0_3 = arith.constant 0 : index
    %c0_4 = arith.constant 0 : index
    %c0_5 = arith.constant 0 : index
    %4 = vector.load %arg1[%c0_3, %c0_4, %c0_5] : memref<1x5x51xf32, #tpu.memory_space<vmem>>, vector<1x5x51xf32>
    %5 = vector.shape_cast %4 : vector<1x5x51xf32> to vector<5x51xf32>
    %c3 = arith.constant 3 : index
    %c0_6 = arith.constant 0 : index
    %6 = vector.load %arg17[%c3, %c0_6] : memref<11x256xf32, #tpu.memory_space<vmem>>, vector<5x51xf32>
    tpu.vector_store %arg17[%c3, %c0_6], %5 {strides = array<i32>} : memref<11x256xf32, #tpu.memory_space<vmem>>, vector<5x51xf32>,
    %cst_7 = arith.constant 0.000000e+00 : f32
    %7 = vector.broadcast %cst_7 : f32 to vector<5x64xf32>
    %c2 = arith.constant 2 : index
    %c0_8 = arith.constant 0 : index
    %8 = vector.load %arg17[%c2, %c0_8] : memref<11x256xf32, #tpu.memory_space<vmem>>, vector<5x51xf32>
    %9 = arith.truncf %8 : vector<5x51xf32> to vector<5x51xbf16>
    %c0_9 = arith.constant 0 : index
    %c0_10 = arith.constant 0 : index
    %c0_11 = arith.constant 0 : index
    %10 = vector.load %arg2[%c0_9, %c0_10, %c0_11] : memref<3x51x64xbf16, #tpu.memory_space<vmem>>, vector<1x51x64xbf16>
    %11 = vector.shape_cast %10 : vector<1x51x64xbf16> to vector<51x64xbf16>
    %cst_12 = arith.constant dense<0.000000e+00> : vector<5x64xf32>
    %12 = tpu.matmul %9, %11, %cst_12 {dimension_numbers = #tpu.dot_dimension_numbers<[1], [0], [0], [1], [0, 0, 1, 1], [], []>} : vector<5x51xbf16>, vector<51x64xbf16>, vector<5x64xf32> -> vector<5x64xf32>
    %13 = arith.addf %7, %12 : vector<5x64xf32>
    %c3_13 = arith.constant 3 : index
    %c0_14 = arith.constant 0 : index
    %14 = vector.load %arg17[%c3_13, %c0_14] : memref<11x256xf32, #tpu.memory_space<vmem>>, vector<5x51xf32>
    %15 = arith.truncf %14 : vector<5x51xf32> to vector<5x51xbf16>
    %c1 = arith.constant 1 : index
    %c0_15 = arith.constant 0 : index
    %c0_16 = arith.constant 0 : index
    %16 = vector.load %arg2[%c1, %c0_15, %c0_16] : memref<3x51x64xbf16, #tpu.memory_space<vmem>>, vector<1x51x64xbf16>
    %17 = vector.shape_cast %16 : vector<1x51x64xbf16> to vector<51x64xbf16>
    %cst_17 = arith.constant dense<0.000000e+00> : vector<5x64xf32>
    %18 = tpu.matmul %15, %17, %cst_17 {dimension_numbers = #tpu.dot_dimension_numbers<[1], [0], [0], [1], [0, 0, 1, 1], [], []>} : vector<5x51xbf16>, vector<51x64xbf16>, vector<5x64xf32> -> vector<5x64xf32>
    %19 = arith.addf %13, %18 : vector<5x64xf32>
    %c4 = arith.constant 4 : index
    %c0_18 = arith.constant 0 : index
    %20 = vector.load %arg17[%c4, %c0_18] : memref<11x256xf32, #tpu.memory_space<vmem>>, vector<5x51xf32>
    %21 = arith.truncf %20 : vector<5x51xf32> to vector<5x51xbf16>
    %c2_19 = arith.constant 2 : index
    %c0_20 = arith.constant 0 : index
    %c0_21 = arith.constant 0 : index
    %22 = vector.load %arg2[%c2_19, %c0_20, %c0_21] : memref<3x51x64xbf16, #tpu.memory_space<vmem>>, vector<1x51x64xbf16>
    %23 = vector.shape_cast %22 : vector<1x51x64xbf16> to vector<51x64xbf16>
    %cst_22 = arith.constant dense<0.000000e+00> : vector<5x64xf32>
    %24 = tpu.matmul %21, %23, %cst_22 {dimension_numbers = #tpu.dot_dimension_numbers<[1], [0], [0], [1], [0, 0, 1, 1], [], []>} : vector<5x51xbf16>, vector<51x64xbf16>, vector<5x64xf32> -> vector<5x64xf32>
    %25 = arith.addf %19, %24 : vector<5x64xf32>
    %c0_23 = arith.constant 0 : index
    %c0_24 = arith.constant 0 : index
    %26 = vector.load %arg3[%c0_23, %c0_24] : memref<1x64xf32, #tpu.memory_space<vmem>>, vector<1x64xf32>
    %27 = vector.broadcast %26 : vector<1x64xf32> to vector<5x64xf32>
    %28 = arith.addf %25, %27 : vector<5x64xf32>
    %cst_25 = arith.constant 0.000000e+00 : f32
    %29 = vector.broadcast %cst_25 : f32 to vector<5x64xf32>
    %30 = arith.maximumf %28, %29 : vector<5x64xf32>
    %c3_26 = arith.constant 3 : index
    %c0_27 = arith.constant 0 : index
    %31 = vector.load %arg17[%c3_26, %c0_27] : memref<11x256xf32, #tpu.memory_space<vmem>>, vector<5x64xf32>
    tpu.vector_store %arg17[%c3_26, %c0_27], %30 {strides = array<i32>} : memref<11x256xf32, #tpu.memory_space<vmem>>, vector<5x64xf32>,
    %cst_28 = arith.constant 0.000000e+00 : f32
    %32 = vector.broadcast %cst_28 : f32 to vector<5x128xf32>
    %c1_29 = arith.constant 1 : index
    %c0_30 = arith.constant 0 : index
    %33 = vector.load %arg17[%c1_29, %c0_30] : memref<11x256xf32, #tpu.memory_space<vmem>>, vector<5x64xf32>
    %34 = arith.truncf %33 : vector<5x64xf32> to vector<5x64xbf16>
    %c0_31 = arith.constant 0 : index
    %c0_32 = arith.constant 0 : index
    %c0_33 = arith.constant 0 : index
    %35 = vector.load %arg4[%c0_31, %c0_32, %c0_33] : memref<5x64x128xbf16, #tpu.memory_space<vmem>>, vector<1x64x128xbf16>
    %36 = vector.shape_cast %35 : vector<1x64x128xbf16> to vector<64x128xbf16>
    %cst_34 = arith.constant dense<0.000000e+00> : vector<5x128xf32>
    %37 = tpu.matmul %34, %36, %cst_34 {dimension_numbers = #tpu.dot_dimension_numbers<[1], [0], [0], [1], [0, 0, 1, 1], [], []>} : vector<5x64xbf16>, vector<64x128xbf16>, vector<5x128xf32> -> vector<5x128xf32>
    %38 = arith.addf %32, %37 : vector<5x128xf32>
    %c2_35 = arith.constant 2 : index
    %c0_36 = arith.constant 0 : index
    %39 = vector.load %arg17[%c2_35, %c0_36] : memref<11x256xf32, #tpu.memory_space<vmem>>, vector<5x64xf32>
    %40 = arith.truncf %39 : vector<5x64xf32> to vector<5x64xbf16>
    %c1_37 = arith.constant 1 : index
    %c0_38 = arith.constant 0 : index
    %c0_39 = arith.constant 0 : index
    %41 = vector.load %arg4[%c1_37, %c0_38, %c0_39] : memref<5x64x128xbf16, #tpu.memory_space<vmem>>, vector<1x64x128xbf16>
    %42 = vector.shape_cast %41 : vector<1x64x128xbf16> to vector<64x128xbf16>
    %cst_40 = arith.constant dense<0.000000e+00> : vector<5x128xf32>
    %43 = tpu.matmul %40, %42, %cst_40 {dimension_numbers = #tpu.dot_dimension_numbers<[1], [0], [0], [1], [0, 0, 1, 1], [], []>} : vector<5x64xbf16>, vector<64x128xbf16>, vector<5x128xf32> -> vector<5x128xf32>
    %44 = arith.addf %38, %43 : vector<5x128xf32>
    %c3_41 = arith.constant 3 : index
    %c0_42 = arith.constant 0 : index
    %45 = vector.load %arg17[%c3_41, %c0_42] : memref<11x256xf32, #tpu.memory_space<vmem>>, vector<5x64xf32>
    %46 = arith.truncf %45 : vector<5x64xf32> to vector<5x64xbf16>
    %c2_43 = arith.constant 2 : index
    %c0_44 = arith.constant 0 : index
    %c0_45 = arith.constant 0 : index
    %47 = vector.load %arg4[%c2_43, %c0_44, %c0_45] : memref<5x64x128xbf16, #tpu.memory_space<vmem>>, vector<1x64x128xbf16>
    %48 = vector.shape_cast %47 : vector<1x64x128xbf16> to vector<64x128xbf16>
    %cst_46 = arith.constant dense<0.000000e+00> : vector<5x128xf32>
    %49 = tpu.matmul %46, %48, %cst_46 {dimension_numbers = #tpu.dot_dimension_numbers<[1], [0], [0], [1], [0, 0, 1, 1], [], []>} : vector<5x64xbf16>, vector<64x128xbf16>, vector<5x128xf32> -> vector<5x128xf32>
    %50 = arith.addf %44, %49 : vector<5x128xf32>
    %c4_47 = arith.constant 4 : index
    %c0_48 = arith.constant 0 : index
    %51 = vector.load %arg17[%c4_47, %c0_48] : memref<11x256xf32, #tpu.memory_space<vmem>>, vector<5x64xf32>
    %52 = arith.truncf %51 : vector<5x64xf32> to vector<5x64xbf16>
    %c3_49 = arith.constant 3 : index
    %c0_50 = arith.constant 0 : index
    %c0_51 = arith.constant 0 : index
    %53 = vector.load %arg4[%c3_49, %c0_50, %c0_51] : memref<5x64x128xbf16, #tpu.memory_space<vmem>>, vector<1x64x128xbf16>
    %54 = vector.shape_cast %53 : vector<1x64x128xbf16> to vector<64x128xbf16>
    %cst_52 = arith.constant dense<0.000000e+00> : vector<5x128xf32>
    %55 = tpu.matmul %52, %54, %cst_52 {dimension_numbers = #tpu.dot_dimension_numbers<[1], [0], [0], [1], [0, 0, 1, 1], [], []>} : vector<5x64xbf16>, vector<64x128xbf16>, vector<5x128xf32> -> vector<5x128xf32>
    %56 = arith.addf %50, %55 : vector<5x128xf32>
    %c5 = arith.constant 5 : index
    %c0_53 = arith.constant 0 : index
    %57 = vector.load %arg17[%c5, %c0_53] : memref<11x256xf32, #tpu.memory_space<vmem>>, vector<5x64xf32>
    %58 = arith.truncf %57 : vector<5x64xf32> to vector<5x64xbf16>
    %c4_54 = arith.constant 4 : index
    %c0_55 = arith.constant 0 : index
    %c0_56 = arith.constant 0 : index
    %59 = vector.load %arg4[%c4_54, %c0_55, %c0_56] : memref<5x64x128xbf16, #tpu.memory_space<vmem>>, vector<1x64x128xbf16>
    %60 = vector.shape_cast %59 : vector<1x64x128xbf16> to vector<64x128xbf16>
    %cst_57 = arith.constant dense<0.000000e+00> : vector<5x128xf32>
    %61 = tpu.matmul %58, %60, %cst_57 {dimension_numbers = #tpu.dot_dimension_numbers<[1], [0], [0], [1], [0, 0, 1, 1], [], []>} : vector<5x64xbf16>, vector<64x128xbf16>, vector<5x128xf32> -> vector<5x128xf32>
    %62 = arith.addf %56, %61 : vector<5x128xf32>
    %c0_58 = arith.constant 0 : index
    %c0_59 = arith.constant 0 : index
    %63 = vector.load %arg5[%c0_58, %c0_59] : memref<1x128xf32, #tpu.memory_space<vmem>>, vector<1x128xf32>
    %64 = vector.broadcast %63 : vector<1x128xf32> to vector<5x128xf32>
    %65 = arith.addf %62, %64 : vector<5x128xf32>
    %cst_60 = arith.constant 0.000000e+00 : f32
    %66 = vector.broadcast %cst_60 : f32 to vector<5x128xf32>
    %67 = arith.maximumf %65, %66 : vector<5x128xf32>
    %c3_61 = arith.constant 3 : index
    %c0_62 = arith.constant 0 : index
    %68 = vector.load %arg17[%c3_61, %c0_62] : memref<11x256xf32, #tpu.memory_space<vmem>>, vector<5x128xf32>
    tpu.vector_store %arg17[%c3_61, %c0_62], %67 {strides = array<i32>} : memref<11x256xf32, #tpu.memory_space<vmem>>, vector<5x128xf32>,
    %cst_63 = arith.constant 0.000000e+00 : f32
    %69 = vector.broadcast %cst_63 : f32 to vector<5x256xf32>
    %c0_64 = arith.constant 0 : index
    %c0_65 = arith.constant 0 : index
    %70 = vector.load %arg17[%c0_64, %c0_65] : memref<11x256xf32, #tpu.memory_space<vmem>>, vector<5x128xf32>
    %71 = arith.truncf %70 : vector<5x128xf32> to vector<5x128xbf16>
    %c0_66 = arith.constant 0 : index
    %c0_67 = arith.constant 0 : index
    %c0_68 = arith.constant 0 : index
    %72 = vector.load %arg6[%c0_66, %c0_67, %c0_68] : memref<7x128x256xbf16, #tpu.memory_space<vmem>>, vector<1x128x256xbf16>
    %73 = vector.shape_cast %72 : vector<1x128x256xbf16> to vector<128x256xbf16>
    %cst_69 = arith.constant dense<0.000000e+00> : vector<5x256xf32>
    %74 = tpu.matmul %71, %73, %cst_69 {dimension_numbers = #tpu.dot_dimension_numbers<[1], [0], [0], [1], [0, 0, 1, 1], [], []>} : vector<5x128xbf16>, vector<128x256xbf16>, vector<5x256xf32> -> vector<5x256xf32>
    %75 = arith.addf %69, %74 : vector<5x256xf32>
    %c1_70 = arith.constant 1 : index
    %c0_71 = arith.constant 0 : index
    %76 = vector.load %arg17[%c1_70, %c0_71] : memref<11x256xf32, #tpu.memory_space<vmem>>, vector<5x128xf32>
    %77 = arith.truncf %76 : vector<5x128xf32> to vector<5x128xbf16>
    %c1_72 = arith.constant 1 : index
    %c0_73 = arith.constant 0 : index
    %c0_74 = arith.constant 0 : index
    %78 = vector.load %arg6[%c1_72, %c0_73, %c0_74] : memref<7x128x256xbf16, #tpu.memory_space<vmem>>, vector<1x128x256xbf16>
    %79 = vector.shape_cast %78 : vector<1x128x256xbf16> to vector<128x256xbf16>
    %cst_75 = arith.constant dense<0.000000e+00> : vector<5x256xf32>
    %80 = tpu.matmul %77, %79, %cst_75 {dimension_numbers = #tpu.dot_dimension_numbers<[1], [0], [0], [1], [0, 0, 1, 1], [], []>} : vector<5x128xbf16>, vector<128x256xbf16>, vector<5x256xf32> -> vector<5x256xf32>
    %81 = arith.addf %75, %80 : vector<5x256xf32>
    %c2_76 = arith.constant 2 : index
    %c0_77 = arith.constant 0 : index
    %82 = vector.load %arg17[%c2_76, %c0_77] : memref<11x256xf32, #tpu.memory_space<vmem>>, vector<5x128xf32>
    %83 = arith.truncf %82 : vector<5x128xf32> to vector<5x128xbf16>
    %c2_78 = arith.constant 2 : index
    %c0_79 = arith.constant 0 : index
    %c0_80 = arith.constant 0 : index
    %84 = vector.load %arg6[%c2_78, %c0_79, %c0_80] : memref<7x128x256xbf16, #tpu.memory_space<vmem>>, vector<1x128x256xbf16>
    %85 = vector.shape_cast %84 : vector<1x128x256xbf16> to vector<128x256xbf16>
    %cst_81 = arith.constant dense<0.000000e+00> : vector<5x256xf32>
    %86 = tpu.matmul %83, %85, %cst_81 {dimension_numbers = #tpu.dot_dimension_numbers<[1], [0], [0], [1], [0, 0, 1, 1], [], []>} : vector<5x128xbf16>, vector<128x256xbf16>, vector<5x256xf32> -> vector<5x256xf32>
    %87 = arith.addf %81, %86 : vector<5x256xf32>
    %c3_82 = arith.constant 3 : index
    %c0_83 = arith.constant 0 : index
    %88 = vector.load %arg17[%c3_82, %c0_83] : memref<11x256xf32, #tpu.memory_space<vmem>>, vector<5x128xf32>
    %89 = arith.truncf %88 : vector<5x128xf32> to vector<5x128xbf16>
    %c3_84 = arith.constant 3 : index
    %c0_85 = arith.constant 0 : index
    %c0_86 = arith.constant 0 : index
    %90 = vector.load %arg6[%c3_84, %c0_85, %c0_86] : memref<7x128x256xbf16, #tpu.memory_space<vmem>>, vector<1x128x256xbf16>
    %91 = vector.shape_cast %90 : vector<1x128x256xbf16> to vector<128x256xbf16>
    %cst_87 = arith.constant dense<0.000000e+00> : vector<5x256xf32>
    %92 = tpu.matmul %89, %91, %cst_87 {dimension_numbers = #tpu.dot_dimension_numbers<[1], [0], [0], [1], [0, 0, 1, 1], [], []>} : vector<5x128xbf16>, vector<128x256xbf16>, vector<5x256xf32> -> vector<5x256xf32>
    %93 = arith.addf %87, %92 : vector<5x256xf32>
    %c4_88 = arith.constant 4 : index
    %c0_89 = arith.constant 0 : index
    %94 = vector.load %arg17[%c4_88, %c0_89] : memref<11x256xf32, #tpu.memory_space<vmem>>, vector<5x128xf32>
    %95 = arith.truncf %94 : vector<5x128xf32> to vector<5x128xbf16>
    %c4_90 = arith.constant 4 : index
    %c0_91 = arith.constant 0 : index
    %c0_92 = arith.constant 0 : index
    %96 = vector.load %arg6[%c4_90, %c0_91, %c0_92] : memref<7x128x256xbf16, #tpu.memory_space<vmem>>, vector<1x128x256xbf16>
    %97 = vector.shape_cast %96 : vector<1x128x256xbf16> to vector<128x256xbf16>
    %cst_93 = arith.constant dense<0.000000e+00> : vector<5x256xf32>
    %98 = tpu.matmul %95, %97, %cst_93 {dimension_numbers = #tpu.dot_dimension_numbers<[1], [0], [0], [1], [0, 0, 1, 1], [], []>} : vector<5x128xbf16>, vector<128x256xbf16>, vector<5x256xf32> -> vector<5x256xf32>
    %99 = arith.addf %93, %98 : vector<5x256xf32>
    %c5_94 = arith.constant 5 : index
    %c0_95 = arith.constant 0 : index
    %100 = vector.load %arg17[%c5_94, %c0_95] : memref<11x256xf32, #tpu.memory_space<vmem>>, vector<5x128xf32>
    %101 = arith.truncf %100 : vector<5x128xf32> to vector<5x128xbf16>
    %c5_96 = arith.constant 5 : index
    %c0_97 = arith.constant 0 : index
    %c0_98 = arith.constant 0 : index
    %102 = vector.load %arg6[%c5_96, %c0_97, %c0_98] : memref<7x128x256xbf16, #tpu.memory_space<vmem>>, vector<1x128x256xbf16>
    %103 = vector.shape_cast %102 : vector<1x128x256xbf16> to vector<128x256xbf16>
    %cst_99 = arith.constant dense<0.000000e+00> : vector<5x256xf32>
    %104 = tpu.matmul %101, %103, %cst_99 {dimension_numbers = #tpu.dot_dimension_numbers<[1], [0], [0], [1], [0, 0, 1, 1], [], []>} : vector<5x128xbf16>, vector<128x256xbf16>, vector<5x256xf32> -> vector<5x256xf32>
    %105 = arith.addf %99, %104 : vector<5x256xf32>
    %c6 = arith.constant 6 : index
    %c0_100 = arith.constant 0 : index
    %106 = vector.load %arg17[%c6, %c0_100] : memref<11x256xf32, #tpu.memory_space<vmem>>, vector<5x128xf32>
    %107 = arith.truncf %106 : vector<5x128xf32> to vector<5x128xbf16>
    %c6_101 = arith.constant 6 : index
    %c0_102 = arith.constant 0 : index
    %c0_103 = arith.constant 0 : index
    %108 = vector.load %arg6[%c6_101, %c0_102, %c0_103] : memref<7x128x256xbf16, #tpu.memory_space<vmem>>, vector<1x128x256xbf16>
    %109 = vector.shape_cast %108 : vector<1x128x256xbf16> to vector<128x256xbf16>
    %cst_104 = arith.constant dense<0.000000e+00> : vector<5x256xf32>
    %110 = tpu.matmul %107, %109, %cst_104 {dimension_numbers = #tpu.dot_dimension_numbers<[1], [0], [0], [1], [0, 0, 1, 1], [], []>} : vector<5x128xbf16>, vector<128x256xbf16>, vector<5x256xf32> -> vector<5x256xf32>
    %111 = arith.addf %105, %110 : vector<5x256xf32>
    %c0_105 = arith.constant 0 : index
    %c0_106 = arith.constant 0 : index
    %112 = vector.load %arg7[%c0_105, %c0_106] : memref<1x256xf32, #tpu.memory_space<vmem>>, vector<1x256xf32>
    %113 = vector.broadcast %112 : vector<1x256xf32> to vector<5x256xf32>
    %114 = arith.addf %111, %113 : vector<5x256xf32>
    %cst_107 = arith.constant 0.000000e+00 : f32
    %115 = vector.broadcast %cst_107 : f32 to vector<5x256xf32>
    %116 = arith.maximumf %114, %115 : vector<5x256xf32>
    %c3_108 = arith.constant 3 : index
    %c0_109 = arith.constant 0 : index
    %117 = vector.load %arg17[%c3_108, %c0_109] : memref<11x256xf32, #tpu.memory_space<vmem>>, vector<5x256xf32>
    tpu.vector_store %arg17[%c3_108, %c0_109], %116 {strides = array<i32>} : memref<11x256xf32, #tpu.memory_space<vmem>>, vector<5x256xf32>,
    %c0_110 = arith.constant 0 : index
    %c0_111 = arith.constant 0 : index
    %118 = vector.load %arg9[%c0_110, %c0_111] : memref<1x16xf32, #tpu.memory_space<vmem>>, vector<1x16xf32>
    %c3_112 = arith.constant 3 : index
    %c0_113 = arith.constant 0 : index
    %119 = vector.load %arg17[%c3_112, %c0_113] : memref<11x256xf32, #tpu.memory_space<vmem>>, vector<1x256xf32>
    %120 = arith.truncf %119 : vector<1x256xf32> to vector<1x256xbf16>
    %c0_114 = arith.constant 0 : index
    %c0_115 = arith.constant 0 : index
    %c0_116 = arith.constant 0 : index
    %121 = vector.load %arg8[%c0_114, %c0_115, %c0_116] : memref<5x256x16xbf16, #tpu.memory_space<vmem>>, vector<1x256x16xbf16>
    %122 = vector.shape_cast %121 : vector<1x256x16xbf16> to vector<256x16xbf16>
    %cst_117 = arith.constant dense<0.000000e+00> : vector<1x16xf32>
    %123 = tpu.matmul %120, %122, %cst_117 {dimension_numbers = #tpu.dot_dimension_numbers<[1], [0], [0], [1], [0, 0, 1, 1], [], []>} : vector<1x256xbf16>, vector<256x16xbf16>, vector<1x16xf32> -> vector<1x16xf32>
    %124 = arith.addf %118, %123 : vector<1x16xf32>
    %c4_118 = arith.constant 4 : index
    %c0_119 = arith.constant 0 : index
    %125 = vector.load %arg17[%c4_118, %c0_119] : memref<11x256xf32, #tpu.memory_space<vmem>>, vector<1x256xf32>
    %126 = arith.truncf %125 : vector<1x256xf32> to vector<1x256xbf16>
    %c1_120 = arith.constant 1 : index
    %c0_121 = arith.constant 0 : index
    %c0_122 = arith.constant 0 : index
    %127 = vector.load %arg8[%c1_120, %c0_121, %c0_122] : memref<5x256x16xbf16, #tpu.memory_space<vmem>>, vector<1x256x16xbf16>
    %128 = vector.shape_cast %127 : vector<1x256x16xbf16> to vector<256x16xbf16>
    %cst_123 = arith.constant dense<0.000000e+00> : vector<1x16xf32>
    %129 = tpu.matmul %126, %128, %cst_123 {dimension_numbers = #tpu.dot_dimension_numbers<[1], [0], [0], [1], [0, 0, 1, 1], [], []>} : vector<1x256xbf16>, vector<256x16xbf16>, vector<1x16xf32> -> vector<1x16xf32>
    %130 = arith.addf %124, %129 : vector<1x16xf32>
    %c5_124 = arith.constant 5 : index
    %c0_125 = arith.constant 0 : index
    %131 = vector.load %arg17[%c5_124, %c0_125] : memref<11x256xf32, #tpu.memory_space<vmem>>, vector<1x256xf32>
    %132 = arith.truncf %131 : vector<1x256xf32> to vector<1x256xbf16>
    %c2_126 = arith.constant 2 : index
    %c0_127 = arith.constant 0 : index
    %c0_128 = arith.constant 0 : index
    %133 = vector.load %arg8[%c2_126, %c0_127, %c0_128] : memref<5x256x16xbf16, #tpu.memory_space<vmem>>, vector<1x256x16xbf16>
    %134 = vector.shape_cast %133 : vector<1x256x16xbf16> to vector<256x16xbf16>
    %cst_129 = arith.constant dense<0.000000e+00> : vector<1x16xf32>
    %135 = tpu.matmul %132, %134, %cst_129 {dimension_numbers = #tpu.dot_dimension_numbers<[1], [0], [0], [1], [0, 0, 1, 1], [], []>} : vector<1x256xbf16>, vector<256x16xbf16>, vector<1x16xf32> -> vector<1x16xf32>
    %136 = arith.addf %130, %135 : vector<1x16xf32>
    %c6_130 = arith.constant 6 : index
    %c0_131 = arith.constant 0 : index
    %137 = vector.load %arg17[%c6_130, %c0_131] : memref<11x256xf32, #tpu.memory_space<vmem>>, vector<1x256xf32>
    %138 = arith.truncf %137 : vector<1x256xf32> to vector<1x256xbf16>
    %c3_132 = arith.constant 3 : index
    %c0_133 = arith.constant 0 : index
    %c0_134 = arith.constant 0 : index
    %139 = vector.load %arg8[%c3_132, %c0_133, %c0_134] : memref<5x256x16xbf16, #tpu.memory_space<vmem>>, vector<1x256x16xbf16>
    %140 = vector.shape_cast %139 : vector<1x256x16xbf16> to vector<256x16xbf16>
    %cst_135 = arith.constant dense<0.000000e+00> : vector<1x16xf32>
    %141 = tpu.matmul %138, %140, %cst_135 {dimension_numbers = #tpu.dot_dimension_numbers<[1], [0], [0], [1], [0, 0, 1, 1], [], []>} : vector<1x256xbf16>, vector<256x16xbf16>, vector<1x16xf32> -> vector<1x16xf32>
    %142 = arith.addf %136, %141 : vector<1x16xf32>
    %c7 = arith.constant 7 : index
    %c0_136 = arith.constant 0 : index
    %143 = vector.load %arg17[%c7, %c0_136] : memref<11x256xf32, #tpu.memory_space<vmem>>, vector<1x256xf32>
    %144 = arith.truncf %143 : vector<1x256xf32> to vector<1x256xbf16>
    %c4_137 = arith.constant 4 : index
    %c0_138 = arith.constant 0 : index
    %c0_139 = arith.constant 0 : index
    %145 = vector.load %arg8[%c4_137, %c0_138, %c0_139] : memref<5x256x16xbf16, #tpu.memory_space<vmem>>, vector<1x256x16xbf16>
    %146 = vector.shape_cast %145 : vector<1x256x16xbf16> to vector<256x16xbf16>
    %cst_140 = arith.constant dense<0.000000e+00> : vector<1x16xf32>
    %147 = tpu.matmul %144, %146, %cst_140 {dimension_numbers = #tpu.dot_dimension_numbers<[1], [0], [0], [1], [0, 0, 1, 1], [], []>} : vector<1x256xbf16>, vector<256x16xbf16>, vector<1x16xf32> -> vector<1x16xf32>
    %148 = arith.addf %142, %147 : vector<1x16xf32>
    %149 = arith.truncf %148 : vector<1x16xf32> to vector<1x16xbf16>
    %c0_141 = arith.constant 0 : index
    %c0_142 = arith.constant 0 : index
    %150 = vector.load %arg10[%c0_141, %c0_142] : memref<16x640xbf16, #tpu.memory_space<vmem>>, vector<16x640xbf16>
    %cst_143 = arith.constant dense<0.000000e+00> : vector<1x640xf32>
    %151 = tpu.matmul %149, %150, %cst_143 {dimension_numbers = #tpu.dot_dimension_numbers<[1], [0], [0], [1], [0, 0, 1, 1], [], []>} : vector<1x16xbf16>, vector<16x640xbf16>, vector<1x640xf32> -> vector<1x640xf32>
    %c0_144 = arith.constant 0 : index
    %c0_145 = arith.constant 0 : index
    %152 = vector.load %arg11[%c0_144, %c0_145] : memref<1x640xf32, #tpu.memory_space<vmem>>, vector<1x640xf32>
    %153 = arith.addf %151, %152 : vector<1x640xf32>
    %cst_146 = arith.constant 0.000000e+00 : f32
    %154 = vector.broadcast %cst_146 : f32 to vector<1x640xf32>
    %155 = arith.maximumf %153, %154 : vector<1x640xf32>
    %156 = vector.extract_strided_slice %155 {offsets = [0, 0], sizes = [1, 128], strides = [1, 1]} : vector<1x640xf32> to vector<1x128xf32>
    %c3_147 = arith.constant 3 : index
    %c0_148 = arith.constant 0 : index
    %157 = vector.load %arg17[%c3_147, %c0_148] : memref<11x256xf32, #tpu.memory_space<vmem>>, vector<1x128xf32>
    tpu.vector_store %arg17[%c3_147, %c0_148], %156 {strides = array<i32>} : memref<11x256xf32, #tpu.memory_space<vmem>>, vector<1x128xf32>,
    %158 = vector.extract_strided_slice %155 {offsets = [0, 128], sizes = [1, 128], strides = [1, 1]} : vector<1x640xf32> to vector<1x128xf32>
    %c4_149 = arith.constant 4 : index
    %c0_150 = arith.constant 0 : index
    %159 = vector.load %arg17[%c4_149, %c0_150] : memref<11x256xf32, #tpu.memory_space<vmem>>, vector<1x128xf32>
    tpu.vector_store %arg17[%c4_149, %c0_150], %158 {strides = array<i32>} : memref<11x256xf32, #tpu.memory_space<vmem>>, vector<1x128xf32>,
    %160 = vector.extract_strided_slice %155 {offsets = [0, 256], sizes = [1, 128], strides = [1, 1]} : vector<1x640xf32> to vector<1x128xf32>
    %c5_151 = arith.constant 5 : index
    %c0_152 = arith.constant 0 : index
    %161 = vector.load %arg17[%c5_151, %c0_152] : memref<11x256xf32, #tpu.memory_space<vmem>>, vector<1x128xf32>
    tpu.vector_store %arg17[%c5_151, %c0_152], %160 {strides = array<i32>} : memref<11x256xf32, #tpu.memory_space<vmem>>, vector<1x128xf32>,
    %162 = vector.extract_strided_slice %155 {offsets = [0, 384], sizes = [1, 128], strides = [1, 1]} : vector<1x640xf32> to vector<1x128xf32>
    %c6_153 = arith.constant 6 : index
    %c0_154 = arith.constant 0 : index
    %163 = vector.load %arg17[%c6_153, %c0_154] : memref<11x256xf32, #tpu.memory_space<vmem>>, vector<1x128xf32>
    tpu.vector_store %arg17[%c6_153, %c0_154], %162 {strides = array<i32>} : memref<11x256xf32, #tpu.memory_space<vmem>>, vector<1x128xf32>,
    %164 = vector.extract_strided_slice %155 {offsets = [0, 512], sizes = [1, 128], strides = [1, 1]} : vector<1x640xf32> to vector<1x128xf32>
    %c7_155 = arith.constant 7 : index
    %c0_156 = arith.constant 0 : index
    %165 = vector.load %arg17[%c7_155, %c0_156] : memref<11x256xf32, #tpu.memory_space<vmem>>, vector<1x128xf32>
    tpu.vector_store %arg17[%c7_155, %c0_156], %164 {strides = array<i32>} : memref<11x256xf32, #tpu.memory_space<vmem>>, vector<1x128xf32>,
    %cst_157 = arith.constant 0.000000e+00 : f32
    %166 = vector.broadcast %cst_157 : f32 to vector<5x64xf32>
    %c1_158 = arith.constant 1 : index
    %c0_159 = arith.constant 0 : index
    %167 = vector.load %arg17[%c1_158, %c0_159] : memref<11x256xf32, #tpu.memory_space<vmem>>, vector<5x128xf32>
    %168 = arith.truncf %167 : vector<5x128xf32> to vector<5x128xbf16>
    %c0_160 = arith.constant 0 : index
    %c0_161 = arith.constant 0 : index
    %c0_162 = arith.constant 0 : index
    %169 = vector.load %arg12[%c0_160, %c0_161, %c0_162] : memref<5x128x64xbf16, #tpu.memory_space<vmem>>, vector<1x128x64xbf16>
    %170 = vector.shape_cast %169 : vector<1x128x64xbf16> to vector<128x64xbf16>
    %cst_163 = arith.constant dense<0.000000e+00> : vector<5x64xf32>
    %171 = tpu.matmul %168, %170, %cst_163 {dimension_numbers = #tpu.dot_dimension_numbers<[1], [0], [0], [1], [0, 0, 1, 1], [], []>} : vector<5x128xbf16>, vector<128x64xbf16>, vector<5x64xf32> -> vector<5x64xf32>
    %172 = arith.addf %166, %171 : vector<5x64xf32>
    %c2_164 = arith.constant 2 : index
    %c0_165 = arith.constant 0 : index
    %173 = vector.load %arg17[%c2_164, %c0_165] : memref<11x256xf32, #tpu.memory_space<vmem>>, vector<5x128xf32>
    %174 = arith.truncf %173 : vector<5x128xf32> to vector<5x128xbf16>
    %c1_166 = arith.constant 1 : index
    %c0_167 = arith.constant 0 : index
    %c0_168 = arith.constant 0 : index
    %175 = vector.load %arg12[%c1_166, %c0_167, %c0_168] : memref<5x128x64xbf16, #tpu.memory_space<vmem>>, vector<1x128x64xbf16>
    %176 = vector.shape_cast %175 : vector<1x128x64xbf16> to vector<128x64xbf16>
    %cst_169 = arith.constant dense<0.000000e+00> : vector<5x64xf32>
    %177 = tpu.matmul %174, %176, %cst_169 {dimension_numbers = #tpu.dot_dimension_numbers<[1], [0], [0], [1], [0, 0, 1, 1], [], []>} : vector<5x128xbf16>, vector<128x64xbf16>, vector<5x64xf32> -> vector<5x64xf32>
    %178 = arith.addf %172, %177 : vector<5x64xf32>
    %c3_170 = arith.constant 3 : index
    %c0_171 = arith.constant 0 : index
    %179 = vector.load %arg17[%c3_170, %c0_171] : memref<11x256xf32, #tpu.memory_space<vmem>>, vector<5x128xf32>
    %180 = arith.truncf %179 : vector<5x128xf32> to vector<5x128xbf16>
    %c2_172 = arith.constant 2 : index
    %c0_173 = arith.constant 0 : index
    %c0_174 = arith.constant 0 : index
    %181 = vector.load %arg12[%c2_172, %c0_173, %c0_174] : memref<5x128x64xbf16, #tpu.memory_space<vmem>>, vector<1x128x64xbf16>
    %182 = vector.shape_cast %181 : vector<1x128x64xbf16> to vector<128x64xbf16>
    %cst_175 = arith.constant dense<0.000000e+00> : vector<5x64xf32>
    %183 = tpu.matmul %180, %182, %cst_175 {dimension_numbers = #tpu.dot_dimension_numbers<[1], [0], [0], [1], [0, 0, 1, 1], [], []>} : vector<5x128xbf16>, vector<128x64xbf16>, vector<5x64xf32> -> vector<5x64xf32>
    %184 = arith.addf %178, %183 : vector<5x64xf32>
    %c4_176 = arith.constant 4 : index
    %c0_177 = arith.constant 0 : index
    %185 = vector.load %arg17[%c4_176, %c0_177] : memref<11x256xf32, #tpu.memory_space<vmem>>, vector<5x128xf32>
    %186 = arith.truncf %185 : vector<5x128xf32> to vector<5x128xbf16>
    %c3_178 = arith.constant 3 : index
    %c0_179 = arith.constant 0 : index
    %c0_180 = arith.constant 0 : index
    %187 = vector.load %arg12[%c3_178, %c0_179, %c0_180] : memref<5x128x64xbf16, #tpu.memory_space<vmem>>, vector<1x128x64xbf16>
    %188 = vector.shape_cast %187 : vector<1x128x64xbf16> to vector<128x64xbf16>
    %cst_181 = arith.constant dense<0.000000e+00> : vector<5x64xf32>
    %189 = tpu.matmul %186, %188, %cst_181 {dimension_numbers = #tpu.dot_dimension_numbers<[1], [0], [0], [1], [0, 0, 1, 1], [], []>} : vector<5x128xbf16>, vector<128x64xbf16>, vector<5x64xf32> -> vector<5x64xf32>
    %190 = arith.addf %184, %189 : vector<5x64xf32>
    %c5_182 = arith.constant 5 : index
    %c0_183 = arith.constant 0 : index
    %191 = vector.load %arg17[%c5_182, %c0_183] : memref<11x256xf32, #tpu.memory_space<vmem>>, vector<5x128xf32>
    %192 = arith.truncf %191 : vector<5x128xf32> to vector<5x128xbf16>
    %c4_184 = arith.constant 4 : index
    %c0_185 = arith.constant 0 : index
    %c0_186 = arith.constant 0 : index
    %193 = vector.load %arg12[%c4_184, %c0_185, %c0_186] : memref<5x128x64xbf16, #tpu.memory_space<vmem>>, vector<1x128x64xbf16>
    %194 = vector.shape_cast %193 : vector<1x128x64xbf16> to vector<128x64xbf16>
    %cst_187 = arith.constant dense<0.000000e+00> : vector<5x64xf32>
    %195 = tpu.matmul %192, %194, %cst_187 {dimension_numbers = #tpu.dot_dimension_numbers<[1], [0], [0], [1], [0, 0, 1, 1], [], []>} : vector<5x128xbf16>, vector<128x64xbf16>, vector<5x64xf32> -> vector<5x64xf32>
    %196 = arith.addf %190, %195 : vector<5x64xf32>
    %c0_188 = arith.constant 0 : index
    %c0_189 = arith.constant 0 : index
    %197 = vector.load %arg13[%c0_188, %c0_189] : memref<1x64xf32, #tpu.memory_space<vmem>>, vector<1x64xf32>
    %198 = vector.broadcast %197 : vector<1x64xf32> to vector<5x64xf32>
    %199 = arith.addf %196, %198 : vector<5x64xf32>
    %cst_190 = arith.constant 0.000000e+00 : f32
    %200 = vector.broadcast %cst_190 : f32 to vector<5x64xf32>
    %201 = arith.maximumf %199, %200 : vector<5x64xf32>
    %c3_191 = arith.constant 3 : index
    %c0_192 = arith.constant 0 : index
    %202 = vector.load %arg17[%c3_191, %c0_192] : memref<11x256xf32, #tpu.memory_space<vmem>>, vector<5x64xf32>
    tpu.vector_store %arg17[%c3_191, %c0_192], %201 {strides = array<i32>} : memref<11x256xf32, #tpu.memory_space<vmem>>, vector<5x64xf32>,
    %cst_193 = arith.constant 0.000000e+00 : f32
    %203 = vector.broadcast %cst_193 : f32 to vector<5x51xf32>
    %c2_194 = arith.constant 2 : index
    %c0_195 = arith.constant 0 : index
    %204 = vector.load %arg17[%c2_194, %c0_195] : memref<11x256xf32, #tpu.memory_space<vmem>>, vector<5x64xf32>
    %205 = arith.truncf %204 : vector<5x64xf32> to vector<5x64xbf16>
    %c0_196 = arith.constant 0 : index
    %c0_197 = arith.constant 0 : index
    %c0_198 = arith.constant 0 : index
    %206 = vector.load %arg14[%c0_196, %c0_197, %c0_198] : memref<3x64x51xbf16, #tpu.memory_space<vmem>>, vector<1x64x51xbf16>
    %207 = vector.shape_cast %206 : vector<1x64x51xbf16> to vector<64x51xbf16>
    %cst_199 = arith.constant dense<0.000000e+00> : vector<5x51xf32>
    %208 = tpu.matmul %205, %207, %cst_199 {dimension_numbers = #tpu.dot_dimension_numbers<[1], [0], [0], [1], [0, 0, 1, 1], [], []>} : vector<5x64xbf16>, vector<64x51xbf16>, vector<5x51xf32> -> vector<5x51xf32>
    %209 = arith.addf %203, %208 : vector<5x51xf32>
    %c3_200 = arith.constant 3 : index
    %c0_201 = arith.constant 0 : index
    %210 = vector.load %arg17[%c3_200, %c0_201] : memref<11x256xf32, #tpu.memory_space<vmem>>, vector<5x64xf32>
    %211 = arith.truncf %210 : vector<5x64xf32> to vector<5x64xbf16>
    %c1_202 = arith.constant 1 : index
    %c0_203 = arith.constant 0 : index
    %c0_204 = arith.constant 0 : index
    %212 = vector.load %arg14[%c1_202, %c0_203, %c0_204] : memref<3x64x51xbf16, #tpu.memory_space<vmem>>, vector<1x64x51xbf16>
    %213 = vector.shape_cast %212 : vector<1x64x51xbf16> to vector<64x51xbf16>
    %cst_205 = arith.constant dense<0.000000e+00> : vector<5x51xf32>
    %214 = tpu.matmul %211, %213, %cst_205 {dimension_numbers = #tpu.dot_dimension_numbers<[1], [0], [0], [1], [0, 0, 1, 1], [], []>} : vector<5x64xbf16>, vector<64x51xbf16>, vector<5x51xf32> -> vector<5x51xf32>
    %215 = arith.addf %209, %214 : vector<5x51xf32>
    %c4_206 = arith.constant 4 : index
    %c0_207 = arith.constant 0 : index
    %216 = vector.load %arg17[%c4_206, %c0_207] : memref<11x256xf32, #tpu.memory_space<vmem>>, vector<5x64xf32>
    %217 = arith.truncf %216 : vector<5x64xf32> to vector<5x64xbf16>
    %c2_208 = arith.constant 2 : index
    %c0_209 = arith.constant 0 : index
    %c0_210 = arith.constant 0 : index
    %218 = vector.load %arg14[%c2_208, %c0_209, %c0_210] : memref<3x64x51xbf16, #tpu.memory_space<vmem>>, vector<1x64x51xbf16>
    %219 = vector.shape_cast %218 : vector<1x64x51xbf16> to vector<64x51xbf16>
    %cst_211 = arith.constant dense<0.000000e+00> : vector<5x51xf32>
    %220 = tpu.matmul %217, %219, %cst_211 {dimension_numbers = #tpu.dot_dimension_numbers<[1], [0], [0], [1], [0, 0, 1, 1], [], []>} : vector<5x64xbf16>, vector<64x51xbf16>, vector<5x51xf32> -> vector<5x51xf32>
    %221 = arith.addf %215, %220 : vector<5x51xf32>
    %c0_212 = arith.constant 0 : index
    %c0_213 = arith.constant 0 : index
    %222 = vector.load %arg15[%c0_212, %c0_213] : memref<1x51xf32, #tpu.memory_space<vmem>>, vector<1x51xf32>
    %223 = vector.broadcast %222 : vector<1x51xf32> to vector<5x51xf32>
    %224 = arith.addf %221, %223 : vector<5x51xf32>
    %225 = math.tanh %224 : vector<5x51xf32>
    %c0_214 = arith.constant 0 : index
    %c0_215 = arith.constant 0 : index
    %c0_216 = arith.constant 0 : index
    %226 = vector.load %arg16[%c0_214, %c0_215, %c0_216] : memref<1x5x51xf32, #tpu.memory_space<vmem>>, vector<1x5x51xf32>
    %227 = vector.shape_cast %226 : vector<1x5x51xf32> to vector<5x51xf32>
    %228 = vector.shape_cast %225 : vector<5x51xf32> to vector<1x5x51xf32>
    tpu.vector_store %arg16[%c0_214, %c0_215, %c0_216], %228 {strides = array<i32>} : memref<1x5x51xf32, #tpu.memory_space<vmem>>, vector<1x5x51xf32>,
    return
  }
  func.func @transform_0(%arg0: i32) -> (i32, i32, i32) {
    %c0_i32 = arith.constant 0 : i32
    %c0_i32_0 = arith.constant 0 : i32
    %c0_i32_1 = arith.constant 0 : i32
    return %arg0, %c0_i32, %c0_i32_0 : i32, i32, i32
  }
  func.func @transform_1(%arg0: i32) -> (i32, i32, i32) {
    %c0_i32 = arith.constant 0 : i32
    %c0_i32_0 = arith.constant 0 : i32
    %c0_i32_1 = arith.constant 0 : i32
    %c0_i32_2 = arith.constant 0 : i32
    return %c0_i32, %c0_i32_0, %c0_i32_1 : i32, i32, i32
  }
  func.func @transform_2(%arg0: i32) -> (i32, i32) {
    %c0_i32 = arith.constant 0 : i32
    %c0_i32_0 = arith.constant 0 : i32
    %c0_i32_1 = arith.constant 0 : i32
    return %c0_i32, %c0_i32_0 : i32, i32
  }
  func.func @transform_3(%arg0: i32) -> (i32, i32, i32) {
    %c0_i32 = arith.constant 0 : i32
    %c0_i32_0 = arith.constant 0 : i32
    %c0_i32_1 = arith.constant 0 : i32
    %c0_i32_2 = arith.constant 0 : i32
    return %c0_i32, %c0_i32_0, %c0_i32_1 : i32, i32, i32
  }
  func.func @transform_4(%arg0: i32) -> (i32, i32) {
    %c0_i32 = arith.constant 0 : i32
    %c0_i32_0 = arith.constant 0 : i32
    %c0_i32_1 = arith.constant 0 : i32
    return %c0_i32, %c0_i32_0 : i32, i32
  }
  func.func @transform_5(%arg0: i32) -> (i32, i32, i32) {
    %c0_i32 = arith.constant 0 : i32
    %c0_i32_0 = arith.constant 0 : i32
    %c0_i32_1 = arith.constant 0 : i32
    %c0_i32_2 = arith.constant 0 : i32
    return %c0_i32, %c0_i32_0, %c0_i32_1 : i32, i32, i32
  }
  func.func @transform_6(%arg0: i32) -> (i32, i32) {
    %c0_i32 = arith.constant 0 : i32
    %c0_i32_0 = arith.constant 0 : i32
    %c0_i32_1 = arith.constant 0 : i32
    return %c0_i32, %c0_i32_0 : i32, i32
  }
  func.func @transform_7(%arg0: i32) -> (i32, i32, i32) {
    %c0_i32 = arith.constant 0 : i32
    %c0_i32_0 = arith.constant 0 : i32
    %c0_i32_1 = arith.constant 0 : i32
    %c0_i32_2 = arith.constant 0 : i32
    return %c0_i32, %c0_i32_0, %c0_i32_1 : i32, i32, i32
  }
  func.func @transform_8(%arg0: i32) -> (i32, i32) {
    %c0_i32 = arith.constant 0 : i32
    %c0_i32_0 = arith.constant 0 : i32
    %c0_i32_1 = arith.constant 0 : i32
    return %c0_i32, %c0_i32_0 : i32, i32
  }
  func.func @transform_9(%arg0: i32) -> (i32, i32) {
    %c0_i32 = arith.constant 0 : i32
    %c0_i32_0 = arith.constant 0 : i32
    %c0_i32_1 = arith.constant 0 : i32
    return %c0_i32, %c0_i32_0 : i32, i32
  }
  func.func @transform_10(%arg0: i32) -> (i32, i32) {
    %c0_i32 = arith.constant 0 : i32
    %c0_i32_0 = arith.constant 0 : i32
    %c0_i32_1 = arith.constant 0 : i32
    return %c0_i32, %c0_i32_0 : i32, i32
  }
  func.func @transform_11(%arg0: i32) -> (i32, i32, i32) {
    %c0_i32 = arith.constant 0 : i32
    %c0_i32_0 = arith.constant 0 : i32
    %c0_i32_1 = arith.constant 0 : i32
    %c0_i32_2 = arith.constant 0 : i32
    return %c0_i32, %c0_i32_0, %c0_i32_1 : i32, i32, i32
  }
  func.func @transform_12(%arg0: i32) -> (i32, i32) {
    %c0_i32 = arith.constant 0 : i32
    %c0_i32_0 = arith.constant 0 : i32
    %c0_i32_1 = arith.constant 0 : i32
    return %c0_i32, %c0_i32_0 : i32, i32
  }
  func.func @transform_13(%arg0: i32) -> (i32, i32, i32) {
    %c0_i32 = arith.constant 0 : i32
    %c0_i32_0 = arith.constant 0 : i32
    %c0_i32_1 = arith.constant 0 : i32
    %c0_i32_2 = arith.constant 0 : i32
    return %c0_i32, %c0_i32_0, %c0_i32_1 : i32, i32, i32
  }
  func.func @transform_14(%arg0: i32) -> (i32, i32) {
    %c0_i32 = arith.constant 0 : i32
    %c0_i32_0 = arith.constant 0 : i32
    %c0_i32_1 = arith.constant 0 : i32
    return %c0_i32, %c0_i32_0 : i32, i32
  }
  func.func @transform_15(%arg0: i32) -> (i32, i32, i32) {
    %c0_i32 = arith.constant 0 : i32
    %c0_i32_0 = arith.constant 0 : i32
    %c0_i32_1 = arith.constant 0 : i32
    return %arg0, %c0_i32, %c0_i32_0 : i32, i32, i32
  }
}

</mosaic_0001>

<llo_original>
// kernel: _lambda_.1
$region0: #{_lambda_.1}
  #allocation0 [shape = 'u32[]', space=smem, size = 0x4, offset = 0x4, fixed_abs, tag = 'smem constant byte address 0x4 - core index']
  #allocation1 [shape = 'u32[144,128]{1,0:T(1,128)}', space=vmem, size = 0x12000, scoped, tag = 'internal scratch']
  #allocation2 [shape = 'f32[11,256]{1,0:T(8,128)}', space=vmem, size = 0x4000, scoped, tag = 'scratch operand']
  %s0 = inlined_call_operand.vmem [shape: f32[2,5,51], index: 0, kind: input, shape index: {}]
  %s1 = inlined_call_operand.vmem [shape: bf16[3,51,64], index: 1, kind: input, shape index: {}]
  %s2 = inlined_call_operand.vmem [shape: f32[1,64], index: 2, kind: input, shape index: {}]
  %s3 = inlined_call_operand.vmem [shape: bf16[5,64,128], index: 3, kind: input, shape index: {}]
  %s4 = inlined_call_operand.vmem [shape: f32[1,128], index: 4, kind: input, shape index: {}]
  %s5 = inlined_call_operand.vmem [shape: bf16[7,128,256], index: 5, kind: input, shape index: {}]
  %s6 = inlined_call_operand.vmem [shape: f32[1,256], index: 6, kind: input, shape index: {}]
  %s7 = inlined_call_operand.vmem [shape: bf16[5,256,16], index: 7, kind: input, shape index: {}]
  %s8 = inlined_call_operand.vmem [shape: f32[1,16], index: 8, kind: input, shape index: {}]
  %s9 = inlined_call_operand.vmem [shape: bf16[16,640], index: 9, kind: input, shape index: {}]
  %s10 = inlined_call_operand.vmem [shape: f32[1,640], index: 10, kind: input, shape index: {}]
  %s11 = inlined_call_operand.vmem [shape: bf16[5,128,64], index: 11, kind: input, shape index: {}]
  %s12 = inlined_call_operand.vmem [shape: f32[1,64], index: 12, kind: input, shape index: {}]
  %s13 = inlined_call_operand.vmem [shape: bf16[3,64,51], index: 13, kind: input, shape index: {}]
  %s14 = inlined_call_operand.vmem [shape: f32[1,51], index: 14, kind: input, shape index: {}]
  %s15 = inlined_call_operand.vmem [shape: f32[2,5,51], index: 15, kind: output, shape index: {}]
  %s16 = sld [smem:[#allocation0]]
  $region93: #{_lambda_.1} parent=0
    _
  %s18 = ssub.s32 1, %s16
  %s19 = scalar_select 0, %s18, %s16
  loop: start=0, step=1, limit=4
  $region2: #{_lambda_.1} parent=0 // loop_pre_header
    _
  $region3: #{_lambda_.1} parent=0 // loop_header
    %s21 = sphi 0, %s25
    %p22 = scmp.ge.s32.totalorder %s21, 4
    %s31 = sphi 0, %s33
    %s34 = sphi 0, %s31
    %s35 = sphi 0, %s34
    %s51 = sphi 0, %s35
    %s55 = sphi 0, %s55
    %s57 = sphi 0, %s55
    %s58 = sphi 0, %s57
    %s72 = sphi 0, %s58
    %s76 = sphi 0, %s76
    %s78 = sphi 0, %s76
    %s79 = sphi 0, %s78
    %s93 = sphi 0, %s79
    %s97 = sphi 0, %s97
    %s99 = sphi 0, %s97
    %s100 = sphi 0, %s99
    %s114 = sphi 0, %s100
    %s118 = sphi 0, %s118
    %s120 = sphi 0, %s118
    %s121 = sphi 0, %s120
    %s135 = sphi 0, %s121
    %s139 = sphi 0, %s139
    %s141 = sphi 0, %s139
    %s142 = sphi 0, %s141
    %s156 = sphi 0, %s142
    %s160 = sphi 0, %s160
    %s162 = sphi 0, %s160
    %s163 = sphi 0, %s162
    %s177 = sphi 0, %s163
    %s181 = sphi 0, %s181
    %s183 = sphi 0, %s181
    %s184 = sphi 0, %s183
    %s198 = sphi 0, %s184
    %s202 = sphi 0, %s202
    %s204 = sphi 0, %s202
    %s205 = sphi 0, %s204
    %s219 = sphi 0, %s205
    %s223 = sphi 0, %s223
    %s225 = sphi 0, %s223
    %s226 = sphi 0, %s225
    %s240 = sphi 0, %s226
    %s244 = sphi 0, %s244
    %s246 = sphi 0, %s244
    %s247 = sphi 0, %s246
    %s261 = sphi 0, %s247
    %s265 = sphi 0, %s265
    %s267 = sphi 0, %s265
    %s268 = sphi 0, %s267
    %s282 = sphi 0, %s268
    %s286 = sphi 0, %s286
    %s288 = sphi 0, %s286
    %s289 = sphi 0, %s288
    %s303 = sphi 0, %s289
    %s307 = sphi 0, %s307
    %s309 = sphi 0, %s307
    %s310 = sphi 0, %s309
    %s324 = sphi 0, %s310
    %s328 = sphi 0, %s328
    %s330 = sphi 0, %s328
    %s331 = sphi 0, %s330
    %s345 = sphi 0, %s331
    %s351 = sphi 0, %s353
    %s354 = sphi 0, %s351
    %s355 = sphi 0, %s354
    %s371 = sphi 0, %s355
  $region4: #{_lambda_.1} parent=0 // loop_header_branch
    %24 = sbr.rel (%p22) target = $region8
  $region5: #{_lambda_.1} parent=0 // loop_body
    %s26 = ssub.s32 %s21, 1
    %s27 = ssub.s32 %s21, 2
    %s28 = sadd.s32 %s21, 1
    %s29 = ssub.s32 %s21, %s28
    %p30 = scmp.eq.s32.totalorder %s29, 0
    %s32 = sadd.s32 %s31, 1
    %s33 = scalar_select %p30, %s31, %s32
    %p36 = pneg %p30
    %p37 = scmp.eq.s32.totalorder %s21, 1
    %p38 = por %p36, %p37
    %p39 = scmp.ne.s32.totalorder %s31, %s34
    %p40 = scmp.eq.s32.totalorder %s21, 0
    %p41 = por %p39, %p40
    %p42 = scmp.ne.s32.totalorder %s31, %s34
    %p43 = scmp.eq.s32.totalorder %s26, 1
    %p44 = por %p42, %p43
    %p45 = scmp.ne.s32.totalorder %s34, %s35
    %p46 = scmp.eq.s32.totalorder %s26, 0
    %p47 = por %p45, %p46
    %p48 = scmp.ne.s32.totalorder %s34, %s35
    %p49 = scmp.eq.s32.totalorder %s27, 1
    %p50 = por %p48, %p49
    %p52 = scmp.ne.s32.totalorder %s35, %s51
    %p53 = scmp.eq.s32.totalorder %s27, 0
    %p54 = por %p52, %p53
    %s56 = sadd.s32 %s55, 1
    %p59 = scmp.eq.s32.totalorder %s21, 1
    %p60 = scmp.ne.s32.totalorder %s55, %s57
    %p61 = scmp.eq.s32.totalorder %s21, 0
    %p62 = por %p60, %p61
    %p63 = scmp.ne.s32.totalorder %s55, %s57
    %p64 = scmp.eq.s32.totalorder %s26, 1
    %p65 = por %p63, %p64
    %p66 = scmp.ne.s32.totalorder %s57, %s58
    %p67 = scmp.eq.s32.totalorder %s26, 0
    %p68 = por %p66, %p67
    %p69 = scmp.ne.s32.totalorder %s57, %s58
    %p70 = scmp.eq.s32.totalorder %s27, 1
    %p71 = por %p69, %p70
    %p73 = scmp.ne.s32.totalorder %s58, %s72
    %p74 = scmp.eq.s32.totalorder %s27, 0
    %p75 = por %p73, %p74
    %s77 = sadd.s32 %s76, 1
    %p80 = scmp.eq.s32.totalorder %s21, 1
    %p81 = scmp.ne.s32.totalorder %s76, %s78
    %p82 = scmp.eq.s32.totalorder %s21, 0
    %p83 = por %p81, %p82
    %p84 = scmp.ne.s32.totalorder %s76, %s78
    %p85 = scmp.eq.s32.totalorder %s26, 1
    %p86 = por %p84, %p85
    %p87 = scmp.ne.s32.totalorder %s78, %s79
    %p88 = scmp.eq.s32.totalorder %s26, 0
    %p89 = por %p87, %p88
    %p90 = scmp.ne.s32.totalorder %s78, %s79
    %p91 = scmp.eq.s32.totalorder %s27, 1
    %p92 = por %p90, %p91
    %p94 = scmp.ne.s32.totalorder %s79, %s93
    %p95 = scmp.eq.s32.totalorder %s27, 0
    %p96 = por %p94, %p95
    %s98 = sadd.s32 %s97, 1
    %p101 = scmp.eq.s32.totalorder %s21, 1
    %p102 = scmp.ne.s32.totalorder %s97, %s99
    %p103 = scmp.eq.s32.totalorder %s21, 0
    %p104 = por %p102, %p103
    %p105 = scmp.ne.s32.totalorder %s97, %s99
    %p106 = scmp.eq.s32.totalorder %s26, 1
    %p107 = por %p105, %p106
    %p108 = scmp.ne.s32.totalorder %s99, %s100
    %p109 = scmp.eq.s32.totalorder %s26, 0
    %p110 = por %p108, %p109
    %p111 = scmp.ne.s32.totalorder %s99, %s100
    %p112 = scmp.eq.s32.totalorder %s27, 1
    %p113 = por %p111, %p112
    %p115 = scmp.ne.s32.totalorder %s100, %s114
    %p116 = scmp.eq.s32.totalorder %s27, 0
    %p117 = por %p115, %p116
    %s119 = sadd.s32 %s118, 1
    %p122 = scmp.eq.s32.totalorder %s21, 1
    %p123 = scmp.ne.s32.totalorder %s118, %s120
    %p124 = scmp.eq.s32.totalorder %s21, 0
    %p125 = por %p123, %p124
    %p126 = scmp.ne.s32.totalorder %s118, %s120
    %p127 = scmp.eq.s32.totalorder %s26, 1
    %p128 = por %p126, %p127
    %p129 = scmp.ne.s32.totalorder %s120, %s121
    %p130 = scmp.eq.s32.totalorder %s26, 0
    %p131 = por %p129, %p130
    %p132 = scmp.ne.s32.totalorder %s120, %s121
    %p133 = scmp.eq.s32.totalorder %s27, 1
    %p134 = por %p132, %p133
    %p136 = scmp.ne.s32.totalorder %s121, %s135
    %p137 = scmp.eq.s32.totalorder %s27, 0
    %p138 = por %p136, %p137
    %s140 = sadd.s32 %s139, 1
    %p143 = scmp.eq.s32.totalorder %s21, 1
    %p144 = scmp.ne.s32.totalorder %s139, %s141
    %p145 = scmp.eq.s32.totalorder %s21, 0
    %p146 = por %p144, %p145
    %p147 = scmp.ne.s32.totalorder %s139, %s141
    %p148 = scmp.eq.s32.totalorder %s26, 1
    %p149 = por %p147, %p148
    %p150 = scmp.ne.s32.totalorder %s141, %s142
    %p151 = scmp.eq.s32.totalorder %s26, 0
    %p152 = por %p150, %p151
    %p153 = scmp.ne.s32.totalorder %s141, %s142
    %p154 = scmp.eq.s32.totalorder %s27, 1
    %p155 = por %p153, %p154
    %p157 = scmp.ne.s32.totalorder %s142, %s156
    %p158 = scmp.eq.s32.totalorder %s27, 0
    %p159 = por %p157, %p158
    %s161 = sadd.s32 %s160, 1
    %p164 = scmp.eq.s32.totalorder %s21, 1
    %p165 = scmp.ne.s32.totalorder %s160, %s162
    %p166 = scmp.eq.s32.totalorder %s21, 0
    %p167 = por %p165, %p166
    %p168 = scmp.ne.s32.totalorder %s160, %s162
    %p169 = scmp.eq.s32.totalorder %s26, 1
    %p170 = por %p168, %p169
    %p171 = scmp.ne.s32.totalorder %s162, %s163
    %p172 = scmp.eq.s32.totalorder %s26, 0
    %p173 = por %p171, %p172
    %p174 = scmp.ne.s32.totalorder %s162, %s163
    %p175 = scmp.eq.s32.totalorder %s27, 1
    %p176 = por %p174, %p175
    %p178 = scmp.ne.s32.totalorder %s163, %s177
    %p179 = scmp.eq.s32.totalorder %s27, 0
    %p180 = por %p178, %p179
    %s182 = sadd.s32 %s181, 1
    %p185 = scmp.eq.s32.totalorder %s21, 1
    %p186 = scmp.ne.s32.totalorder %s181, %s183
    %p187 = scmp.eq.s32.totalorder %s21, 0
    %p188 = por %p186, %p187
    %p189 = scmp.ne.s32.totalorder %s181, %s183
    %p190 = scmp.eq.s32.totalorder %s26, 1
    %p191 = por %p189, %p190
    %p192 = scmp.ne.s32.totalorder %s183, %s184
    %p193 = scmp.eq.s32.totalorder %s26, 0
    %p194 = por %p192, %p193
    %p195 = scmp.ne.s32.totalorder %s183, %s184
    %p196 = scmp.eq.s32.totalorder %s27, 1
    %p197 = por %p195, %p196
    %p199 = scmp.ne.s32.totalorder %s184, %s198
    %p200 = scmp.eq.s32.totalorder %s27, 0
    %p201 = por %p199, %p200
    %s203 = sadd.s32 %s202, 1
    %p206 = scmp.eq.s32.totalorder %s21, 1
    %p207 = scmp.ne.s32.totalorder %s202, %s204
    %p208 = scmp.eq.s32.totalorder %s21, 0
    %p209 = por %p207, %p208
    %p210 = scmp.ne.s32.totalorder %s202, %s204
    %p211 = scmp.eq.s32.totalorder %s26, 1
    %p212 = por %p210, %p211
    %p213 = scmp.ne.s32.totalorder %s204, %s205
    %p214 = scmp.eq.s32.totalorder %s26, 0
    %p215 = por %p213, %p214
    %p216 = scmp.ne.s32.totalorder %s204, %s205
    %p217 = scmp.eq.s32.totalorder %s27, 1
    %p218 = por %p216, %p217
    %p220 = scmp.ne.s32.totalorder %s205, %s219
    %p221 = scmp.eq.s32.totalorder %s27, 0
    %p222 = por %p220, %p221
    %s224 = sadd.s32 %s223, 1
    %p227 = scmp.eq.s32.totalorder %s21, 1
    %p228 = scmp.ne.s32.totalorder %s223, %s225
    %p229 = scmp.eq.s32.totalorder %s21, 0
    %p230 = por %p228, %p229
    %p231 = scmp.ne.s32.totalorder %s223, %s225
    %p232 = scmp.eq.s32.totalorder %s26, 1
    %p233 = por %p231, %p232
    %p234 = scmp.ne.s32.totalorder %s225, %s226
    %p235 = scmp.eq.s32.totalorder %s26, 0
    %p236 = por %p234, %p235
    %p237 = scmp.ne.s32.totalorder %s225, %s226
    %p238 = scmp.eq.s32.totalorder %s27, 1
    %p239 = por %p237, %p238
    %p241 = scmp.ne.s32.totalorder %s226, %s240
    %p242 = scmp.eq.s32.totalorder %s27, 0
    %p243 = por %p241, %p242
    %s245 = sadd.s32 %s244, 1
    %p248 = scmp.eq.s32.totalorder %s21, 1
    %p249 = scmp.ne.s32.totalorder %s244, %s246
    %p250 = scmp.eq.s32.totalorder %s21, 0
    %p251 = por %p249, %p250
    %p252 = scmp.ne.s32.totalorder %s244, %s246
    %p253 = scmp.eq.s32.totalorder %s26, 1
    %p254 = por %p252, %p253
    %p255 = scmp.ne.s32.totalorder %s246, %s247
    %p256 = scmp.eq.s32.totalorder %s26, 0
    %p257 = por %p255, %p256
    %p258 = scmp.ne.s32.totalorder %s246, %s247
    %p259 = scmp.eq.s32.totalorder %s27, 1
    %p260 = por %p258, %p259
    %p262 = scmp.ne.s32.totalorder %s247, %s261
    %p263 = scmp.eq.s32.totalorder %s27, 0
    %p264 = por %p262, %p263
    %s266 = sadd.s32 %s265, 1
    %p269 = scmp.eq.s32.totalorder %s21, 1
    %p270 = scmp.ne.s32.totalorder %s265, %s267
    %p271 = scmp.eq.s32.totalorder %s21, 0
    %p272 = por %p270, %p271
    %p273 = scmp.ne.s32.totalorder %s265, %s267
    %p274 = scmp.eq.s32.totalorder %s26, 1
    %p275 = por %p273, %p274
    %p276 = scmp.ne.s32.totalorder %s267, %s268
    %p277 = scmp.eq.s32.totalorder %s26, 0
    %p278 = por %p276, %p277
    %p279 = scmp.ne.s32.totalorder %s267, %s268
    %p280 = scmp.eq.s32.totalorder %s27, 1
    %p281 = por %p279, %p280
    %p283 = scmp.ne.s32.totalorder %s268, %s282
    %p284 = scmp.eq.s32.totalorder %s27, 0
    %p285 = por %p283, %p284
    %s287 = sadd.s32 %s286, 1
    %p290 = scmp.eq.s32.totalorder %s21, 1
    %p291 = scmp.ne.s32.totalorder %s286, %s288
    %p292 = scmp.eq.s32.totalorder %s21, 0
    %p293 = por %p291, %p292
    %p294 = scmp.ne.s32.totalorder %s286, %s288
    %p295 = scmp.eq.s32.totalorder %s26, 1
    %p296 = por %p294, %p295
    %p297 = scmp.ne.s32.totalorder %s288, %s289
    %p298 = scmp.eq.s32.totalorder %s26, 0
    %p299 = por %p297, %p298
    %p300 = scmp.ne.s32.totalorder %s288, %s289
    %p301 = scmp.eq.s32.totalorder %s27, 1
    %p302 = por %p300, %p301
    %p304 = scmp.ne.s32.totalorder %s289, %s303
    %p305 = scmp.eq.s32.totalorder %s27, 0
    %p306 = por %p304, %p305
    %s308 = sadd.s32 %s307, 1
    %p311 = scmp.eq.s32.totalorder %s21, 1
    %p312 = scmp.ne.s32.totalorder %s307, %s309
    %p313 = scmp.eq.s32.totalorder %s21, 0
    %p314 = por %p312, %p313
    %p315 = scmp.ne.s32.totalorder %s307, %s309
    %p316 = scmp.eq.s32.totalorder %s26, 1
    %p317 = por %p315, %p316
    %p318 = scmp.ne.s32.totalorder %s309, %s310
    %p319 = scmp.eq.s32.totalorder %s26, 0
    %p320 = por %p318, %p319
    %p321 = scmp.ne.s32.totalorder %s309, %s310
    %p322 = scmp.eq.s32.totalorder %s27, 1
    %p323 = por %p321, %p322
    %p325 = scmp.ne.s32.totalorder %s310, %s324
    %p326 = scmp.eq.s32.totalorder %s27, 0
    %p327 = por %p325, %p326
    %s329 = sadd.s32 %s328, 1
    %p332 = scmp.eq.s32.totalorder %s21, 1
    %p333 = scmp.ne.s32.totalorder %s328, %s330
    %p334 = scmp.eq.s32.totalorder %s21, 0
    %p335 = por %p333, %p334
    %p336 = scmp.ne.s32.totalorder %s328, %s330
    %p337 = scmp.eq.s32.totalorder %s26, 1
    %p338 = por %p336, %p337
    %p339 = scmp.ne.s32.totalorder %s330, %s331
    %p340 = scmp.eq.s32.totalorder %s26, 0
    %p341 = por %p339, %p340
    %p342 = scmp.ne.s32.totalorder %s330, %s331
    %p343 = scmp.eq.s32.totalorder %s27, 1
    %p344 = por %p342, %p343
    %p346 = scmp.ne.s32.totalorder %s331, %s345
    %p347 = scmp.eq.s32.totalorder %s27, 0
    %p348 = por %p346, %p347
    %s349 = ssub.s32 %s21, %s28
    %p350 = scmp.eq.s32.totalorder %s349, 0
    %s352 = sadd.s32 %s351, 1
    %s353 = scalar_select %p350, %s351, %s352
    %p356 = pneg %p350
    %p357 = scmp.eq.s32.totalorder %s21, 1
    %p358 = por %p356, %p357
    %p359 = scmp.ne.s32.totalorder %s351, %s354
    %p360 = scmp.eq.s32.totalorder %s21, 0
    %p361 = por %p359, %p360
    %p362 = scmp.ne.s32.totalorder %s351, %s354
    %p363 = scmp.eq.s32.totalorder %s26, 1
    %p364 = por %p362, %p363
    %p365 = scmp.ne.s32.totalorder %s354, %s355
    %p366 = scmp.eq.s32.totalorder %s26, 0
    %p367 = por %p365, %p366
    %p368 = scmp.ne.s32.totalorder %s354, %s355
    %p369 = scmp.eq.s32.totalorder %s27, 1
    %p370 = por %p368, %p369
    %p372 = scmp.ne.s32.totalorder %s355, %s371
    %p373 = scmp.eq.s32.totalorder %s27, 0
    %p374 = por %p372, %p373
    %p375 = scmp.le.s32.totalorder 1, %s21
    %p376 = scmp.lt.s32.totalorder %s21, 3
    %p377 = pnand %p375, %p376
    %p378 = pneg %p377
    // Predicated region
    $region9: #{_lambda_.1} parent=5 // pred_check
      _
    $region10: #{_lambda_.1} parent=5 // pred_check_branch
      %380 = sbr.rel (%p377) target = $region12
    $region11: #{_lambda_.1} parent=5 // pred_region
      %s381 = ssub.s32 %s21, 1
      // Predicated region
      $region13: #{_lambda_.1} parent=11 // pred_check
        %p382 = pneg %p68
      $region14: #{_lambda_.1} parent=11 // pred_check_branch
        %384 = sbr.rel (%p382) target = $region16
      $region15: #{_lambda_.1} parent=11 // pred_region
        _
      $region16: #{_lambda_.1} parent=11 // pred_fallthru
        _
      // Predicated region
      $region17: #{_lambda_.1} parent=11 // pred_check
        %p385 = pneg %p89
      $region18: #{_lambda_.1} parent=11 // pred_check_branch
        %387 = sbr.rel (%p385) target = $region20
      $region19: #{_lambda_.1} parent=11 // pred_region
        _
      $region20: #{_lambda_.1} parent=11 // pred_fallthru
        _
      // Predicated region
      $region21: #{_lambda_.1} parent=11 // pred_check
        %p388 = pneg %p110
      $region22: #{_lambda_.1} parent=11 // pred_check_branch
        %390 = sbr.rel (%p388) target = $region24
      $region23: #{_lambda_.1} parent=11 // pred_region
        _
      $region24: #{_lambda_.1} parent=11 // pred_fallthru
        _
      // Predicated region
      $region25: #{_lambda_.1} parent=11 // pred_check
        %p391 = pneg %p131
      $region26: #{_lambda_.1} parent=11 // pred_check_branch
        %393 = sbr.rel (%p391) target = $region28
      $region27: #{_lambda_.1} parent=11 // pred_region
        _
      $region28: #{_lambda_.1} parent=11 // pred_fallthru
        _
      // Predicated region
      $region29: #{_lambda_.1} parent=11 // pred_check
        %p394 = pneg %p152
      $region30: #{_lambda_.1} parent=11 // pred_check_branch
        %396 = sbr.rel (%p394) target = $region32
      $region31: #{_lambda_.1} parent=11 // pred_region
        _
      $region32: #{_lambda_.1} parent=11 // pred_fallthru
        _
      // Predicated region
      $region33: #{_lambda_.1} parent=11 // pred_check
        %p397 = pneg %p173
      $region34: #{_lambda_.1} parent=11 // pred_check_branch
        %399 = sbr.rel (%p397) target = $region36
      $region35: #{_lambda_.1} parent=11 // pred_region
        _
      $region36: #{_lambda_.1} parent=11 // pred_fallthru
        _
      // Predicated region
      $region37: #{_lambda_.1} parent=11 // pred_check
        %p400 = pneg %p194
      $region38: #{_lambda_.1} parent=11 // pred_check_branch
        %402 = sbr.rel (%p400) target = $region40
      $region39: #{_lambda_.1} parent=11 // pred_region
        _
      $region40: #{_lambda_.1} parent=11 // pred_fallthru
        _
      // Predicated region
      $region41: #{_lambda_.1} parent=11 // pred_check
        %p403 = pneg %p215
      $region42: #{_lambda_.1} parent=11 // pred_check_branch
        %405 = sbr.rel (%p403) target = $region44
      $region43: #{_lambda_.1} parent=11 // pred_region
        _
      $region44: #{_lambda_.1} parent=11 // pred_fallthru
        _
      // Predicated region
      $region45: #{_lambda_.1} parent=11 // pred_check
        %p406 = pneg %p236
      $region46: #{_lambda_.1} parent=11 // pred_check_branch
        %408 = sbr.rel (%p406) target = $region48
      $region47: #{_lambda_.1} parent=11 // pred_region
        _
      $region48: #{_lambda_.1} parent=11 // pred_fallthru
        _
      // Predicated region
      $region49: #{_lambda_.1} parent=11 // pred_check
        %p409 = pneg %p257
      $region50: #{_lambda_.1} parent=11 // pred_check_branch
        %411 = sbr.rel (%p409) target = $region52
      $region51: #{_lambda_.1} parent=11 // pred_region
        _
      $region52: #{_lambda_.1} parent=11 // pred_fallthru
        _
      // Predicated region
      $region53: #{_lambda_.1} parent=11 // pred_check
        %p412 = pneg %p278
      $region54: #{_lambda_.1} parent=11 // pred_check_branch
        %414 = sbr.rel (%p412) target = $region56
      $region55: #{_lambda_.1} parent=11 // pred_region
        _
      $region56: #{_lambda_.1} parent=11 // pred_fallthru
        _
      // Predicated region
      $region57: #{_lambda_.1} parent=11 // pred_check
        %p415 = pneg %p299
      $region58: #{_lambda_.1} parent=11 // pred_check_branch
        %417 = sbr.rel (%p415) target = $region60
      $region59: #{_lambda_.1} parent=11 // pred_region
        _
      $region60: #{_lambda_.1} parent=11 // pred_fallthru
        _
      // Predicated region
      $region61: #{_lambda_.1} parent=11 // pred_check
        %p418 = pneg %p320
      $region62: #{_lambda_.1} parent=11 // pred_check_branch
        %420 = sbr.rel (%p418) target = $region64
      $region63: #{_lambda_.1} parent=11 // pred_region
        _
      $region64: #{_lambda_.1} parent=11 // pred_fallthru
        _
      // Predicated region
      $region65: #{_lambda_.1} parent=11 // pred_check
        %p421 = pneg %p341
      $region66: #{_lambda_.1} parent=11 // pred_check_branch
        %423 = sbr.rel (%p421) target = $region68
      $region67: #{_lambda_.1} parent=11 // pred_region
        _
      $region68: #{_lambda_.1} parent=11 // pred_fallthru
        _
    $region12: #{_lambda_.1} parent=5 // pred_fallthru
      _
    %p424 = scmp.lt.s32.totalorder %s21, 2
    // Predicated region
    $region69: #{_lambda_.1} parent=5 // pred_check
      %p425 = pneg %p424
    $region70: #{_lambda_.1} parent=5 // pred_check_branch
      %427 = sbr.rel (%p425) target = $region72
    $region71: #{_lambda_.1} parent=5 // pred_region
      // Predicated region
      $region73: #{_lambda_.1} parent=71 // pred_check
        %p428 = pneg %p41
      $region74: #{_lambda_.1} parent=71 // pred_check_branch
        %430 = sbr.rel (%p428) target = $region76
      $region75: #{_lambda_.1} parent=71 // pred_region
        %p431 = scmp.lt.s32.totalorder %s21, 1
        %s432 = scalar_select %p431, %s21, 1
        %s433 = smul.addr %s432, 8
        %s434 = scalar_lea.vmem %s0, %s433
      $region76: #{_lambda_.1} parent=71 // pred_fallthru
        _
    $region72: #{_lambda_.1} parent=5 // pred_fallthru
      _
    %p435 = scmp.le.s32.totalorder 1, %s21
    %p436 = scmp.lt.s32.totalorder %s21, 3
    %p437 = pnand %p435, %p436
    %p438 = pneg %p437
    // Predicated region
    $region77: #{_lambda_.1} parent=5 // pred_check
      _
    $region78: #{_lambda_.1} parent=5 // pred_check_branch
      %440 = sbr.rel (%p437) target = $region80
    $region79: #{_lambda_.1} parent=5 // pred_region
      %s441 = ssub.s32 %s21, 1
      %p442 = scmp.lt.s32.totalorder %s26, 1
      %s443 = scalar_select %p442, %s26, 1
      %s444 = smul.addr %s443, 8
      %s445 = scalar_lea.vmem %s0, %s444
      %p446 = pneg %p47
      %p447 = pneg %p44
      %p448 = pneg %p68
      %p449 = pneg %p65
      %p450 = pneg %p89
      %p451 = pneg %p86
      %p452 = pneg %p110
      %p453 = pneg %p107
      %p454 = pneg %p131
      %p455 = pneg %p128
      %p456 = pneg %p152
      %p457 = pneg %p149
      %p458 = pneg %p173
      %p459 = pneg %p170
      %p460 = pneg %p194
      %p461 = pneg %p191
      %p462 = pneg %p215
      %p463 = pneg %p212
      %p464 = pneg %p236
      %p465 = pneg %p233
      %p466 = pneg %p257
      %p467 = pneg %p254
      %p468 = pneg %p278
      %p469 = pneg %p275
      %p470 = pneg %p299
      %p471 = pneg %p296
      %p472 = pneg %p320
      %p473 = pneg %p317
      %p474 = pneg %p341
      %p475 = pneg %p338
      %p476 = pneg %p367
      %p477 = pneg %p364
      %p478 = scmp.lt.s32.totalorder %s26, 1
      %s479 = scalar_select %p478, %s26, 1
      %s480 = smul.addr %s479, 8
      %s481 = scalar_lea.vmem %s15, %s480
      %p482 = scmp.lt.s32.totalorder %s26, 1
      %s483 = scalar_select %p482, %s26, 1
      %s484 = smul.addr %s483, 8
      %s485 = scalar_lea.vmem %s0, %s484
      %p486 = scmp.lt.s32.totalorder %s26, 1
      %s487 = scalar_select %p486, %s26, 1
      %s488 = smul.addr %s487, 8
      %s489 = scalar_lea.vmem %s15, %s488
      %491 = vst [vmem:[#allocation2] sm:$0x7] 0.0
      %492 = vst [vmem:[#allocation2 + $0x8] sm:$0x7] 0.0
      %493 = vst [vmem:[#allocation2 + $0x10] sm:$0x7] 0.0
      %494 = vst [vmem:[#allocation2 + $0x18] sm:$0x7] 0.0
      %v495 = vld [vmem:[%s485] sm:$0x1f]
      %v497 = vrot.slane %v495, 5
      %vm499 = vcmask 416771
      %500 = vst.msk [vmem:[#allocation2] sm:$0xf8] %vm499, %v497
      %v501 = vld [vmem:[#allocation2] sm:$0x7c]
      %v502 = vpack.c.bf16 %v501, %v501
      %v503 = vld [vmem:[%s1] sm:$0xf]
      %v504 = vld [vmem:[%s1 + $0x4] sm:$0xf]
      %v505 = vld [vmem:[%s1 + $0x8] sm:$0xf]
      %v506 = vld [vmem:[%s1 + $0xc] sm:$0xf]
      %v507 = vld [vmem:[%s1 + $0x10] sm:$0xf]
      %v508 = vld [vmem:[%s1 + $0x14] sm:$0xf]
      %v509 = vld [vmem:[%s1 + $0x18] sm:$0x3]
      %v510 = vld [vmem:[#allocation2] sm:$0xf8]
      %v511 = vpack.c.bf16 %v510, %v510
      %s512 = scalar_lea.vmem %s1, 28
      %v513 = vld [vmem:[%s512] sm:$0xf]
      %v514 = vld [vmem:[%s512 + $0x4] sm:$0xf]
      %v515 = vld [vmem:[%s512 + $0x8] sm:$0xf]
      %v516 = vld [vmem:[%s512 + $0xc] sm:$0xf]
      %v517 = vld [vmem:[%s512 + $0x10] sm:$0xf]
      %v518 = vld [vmem:[%s512 + $0x14] sm:$0xf]
      %v519 = vld [vmem:[%s512 + $0x18] sm:$0x3]
      %v521 = vshrl.u32 %v511, 16
      %v523 = vrot.slane %v521, 1
      %v524 = vshll.u32 %v511, 16
      %v526 = vrot.slane %v524, 2
      %v527 = vor.u32 %v523, %v526
      %v535 = vunpack.c.l.b16 %v513
      %v536 = vunpack.c.l.b16 %v514
      %v537 = vunpack.c.l.b16 %v515
      %v538 = vunpack.c.l.b16 %v516
      %v539 = vunpack.c.l.b16 %v517
      %v540 = vunpack.c.l.b16 %v518
      %v541 = vunpack.c.l.b16 %v519
      %v542 = vpack.c.b16 %v536, %v535
      %v543 = vpack.c.b16 %v538, %v537
      %v544 = vpack.c.b16 %v540, %v539
      %v545 = vpack.c.b16 %v541, %v541
      %vm549 = vcmask 416768
      %v551 = vsel %vm549, %v527, 0
      %vm553 = vcmask 1040384
      %vm554 = vcmask 1041408
      %v555 = vsel %vm553, 4294967295, 65535
      %v556 = vsel %vm554, %v555, 0
      %v558 = vand.u32 %v545, %v556
      %560 = vmatprep.subr.bf16.mxu0 0
      %561 = vmatpush1.bf16.msra.mxu0 %v542
      %562 = vmatprep.subr.bf16.mxu0 0
      %563 = vmatpush1.bf16.msra.mxu0 %v543
      %564 = vmatprep.subr.bf16.mxu0 0
      %565 = vmatpush1.bf16.msra.mxu0 %v544
      %566 = vmatprep.subr.bf16.mxu0 0
      %567 = vmatpush1.bf16.msra.mxu0 %v558
      %568 = vmatprep.subr.bf16.mxu0 0
      %569 = vmatpush1.bf16.msra.mxu0 0
      %570 = vmatprep.subr.bf16.mxu0 0
      %571 = vmatpush1.bf16.msra.mxu0 0
      %572 = vmatprep.subr.bf16.mxu0 0
      %573 = vmatpush1.bf16.msra.mxu0 0
      %574 = vmatprep.subr.bf16.mxu0 0
      %575 = vmatpush1.bf16.msra.mxu0 0
      %576 = vmatprep.subr.bf16.mxu0 0
      %577 = vmatpush1.bf16.msra.mxu0 0
      %578 = vmatprep.subr.bf16.mxu0 0
      %579 = vmatpush1.bf16.msra.mxu0 0
      %580 = vmatprep.subr.bf16.mxu0 0
      %581 = vmatpush1.bf16.msra.mxu0 0
      %582 = vmatprep.subr.bf16.mxu0 0
      %583 = vmatpush1.bf16.msra.mxu0 0
      %584 = vmatprep.subr.bf16.mxu0 0
      %585 = vmatpush1.bf16.msra.mxu0 0
      %586 = vmatprep.subr.bf16.mxu0 0
      %587 = vmatpush1.bf16.msra.mxu0 0
      %588 = vmatprep.subr.bf16.mxu0 0
      %589 = vmatpush1.bf16.msra.mxu0 0
      %590 = vmatprep.subr.bf16.mxu0 0
      %591 = vmatpush1.bf16.msra.mxu0 0
      %592 = vmatprep.mubr.bf16.mxu0 0
      %593 = vmatmul.mubr.bf16.gmra.mrb[0].mxu0 %v551
      %v594 = vpop.f32.mrb[0].mxu0
      %v595 = vadd.f32 0.0, %v594
      %v596 = vpop.f32.mrb[0].mxu0
      %v597 = vpop.f32.mrb[0].mxu0
      %v598 = vpop.f32.mrb[0].mxu0
      %599 = vdwg.mxu0
      %v601 = vrot.slane %v502, 1
      %v609 = vunpack.c.l.b16 %v503
      %v610 = vunpack.c.l.b16 %v504
      %v611 = vunpack.c.l.b16 %v505
      %v612 = vunpack.c.l.b16 %v506
      %v613 = vunpack.c.l.b16 %v507
      %v614 = vunpack.c.l.b16 %v508
      %v615 = vunpack.c.l.b16 %v509
      %v616 = vpack.c.b16 %v610, %v609
      %v617 = vpack.c.b16 %v612, %v611
      %v618 = vpack.c.b16 %v614, %v613
      %v619 = vpack.c.b16 %v615, %v615
      %v624 = vsel %vm549, %v601, 0
      %v627 = vand.u32 %v619, %v556
      %629 = vmatprep.subr.bf16.mxu0 0
      %630 = vmatpush1.bf16.msra.mxu0 %v616
      %631 = vmatprep.subr.bf16.mxu0 0
      %632 = vmatpush1.bf16.msra.mxu0 %v617
      %633 = vmatprep.subr.bf16.mxu0 0
      %634 = vmatpush1.bf16.msra.mxu0 %v618
      %635 = vmatprep.subr.bf16.mxu0 0
      %636 = vmatpush1.bf16.msra.mxu0 %v627
      %637 = vmatprep.subr.bf16.mxu0 0
      %638 = vmatpush1.bf16.msra.mxu0 0
      %639 = vmatprep.subr.bf16.mxu0 0
      %640 = vmatpush1.bf16.msra.mxu0 0
      %641 = vmatprep.subr.bf16.mxu0 0
      %642 = vmatpush1.bf16.msra.mxu0 0
      %643 = vmatprep.subr.bf16.mxu0 0
      %644 = vmatpush1.bf16.msra.mxu0 0
      %645 = vmatprep.subr.bf16.mxu0 0
      %646 = vmatpush1.bf16.msra.mxu0 0
      %647 = vmatprep.subr.bf16.mxu0 0
      %648 = vmatpush1.bf16.msra.mxu0 0
      %649 = vmatprep.subr.bf16.mxu0 0
      %650 = vmatpush1.bf16.msra.mxu0 0
      %651 = vmatprep.subr.bf16.mxu0 0
      %652 = vmatpush1.bf16.msra.mxu0 0
      %653 = vmatprep.subr.bf16.mxu0 0
      %654 = vmatpush1.bf16.msra.mxu0 0
      %655 = vmatprep.subr.bf16.mxu0 0
      %656 = vmatpush1.bf16.msra.mxu0 0
      %657 = vmatprep.subr.bf16.mxu0 0
      %658 = vmatpush1.bf16.msra.mxu0 0
      %659 = vmatprep.subr.bf16.mxu0 0
      %660 = vmatpush1.bf16.msra.mxu0 0
      %661 = vmatprep.mubr.bf16.mxu0 0
      %662 = vmatmul.mubr.bf16.gmra.mrb[0].mxu0 %v624
      %v663 = vpop.f32.mrb[0].mxu0
      %v664 = vadd.f32 %v595, %v663
      %v665 = vpop.f32.mrb[0].mxu0
      %v666 = vpop.f32.mrb[0].mxu0
      %v667 = vpop.f32.mrb[0].mxu0
      %668 = vdwg.mxu0
      %v669 = vld [vmem:[#allocation2] sm:$0xf0]
      %v670 = vld [vmem:[#allocation2 + $0x10] sm:$0x1]
      %v671 = vpack.c.bf16 %v670, %v669
      %s672 = scalar_lea.vmem %s1, 56
      %v673 = vld [vmem:[%s672] sm:$0xf]
      %v674 = vld [vmem:[%s672 + $0x4] sm:$0xf]
      %v675 = vld [vmem:[%s672 + $0x8] sm:$0xf]
      %v676 = vld [vmem:[%s672 + $0xc] sm:$0xf]
      %v677 = vld [vmem:[%s672 + $0x10] sm:$0xf]
      %v678 = vld [vmem:[%s672 + $0x14] sm:$0xf]
      %v679 = vld [vmem:[%s672 + $0x18] sm:$0x3]
      %v681 = vrot.slane %v671, 2
      %v689 = vunpack.c.l.b16 %v673
      %v690 = vunpack.c.l.b16 %v674
      %v691 = vunpack.c.l.b16 %v675
      %v692 = vunpack.c.l.b16 %v676
      %v693 = vunpack.c.l.b16 %v677
      %v694 = vunpack.c.l.b16 %v678
      %v695 = vunpack.c.l.b16 %v679
      %v696 = vpack.c.b16 %v690, %v689
      %v697 = vpack.c.b16 %v692, %v691
      %v698 = vpack.c.b16 %v694, %v693
      %v699 = vpack.c.b16 %v695, %v695
      %v704 = vsel %vm549, %v681, 0
      %v707 = vand.u32 %v699, %v556
      %709 = vmatprep.subr.bf16.mxu0 0
      %710 = vmatpush1.bf16.msra.mxu0 %v696
      %711 = vmatprep.subr.bf16.mxu0 0
      %712 = vmatpush1.bf16.msra.mxu0 %v697
      %713 = vmatprep.subr.bf16.mxu0 0
      %714 = vmatpush1.bf16.msra.mxu0 %v698
      %715 = vmatprep.subr.bf16.mxu0 0
      %716 = vmatpush1.bf16.msra.mxu0 %v707
      %717 = vmatprep.subr.bf16.mxu0 0
      %718 = vmatpush1.bf16.msra.mxu0 0
      %719 = vmatprep.subr.bf16.mxu0 0
      %720 = vmatpush1.bf16.msra.mxu0 0
      %721 = vmatprep.subr.bf16.mxu0 0
      %722 = vmatpush1.bf16.msra.mxu0 0
      %723 = vmatprep.subr.bf16.mxu0 0
      %724 = vmatpush1.bf16.msra.mxu0 0
      %725 = vmatprep.subr.bf16.mxu0 0
      %726 = vmatpush1.bf16.msra.mxu0 0
      %727 = vmatprep.subr.bf16.mxu0 0
      %728 = vmatpush1.bf16.msra.mxu0 0
      %729 = vmatprep.subr.bf16.mxu0 0
      %730 = vmatpush1.bf16.msra.mxu0 0
      %731 = vmatprep.subr.bf16.mxu0 0
      %732 = vmatpush1.bf16.msra.mxu0 0
      %733 = vmatprep.subr.bf16.mxu0 0
      %734 = vmatpush1.bf16.msra.mxu0 0
      %735 = vmatprep.subr.bf16.mxu0 0
      %736 = vmatpush1.bf16.msra.mxu0 0
      %737 = vmatprep.subr.bf16.mxu0 0
      %738 = vmatpush1.bf16.msra.mxu0 0
      %739 = vmatprep.subr.bf16.mxu0 0
      %740 = vmatpush1.bf16.msra.mxu0 0
      %741 = vmatprep.mubr.bf16.mxu0 0
      %742 = vmatmul.mubr.bf16.gmra.mrb[0].mxu0 %v704
      %v743 = vpop.f32.mrb[0].mxu0
      %v744 = vadd.f32 0.0, %v743
      %v745 = vpop.f32.mrb[0].mxu0
      %v746 = vpop.f32.mrb[0].mxu0
      %v747 = vpop.f32.mrb[0].mxu0
      %748 = vdwg.mxu0
      %v749 = vadd.f32 %v664, %v744
      %v750 = vld [vmem:[%s2] sm:$0x1]
      %v752 = vlaneseq
      %v753 = vshrl.u32 %v752, 7
      %v754 = vsub.s32 0, %v753
      %v755 = vrot.slane %v750, %v754
      %v757 = vadd.f32 %v749, %v755
      %v758 = vmax.f32 %v757, 0.0
      %v760 = vrot.slane %v758, 5
      %vm762 = vcmask 523267
      %763 = vst.msk [vmem:[#allocation2] sm:$0xf8] %vm762, %v760
      %v764 = vld [vmem:[#allocation2] sm:$0x3e]
      %v765 = vpack.c.bf16 %v764, %v764
      %v766 = vld [vmem:[%s3] sm:$0xf]
      %v767 = vld [vmem:[%s3 + $0x4] sm:$0xf]
      %v768 = vld [vmem:[%s3 + $0x8] sm:$0xf]
      %v769 = vld [vmem:[%s3 + $0xc] sm:$0xf]
      %v770 = vld [vmem:[%s3 + $0x10] sm:$0xf]
      %v771 = vld [vmem:[%s3 + $0x14] sm:$0xf]
      %v772 = vld [vmem:[%s3 + $0x18] sm:$0xf]
      %v773 = vld [vmem:[%s3 + $0x1c] sm:$0xf]
      %v774 = vld [vmem:[#allocation2] sm:$0x7c]
      %v775 = vpack.c.bf16 %v774, %v774
      %s776 = scalar_lea.vmem %s3, 32
      %v777 = vld [vmem:[%s776] sm:$0xf]
      %v778 = vld [vmem:[%s776 + $0x4] sm:$0xf]
      %v779 = vld [vmem:[%s776 + $0x8] sm:$0xf]
      %v780 = vld [vmem:[%s776 + $0xc] sm:$0xf]
      %v781 = vld [vmem:[%s776 + $0x10] sm:$0xf]
      %v782 = vld [vmem:[%s776 + $0x14] sm:$0xf]
      %v783 = vld [vmem:[%s776 + $0x18] sm:$0xf]
      %v784 = vld [vmem:[%s776 + $0x1c] sm:$0xf]
      %v786 = vrot.slane %v775, 1
      %v795 = vunpack.c.l.b16 %v777
      %v796 = vunpack.c.l.b16 %v778
      %v797 = vunpack.c.l.b16 %v779
      %v798 = vunpack.c.l.b16 %v780
      %v799 = vunpack.c.l.b16 %v781
      %v800 = vunpack.c.l.b16 %v782
      %v801 = vunpack.c.l.b16 %v783
      %v802 = vunpack.c.l.b16 %v784
      %v803 = vpack.c.b16 %v796, %v795
      %v804 = vpack.c.b16 %v798, %v797
      %v805 = vpack.c.b16 %v800, %v799
      %v806 = vpack.c.b16 %v802, %v801
      %vm811 = vcmask 523264
      %v813 = vsel %vm811, %v786, 0
      %815 = vmatprep.subr.bf16.mxu0 0
      %816 = vmatpush1.bf16.msra.mxu0 %v803
      %817 = vmatprep.subr.bf16.mxu0 0
      %818 = vmatpush1.bf16.msra.mxu0 %v804
      %819 = vmatprep.subr.bf16.mxu0 0
      %820 = vmatpush1.bf16.msra.mxu0 %v805
      %821 = vmatprep.subr.bf16.mxu0 0
      %822 = vmatpush1.bf16.msra.mxu0 %v806
      %823 = vmatprep.subr.bf16.mxu0 0
      %824 = vmatpush1.bf16.msra.mxu0 0
      %825 = vmatprep.subr.bf16.mxu0 0
      %826 = vmatpush1.bf16.msra.mxu0 0
      %827 = vmatprep.subr.bf16.mxu0 0
      %828 = vmatpush1.bf16.msra.mxu0 0
      %829 = vmatprep.subr.bf16.mxu0 0
      %830 = vmatpush1.bf16.msra.mxu0 0
      %831 = vmatprep.subr.bf16.mxu0 0
      %832 = vmatpush1.bf16.msra.mxu0 0
      %833 = vmatprep.subr.bf16.mxu0 0
      %834 = vmatpush1.bf16.msra.mxu0 0
      %835 = vmatprep.subr.bf16.mxu0 0
      %836 = vmatpush1.bf16.msra.mxu0 0
      %837 = vmatprep.subr.bf16.mxu0 0
      %838 = vmatpush1.bf16.msra.mxu0 0
      %839 = vmatprep.subr.bf16.mxu0 0
      %840 = vmatpush1.bf16.msra.mxu0 0
      %841 = vmatprep.subr.bf16.mxu0 0
      %842 = vmatpush1.bf16.msra.mxu0 0
      %843 = vmatprep.subr.bf16.mxu0 0
      %844 = vmatpush1.bf16.msra.mxu0 0
      %845 = vmatprep.subr.bf16.mxu0 0
      %846 = vmatpush1.bf16.msra.mxu0 0
      %847 = vmatprep.mubr.bf16.mxu0 0
      %848 = vmatmul.mubr.bf16.gmra.mrb[0].mxu0 %v813
      %v849 = vpop.f32.mrb[0].mxu0
      %v850 = vadd.f32 0.0, %v849
      %v851 = vpop.f32.mrb[0].mxu0
      %v852 = vpop.f32.mrb[0].mxu0
      %v853 = vpop.f32.mrb[0].mxu0
      %854 = vdwg.mxu0
      %v856 = vshrl.u32 %v765, 16
      %v858 = vshll.u32 %v765, 16
      %v860 = vrot.slane %v858, 1
      %v861 = vor.u32 %v856, %v860
      %v870 = vunpack.c.l.b16 %v766
      %v871 = vunpack.c.l.b16 %v767
      %v872 = vunpack.c.l.b16 %v768
      %v873 = vunpack.c.l.b16 %v769
      %v874 = vunpack.c.l.b16 %v770
      %v875 = vunpack.c.l.b16 %v771
      %v876 = vunpack.c.l.b16 %v772
      %v877 = vunpack.c.l.b16 %v773
      %v878 = vpack.c.b16 %v871, %v870
      %v879 = vpack.c.b16 %v873, %v872
      %v880 = vpack.c.b16 %v875, %v874
      %v881 = vpack.c.b16 %v877, %v876
      %v887 = vsel %vm811, %v861, 0
      %889 = vmatprep.subr.bf16.mxu0 0
      %890 = vmatpush1.bf16.msra.mxu0 %v878
      %891 = vmatprep.subr.bf16.mxu0 0
      %892 = vmatpush1.bf16.msra.mxu0 %v879
      %893 = vmatprep.subr.bf16.mxu0 0
      %894 = vmatpush1.bf16.msra.mxu0 %v880
      %895 = vmatprep.subr.bf16.mxu0 0
      %896 = vmatpush1.bf16.msra.mxu0 %v881
      %897 = vmatprep.subr.bf16.mxu0 0
      %898 = vmatpush1.bf16.msra.mxu0 0
      %899 = vmatprep.subr.bf16.mxu0 0
      %900 = vmatpush1.bf16.msra.mxu0 0
      %901 = vmatprep.subr.bf16.mxu0 0
      %902 = vmatpush1.bf16.msra.mxu0 0
      %903 = vmatprep.subr.bf16.mxu0 0
      %904 = vmatpush1.bf16.msra.mxu0 0
      %905 = vmatprep.subr.bf16.mxu0 0
      %906 = vmatpush1.bf16.msra.mxu0 0
      %907 = vmatprep.subr.bf16.mxu0 0
      %908 = vmatpush1.bf16.msra.mxu0 0
      %909 = vmatprep.subr.bf16.mxu0 0
      %910 = vmatpush1.bf16.msra.mxu0 0
      %911 = vmatprep.subr.bf16.mxu0 0
      %912 = vmatpush1.bf16.msra.mxu0 0
      %913 = vmatprep.subr.bf16.mxu0 0
      %914 = vmatpush1.bf16.msra.mxu0 0
      %915 = vmatprep.subr.bf16.mxu0 0
      %916 = vmatpush1.bf16.msra.mxu0 0
      %917 = vmatprep.subr.bf16.mxu0 0
      %918 = vmatpush1.bf16.msra.mxu0 0
      %919 = vmatprep.subr.bf16.mxu0 0
      %920 = vmatpush1.bf16.msra.mxu0 0
      %921 = vmatprep.mubr.bf16.mxu0 0
      %922 = vmatmul.mubr.bf16.gmra.mrb[0].mxu0 %v887
      %v923 = vpop.f32.mrb[0].mxu0
      %v924 = vadd.f32 %v850, %v923
      %v925 = vpop.f32.mrb[0].mxu0
      %v926 = vpop.f32.mrb[0].mxu0
      %v927 = vpop.f32.mrb[0].mxu0
      %928 = vdwg.mxu0
      %v929 = vld [vmem:[#allocation2] sm:$0xf8]
      %v930 = vpack.c.bf16 %v929, %v929
      %s931 = scalar_lea.vmem %s3, 64
      %v932 = vld [vmem:[%s931] sm:$0xf]
      %v933 = vld [vmem:[%s931 + $0x4] sm:$0xf]
      %v934 = vld [vmem:[%s931 + $0x8] sm:$0xf]
      %v935 = vld [vmem:[%s931 + $0xc] sm:$0xf]
      %v936 = vld [vmem:[%s931 + $0x10] sm:$0xf]
      %v937 = vld [vmem:[%s931 + $0x14] sm:$0xf]
      %v938 = vld [vmem:[%s931 + $0x18] sm:$0xf]
      %v939 = vld [vmem:[%s931 + $0x1c] sm:$0xf]
      %v941 = vshrl.u32 %v930, 16
      %v943 = vrot.slane %v941, 1
      %v944 = vshll.u32 %v930, 16
      %v946 = vrot.slane %v944, 2
      %v947 = vor.u32 %v943, %v946
      %v956 = vunpack.c.l.b16 %v932
      %v957 = vunpack.c.l.b16 %v933
      %v958 = vunpack.c.l.b16 %v934
      %v959 = vunpack.c.l.b16 %v935
      %v960 = vunpack.c.l.b16 %v936
      %v961 = vunpack.c.l.b16 %v937
      %v962 = vunpack.c.l.b16 %v938
      %v963 = vunpack.c.l.b16 %v939
      %v964 = vpack.c.b16 %v957, %v956
      %v965 = vpack.c.b16 %v959, %v958
      %v966 = vpack.c.b16 %v961, %v960
      %v967 = vpack.c.b16 %v963, %v962
      %v973 = vsel %vm811, %v947, 0
      %975 = vmatprep.subr.bf16.mxu0 0
      %976 = vmatpush1.bf16.msra.mxu0 %v964
      %977 = vmatprep.subr.bf16.mxu0 0
      %978 = vmatpush1.bf16.msra.mxu0 %v965
      %979 = vmatprep.subr.bf16.mxu0 0
      %980 = vmatpush1.bf16.msra.mxu0 %v966
      %981 = vmatprep.subr.bf16.mxu0 0
      %982 = vmatpush1.bf16.msra.mxu0 %v967
      %983 = vmatprep.subr.bf16.mxu0 0
      %984 = vmatpush1.bf16.msra.mxu0 0
      %985 = vmatprep.subr.bf16.mxu0 0
      %986 = vmatpush1.bf16.msra.mxu0 0
      %987 = vmatprep.subr.bf16.mxu0 0
      %988 = vmatpush1.bf16.msra.mxu0 0
      %989 = vmatprep.subr.bf16.mxu0 0
      %990 = vmatpush1.bf16.msra.mxu0 0
      %991 = vmatprep.subr.bf16.mxu0 0
      %992 = vmatpush1.bf16.msra.mxu0 0
      %993 = vmatprep.subr.bf16.mxu0 0
      %994 = vmatpush1.bf16.msra.mxu0 0
      %995 = vmatprep.subr.bf16.mxu0 0
      %996 = vmatpush1.bf16.msra.mxu0 0
      %997 = vmatprep.subr.bf16.mxu0 0
      %998 = vmatpush1.bf16.msra.mxu0 0
      %999 = vmatprep.subr.bf16.mxu0 0
      %1000 = vmatpush1.bf16.msra.mxu0 0
      %1001 = vmatprep.subr.bf16.mxu0 0
      %1002 = vmatpush1.bf16.msra.mxu0 0
      %1003 = vmatprep.subr.bf16.mxu0 0
      %1004 = vmatpush1.bf16.msra.mxu0 0
      %1005 = vmatprep.subr.bf16.mxu0 0
      %1006 = vmatpush1.bf16.msra.mxu0 0
      %1007 = vmatprep.mubr.bf16.mxu0 0
      %1008 = vmatmul.mubr.bf16.gmra.mrb[0].mxu0 %v973
      %v1009 = vpop.f32.mrb[0].mxu0
      %v1010 = vadd.f32 0.0, %v1009
      %v1011 = vpop.f32.mrb[0].mxu0
      %v1012 = vpop.f32.mrb[0].mxu0
      %v1013 = vpop.f32.mrb[0].mxu0
      %1014 = vdwg.mxu0
      %v1015 = vadd.f32 %v924, %v1010
      %v1016 = vld [vmem:[#allocation2] sm:$0xf0]
      %v1017 = vld [vmem:[#allocation2 + $0x10] sm:$0x1]
      %v1018 = vpack.c.bf16 %v1017, %v1016
      %s1019 = scalar_lea.vmem %s3, 96
      %v1020 = vld [vmem:[%s1019] sm:$0xf]
      %v1021 = vld [vmem:[%s1019 + $0x4] sm:$0xf]
      %v1022 = vld [vmem:[%s1019 + $0x8] sm:$0xf]
      %v1023 = vld [vmem:[%s1019 + $0xc] sm:$0xf]
      %v1024 = vld [vmem:[%s1019 + $0x10] sm:$0xf]
      %v1025 = vld [vmem:[%s1019 + $0x14] sm:$0xf]
      %v1026 = vld [vmem:[%s1019 + $0x18] sm:$0xf]
      %v1027 = vld [vmem:[%s1019 + $0x1c] sm:$0xf]
      %v1029 = vrot.slane %v1018, 2
      %v1038 = vunpack.c.l.b16 %v1020
      %v1039 = vunpack.c.l.b16 %v1021
      %v1040 = vunpack.c.l.b16 %v1022
      %v1041 = vunpack.c.l.b16 %v1023
      %v1042 = vunpack.c.l.b16 %v1024
      %v1043 = vunpack.c.l.b16 %v1025
      %v1044 = vunpack.c.l.b16 %v1026
      %v1045 = vunpack.c.l.b16 %v1027
      %v1046 = vpack.c.b16 %v1039, %v1038
      %v1047 = vpack.c.b16 %v1041, %v1040
      %v1048 = vpack.c.b16 %v1043, %v1042
      %v1049 = vpack.c.b16 %v1045, %v1044
      %v1055 = vsel %vm811, %v1029, 0
      %1057 = vmatprep.subr.bf16.mxu0 0
      %1058 = vmatpush1.bf16.msra.mxu0 %v1046
      %1059 = vmatprep.subr.bf16.mxu0 0
      %1060 = vmatpush1.bf16.msra.mxu0 %v1047
      %1061 = vmatprep.subr.bf16.mxu0 0
      %1062 = vmatpush1.bf16.msra.mxu0 %v1048
      %1063 = vmatprep.subr.bf16.mxu0 0
      %1064 = vmatpush1.bf16.msra.mxu0 %v1049
      %1065 = vmatprep.subr.bf16.mxu0 0
      %1066 = vmatpush1.bf16.msra.mxu0 0
      %1067 = vmatprep.subr.bf16.mxu0 0
      %1068 = vmatpush1.bf16.msra.mxu0 0
      %1069 = vmatprep.subr.bf16.mxu0 0
      %1070 = vmatpush1.bf16.msra.mxu0 0
      %1071 = vmatprep.subr.bf16.mxu0 0
      %1072 = vmatpush1.bf16.msra.mxu0 0
      %1073 = vmatprep.subr.bf16.mxu0 0
      %1074 = vmatpush1.bf16.msra.mxu0 0
      %1075 = vmatprep.subr.bf16.mxu0 0
      %1076 = vmatpush1.bf16.msra.mxu0 0
      %1077 = vmatprep.subr.bf16.mxu0 0
      %1078 = vmatpush1.bf16.msra.mxu0 0
      %1079 = vmatprep.subr.bf16.mxu0 0
      %1080 = vmatpush1.bf16.msra.mxu0 0
      %1081 = vmatprep.subr.bf16.mxu0 0
      %1082 = vmatpush1.bf16.msra.mxu0 0
      %1083 = vmatprep.subr.bf16.mxu0 0
      %1084 = vmatpush1.bf16.msra.mxu0 0
      %1085 = vmatprep.subr.bf16.mxu0 0
      %1086 = vmatpush1.bf16.msra.mxu0 0
      %1087 = vmatprep.subr.bf16.mxu0 0
      %1088 = vmatpush1.bf16.msra.mxu0 0
      %1089 = vmatprep.mubr.bf16.mxu0 0
      %1090 = vmatmul.mubr.bf16.gmra.mrb[0].mxu0 %v1055
      %v1091 = vpop.f32.mrb[0].mxu0
      %v1092 = vadd.f32 0.0, %v1091
      %v1093 = vpop.f32.mrb[0].mxu0
      %v1094 = vpop.f32.mrb[0].mxu0
      %v1095 = vpop.f32.mrb[0].mxu0
      %1096 = vdwg.mxu0
      %v1097 = vadd.f32 %v1015, %v1092
      %v1098 = vld [vmem:[#allocation2] sm:$0xe0]
      %v1099 = vld [vmem:[#allocation2 + $0x10] sm:$0x3]
      %v1100 = vpack.c.bf16 %v1099, %v1098
      %s1101 = scalar_lea.vmem %s3, 128
      %v1102 = vld [vmem:[%s1101] sm:$0xf]
      %v1103 = vld [vmem:[%s1101 + $0x4] sm:$0xf]
      %v1104 = vld [vmem:[%s1101 + $0x8] sm:$0xf]
      %v1105 = vld [vmem:[%s1101 + $0xc] sm:$0xf]
      %v1106 = vld [vmem:[%s1101 + $0x10] sm:$0xf]
      %v1107 = vld [vmem:[%s1101 + $0x14] sm:$0xf]
      %v1108 = vld [vmem:[%s1101 + $0x18] sm:$0xf]
      %v1109 = vld [vmem:[%s1101 + $0x1c] sm:$0xf]
      %v1111 = vshrl.u32 %v1100, 16
      %v1113 = vrot.slane %v1111, 2
      %v1114 = vshll.u32 %v1100, 16
      %v1116 = vrot.slane %v1114, 3
      %v1117 = vor.u32 %v1113, %v1116
      %v1126 = vunpack.c.l.b16 %v1102
      %v1127 = vunpack.c.l.b16 %v1103
      %v1128 = vunpack.c.l.b16 %v1104
      %v1129 = vunpack.c.l.b16 %v1105
      %v1130 = vunpack.c.l.b16 %v1106
      %v1131 = vunpack.c.l.b16 %v1107
      %v1132 = vunpack.c.l.b16 %v1108
      %v1133 = vunpack.c.l.b16 %v1109
      %v1134 = vpack.c.b16 %v1127, %v1126
      %v1135 = vpack.c.b16 %v1129, %v1128
      %v1136 = vpack.c.b16 %v1131, %v1130
      %v1137 = vpack.c.b16 %v1133, %v1132
      %v1143 = vsel %vm811, %v1117, 0
      %1145 = vmatprep.subr.bf16.mxu0 0
      %1146 = vmatpush1.bf16.msra.mxu0 %v1134
      %1147 = vmatprep.subr.bf16.mxu0 0
      %1148 = vmatpush1.bf16.msra.mxu0 %v1135
      %1149 = vmatprep.subr.bf16.mxu0 0
      %1150 = vmatpush1.bf16.msra.mxu0 %v1136
      %1151 = vmatprep.subr.bf16.mxu0 0
      %1152 = vmatpush1.bf16.msra.mxu0 %v1137
      %1153 = vmatprep.subr.bf16.mxu0 0
      %1154 = vmatpush1.bf16.msra.mxu0 0
      %1155 = vmatprep.subr.bf16.mxu0 0
      %1156 = vmatpush1.bf16.msra.mxu0 0
      %1157 = vmatprep.subr.bf16.mxu0 0
      %1158 = vmatpush1.bf16.msra.mxu0 0
      %1159 = vmatprep.subr.bf16.mxu0 0
      %1160 = vmatpush1.bf16.msra.mxu0 0
      %1161 = vmatprep.subr.bf16.mxu0 0
      %1162 = vmatpush1.bf16.msra.mxu0 0
      %1163 = vmatprep.subr.bf16.mxu0 0
      %1164 = vmatpush1.bf16.msra.mxu0 0
      %1165 = vmatprep.subr.bf16.mxu0 0
      %1166 = vmatpush1.bf16.msra.mxu0 0
      %1167 = vmatprep.subr.bf16.mxu0 0
      %1168 = vmatpush1.bf16.msra.mxu0 0
      %1169 = vmatprep.subr.bf16.mxu0 0
      %1170 = vmatpush1.bf16.msra.mxu0 0
      %1171 = vmatprep.subr.bf16.mxu0 0
      %1172 = vmatpush1.bf16.msra.mxu0 0
      %1173 = vmatprep.subr.bf16.mxu0 0
      %1174 = vmatpush1.bf16.msra.mxu0 0
      %1175 = vmatprep.subr.bf16.mxu0 0
      %1176 = vmatpush1.bf16.msra.mxu0 0
      %1177 = vmatprep.mubr.bf16.mxu0 0
      %1178 = vmatmul.mubr.bf16.gmra.mrb[0].mxu0 %v1143
      %v1179 = vpop.f32.mrb[0].mxu0
      %v1180 = vadd.f32 0.0, %v1179
      %v1181 = vpop.f32.mrb[0].mxu0
      %v1182 = vpop.f32.mrb[0].mxu0
      %v1183 = vpop.f32.mrb[0].mxu0
      %1184 = vdwg.mxu0
      %v1185 = vadd.f32 %v1097, %v1180
      %v1186 = vld [vmem:[%s4] sm:$0x1]
      %v1188 = vlaneseq
      %v1189 = vshrl.u32 %v1188, 7
      %v1190 = vsub.s32 0, %v1189
      %v1191 = vrot.slane %v1186, %v1190
      %v1193 = vadd.f32 %v1185, %v1191
      %v1194 = vmax.f32 %v1193, 0.0
      %v1196 = vrot.slane %v1194, 5
      %1198 = vst [vmem:[#allocation2] sm:$0xf8] %v1196
      %v1199 = vld [vmem:[#allocation2] sm:$0x1f]
      %v1200 = vpack.c.bf16 %v1199, %v1199
      %v1201 = vld [vmem:[%s5] sm:$0xff]
      %v1202 = vld [vmem:[%s5 + $0x8] sm:$0xff]
      %v1203 = vld [vmem:[%s5 + $0x10] sm:$0xff]
      %v1204 = vld [vmem:[%s5 + $0x18] sm:$0xff]
      %v1205 = vld [vmem:[%s5 + $0x20] sm:$0xff]
      %v1206 = vld [vmem:[%s5 + $0x28] sm:$0xff]
      %v1207 = vld [vmem:[%s5 + $0x30] sm:$0xff]
      %v1208 = vld [vmem:[%s5 + $0x38] sm:$0xff]
      %v1209 = vld [vmem:[%s5 + $0x40] sm:$0xff]
      %v1210 = vld [vmem:[%s5 + $0x48] sm:$0xff]
      %v1211 = vld [vmem:[%s5 + $0x50] sm:$0xff]
      %v1212 = vld [vmem:[%s5 + $0x58] sm:$0xff]
      %v1213 = vld [vmem:[%s5 + $0x60] sm:$0xff]
      %v1214 = vld [vmem:[%s5 + $0x68] sm:$0xff]
      %v1215 = vld [vmem:[%s5 + $0x70] sm:$0xff]
      %v1216 = vld [vmem:[%s5 + $0x78] sm:$0xff]
      %v1217 = vld [vmem:[#allocation2] sm:$0x3e]
      %v1218 = vpack.c.bf16 %v1217, %v1217
      %s1219 = scalar_lea.vmem %s5, 128
      %v1220 = vld [vmem:[%s1219] sm:$0xff]
      %v1221 = vld [vmem:[%s1219 + $0x8] sm:$0xff]
      %v1222 = vld [vmem:[%s1219 + $0x10] sm:$0xff]
      %v1223 = vld [vmem:[%s1219 + $0x18] sm:$0xff]
      %v1224 = vld [vmem:[%s1219 + $0x20] sm:$0xff]
      %v1225 = vld [vmem:[%s1219 + $0x28] sm:$0xff]
      %v1226 = vld [vmem:[%s1219 + $0x30] sm:$0xff]
      %v1227 = vld [vmem:[%s1219 + $0x38] sm:$0xff]
      %v1228 = vld [vmem:[%s1219 + $0x40] sm:$0xff]
      %v1229 = vld [vmem:[%s1219 + $0x48] sm:$0xff]
      %v1230 = vld [vmem:[%s1219 + $0x50] sm:$0xff]
      %v1231 = vld [vmem:[%s1219 + $0x58] sm:$0xff]
      %v1232 = vld [vmem:[%s1219 + $0x60] sm:$0xff]
      %v1233 = vld [vmem:[%s1219 + $0x68] sm:$0xff]
      %v1234 = vld [vmem:[%s1219 + $0x70] sm:$0xff]
      %v1235 = vld [vmem:[%s1219 + $0x78] sm:$0xff]
      %v1237 = vshrl.u32 %v1218, 16
      %v1239 = vshll.u32 %v1218, 16
      %v1241 = vrot.slane %v1239, 1
      %v1242 = vor.u32 %v1237, %v1241
      %v1260 = vunpack.c.l.b16 %v1220
      %v1261 = vunpack.c.h.b16 %v1220
      %v1262 = vunpack.c.l.b16 %v1221
      %v1263 = vunpack.c.h.b16 %v1221
      %v1264 = vunpack.c.l.b16 %v1222
      %v1265 = vunpack.c.h.b16 %v1222
      %v1266 = vunpack.c.l.b16 %v1223
      %v1267 = vunpack.c.h.b16 %v1223
      %v1268 = vunpack.c.l.b16 %v1224
      %v1269 = vunpack.c.h.b16 %v1224
      %v1270 = vunpack.c.l.b16 %v1225
      %v1271 = vunpack.c.h.b16 %v1225
      %v1272 = vunpack.c.l.b16 %v1226
      %v1273 = vunpack.c.h.b16 %v1226
      %v1274 = vunpack.c.l.b16 %v1227
      %v1275 = vunpack.c.h.b16 %v1227
      %v1276 = vunpack.c.l.b16 %v1228
      %v1277 = vunpack.c.h.b16 %v1228
      %v1278 = vunpack.c.l.b16 %v1229
      %v1279 = vunpack.c.h.b16 %v1229
      %v1280 = vunpack.c.l.b16 %v1230
      %v1281 = vunpack.c.h.b16 %v1230
      %v1282 = vunpack.c.l.b16 %v1231
      %v1283 = vunpack.c.h.b16 %v1231
      %v1284 = vunpack.c.l.b16 %v1232
      %v1285 = vunpack.c.h.b16 %v1232
      %v1286 = vunpack.c.l.b16 %v1233
      %v1287 = vunpack.c.h.b16 %v1233
      %v1288 = vunpack.c.l.b16 %v1234
      %v1289 = vunpack.c.h.b16 %v1234
      %v1290 = vunpack.c.l.b16 %v1235
      %v1291 = vunpack.c.h.b16 %v1235
      %v1292 = vpack.c.b16 %v1262, %v1260
      %v1293 = vpack.c.b16 %v1263, %v1261
      %v1294 = vpack.c.b16 %v1266, %v1264
      %v1295 = vpack.c.b16 %v1267, %v1265
      %v1296 = vpack.c.b16 %v1270, %v1268
      %v1297 = vpack.c.b16 %v1271, %v1269
      %v1298 = vpack.c.b16 %v1274, %v1272
      %v1299 = vpack.c.b16 %v1275, %v1273
      %v1300 = vpack.c.b16 %v1278, %v1276
      %v1301 = vpack.c.b16 %v1279, %v1277
      %v1302 = vpack.c.b16 %v1282, %v1280
      %v1303 = vpack.c.b16 %v1283, %v1281
      %v1304 = vpack.c.b16 %v1286, %v1284
      %v1305 = vpack.c.b16 %v1287, %v1285
      %v1306 = vpack.c.b16 %v1290, %v1288
      %v1307 = vpack.c.b16 %v1291, %v1289
      %1324 = vmatprep.subr.bf16.mxu0 %v1293
      %1325 = vmatpush1.bf16.msra.mxu0 %v1292
      %1326 = vmatprep.subr.bf16.mxu0 %v1295
      %1327 = vmatpush1.bf16.msra.mxu0 %v1294
      %1328 = vmatprep.subr.bf16.mxu0 %v1297
      %1329 = vmatpush1.bf16.msra.mxu0 %v1296
      %1330 = vmatprep.subr.bf16.mxu0 %v1299
      %1331 = vmatpush1.bf16.msra.mxu0 %v1298
      %1332 = vmatprep.subr.bf16.mxu0 %v1301
      %1333 = vmatpush1.bf16.msra.mxu0 %v1300
      %1334 = vmatprep.subr.bf16.mxu0 %v1303
      %1335 = vmatpush1.bf16.msra.mxu0 %v1302
      %1336 = vmatprep.subr.bf16.mxu0 %v1305
      %1337 = vmatpush1.bf16.msra.mxu0 %v1304
      %1338 = vmatprep.subr.bf16.mxu0 %v1307
      %1339 = vmatpush1.bf16.msra.mxu0 %v1306
      %1340 = vmatprep.subr.bf16.mxu0 0
      %1341 = vmatpush1.bf16.msra.mxu0 0
      %1342 = vmatprep.subr.bf16.mxu0 0
      %1343 = vmatpush1.bf16.msra.mxu0 0
      %1344 = vmatprep.subr.bf16.mxu0 0
      %1345 = vmatpush1.bf16.msra.mxu0 0
      %1346 = vmatprep.subr.bf16.mxu0 0
      %1347 = vmatpush1.bf16.msra.mxu0 0
      %1348 = vmatprep.subr.bf16.mxu0 0
      %1349 = vmatpush1.bf16.msra.mxu0 0
      %1350 = vmatprep.subr.bf16.mxu0 0
      %1351 = vmatpush1.bf16.msra.mxu0 0
      %1352 = vmatprep.subr.bf16.mxu0 0
      %1353 = vmatpush1.bf16.msra.mxu0 0
      %1354 = vmatprep.subr.bf16.mxu0 0
      %1355 = vmatpush1.bf16.msra.mxu0 0
      %1356 = vmatprep.mubr.bf16.mxu0 0
      %1357 = vmatmul.mubr.bf16.gmra.mrb[0].mxu0 %v1242
      %v1358 = vpop.f32.mrb[0].mxu0
      %v1359 = vadd.f32 0.0, %v1358
      %v1360 = vpop.f32.mrb[0].mxu0
      %v1361 = vadd.f32 0.0, %v1360
      %v1362 = vpop.f32.mrb[0].mxu0
      %v1363 = vpop.f32.mrb[0].mxu0
      %1364 = vdwg.mxu0
      %v1381 = vunpack.c.l.b16 %v1201
      %v1382 = vunpack.c.h.b16 %v1201
      %v1383 = vunpack.c.l.b16 %v1202
      %v1384 = vunpack.c.h.b16 %v1202
      %v1385 = vunpack.c.l.b16 %v1203
      %v1386 = vunpack.c.h.b16 %v1203
      %v1387 = vunpack.c.l.b16 %v1204
      %v1388 = vunpack.c.h.b16 %v1204
      %v1389 = vunpack.c.l.b16 %v1205
      %v1390 = vunpack.c.h.b16 %v1205
      %v1391 = vunpack.c.l.b16 %v1206
      %v1392 = vunpack.c.h.b16 %v1206
      %v1393 = vunpack.c.l.b16 %v1207
      %v1394 = vunpack.c.h.b16 %v1207
      %v1395 = vunpack.c.l.b16 %v1208
      %v1396 = vunpack.c.h.b16 %v1208
      %v1397 = vunpack.c.l.b16 %v1209
      %v1398 = vunpack.c.h.b16 %v1209
      %v1399 = vunpack.c.l.b16 %v1210
      %v1400 = vunpack.c.h.b16 %v1210
      %v1401 = vunpack.c.l.b16 %v1211
      %v1402 = vunpack.c.h.b16 %v1211
      %v1403 = vunpack.c.l.b16 %v1212
      %v1404 = vunpack.c.h.b16 %v1212
      %v1405 = vunpack.c.l.b16 %v1213
      %v1406 = vunpack.c.h.b16 %v1213
      %v1407 = vunpack.c.l.b16 %v1214
      %v1408 = vunpack.c.h.b16 %v1214
      %v1409 = vunpack.c.l.b16 %v1215
      %v1410 = vunpack.c.h.b16 %v1215
      %v1411 = vunpack.c.l.b16 %v1216
      %v1412 = vunpack.c.h.b16 %v1216
      %v1413 = vpack.c.b16 %v1383, %v1381
      %v1414 = vpack.c.b16 %v1384, %v1382
      %v1415 = vpack.c.b16 %v1387, %v1385
      %v1416 = vpack.c.b16 %v1388, %v1386
      %v1417 = vpack.c.b16 %v1391, %v1389
      %v1418 = vpack.c.b16 %v1392, %v1390
      %v1419 = vpack.c.b16 %v1395, %v1393
      %v1420 = vpack.c.b16 %v1396, %v1394
      %v1421 = vpack.c.b16 %v1399, %v1397
      %v1422 = vpack.c.b16 %v1400, %v1398
      %v1423 = vpack.c.b16 %v1403, %v1401
      %v1424 = vpack.c.b16 %v1404, %v1402
      %v1425 = vpack.c.b16 %v1407, %v1405
      %v1426 = vpack.c.b16 %v1408, %v1406
      %v1427 = vpack.c.b16 %v1411, %v1409
      %v1428 = vpack.c.b16 %v1412, %v1410
      %1445 = vmatprep.subr.bf16.mxu0 %v1414
      %1446 = vmatpush1.bf16.msra.mxu0 %v1413
      %1447 = vmatprep.subr.bf16.mxu0 %v1416
      %1448 = vmatpush1.bf16.msra.mxu0 %v1415
      %1449 = vmatprep.subr.bf16.mxu0 %v1418
      %1450 = vmatpush1.bf16.msra.mxu0 %v1417
      %1451 = vmatprep.subr.bf16.mxu0 %v1420
      %1452 = vmatpush1.bf16.msra.mxu0 %v1419
      %1453 = vmatprep.subr.bf16.mxu0 %v1422
      %1454 = vmatpush1.bf16.msra.mxu0 %v1421
      %1455 = vmatprep.subr.bf16.mxu0 %v1424
      %1456 = vmatpush1.bf16.msra.mxu0 %v1423
      %1457 = vmatprep.subr.bf16.mxu0 %v1426
      %1458 = vmatpush1.bf16.msra.mxu0 %v1425
      %1459 = vmatprep.subr.bf16.mxu0 %v1428
      %1460 = vmatpush1.bf16.msra.mxu0 %v1427
      %1461 = vmatprep.subr.bf16.mxu0 0
      %1462 = vmatpush1.bf16.msra.mxu0 0
      %1463 = vmatprep.subr.bf16.mxu0 0
      %1464 = vmatpush1.bf16.msra.mxu0 0
      %1465 = vmatprep.subr.bf16.mxu0 0
      %1466 = vmatpush1.bf16.msra.mxu0 0
      %1467 = vmatprep.subr.bf16.mxu0 0
      %1468 = vmatpush1.bf16.msra.mxu0 0
      %1469 = vmatprep.subr.bf16.mxu0 0
      %1470 = vmatpush1.bf16.msra.mxu0 0
      %1471 = vmatprep.subr.bf16.mxu0 0
      %1472 = vmatpush1.bf16.msra.mxu0 0
      %1473 = vmatprep.subr.bf16.mxu0 0
      %1474 = vmatpush1.bf16.msra.mxu0 0
      %1475 = vmatprep.subr.bf16.mxu0 0
      %1476 = vmatpush1.bf16.msra.mxu0 0
      %1477 = vmatprep.mubr.bf16.mxu0 0
      %1478 = vmatmul.mubr.bf16.gmra.mrb[0].mxu0 %v1200
      %v1479 = vpop.f32.mrb[0].mxu0
      %v1480 = vadd.f32 %v1359, %v1479
      %v1481 = vpop.f32.mrb[0].mxu0
      %v1482 = vadd.f32 %v1361, %v1481
      %v1483 = vpop.f32.mrb[0].mxu0
      %v1484 = vpop.f32.mrb[0].mxu0
      %1485 = vdwg.mxu0
      %v1486 = vld [vmem:[#allocation2] sm:$0x7c]
      %v1487 = vpack.c.bf16 %v1486, %v1486
      %s1488 = scalar_lea.vmem %s5, 256
      %v1489 = vld [vmem:[%s1488] sm:$0xff]
      %v1490 = vld [vmem:[%s1488 + $0x8] sm:$0xff]
      %v1491 = vld [vmem:[%s1488 + $0x10] sm:$0xff]
      %v1492 = vld [vmem:[%s1488 + $0x18] sm:$0xff]
      %v1493 = vld [vmem:[%s1488 + $0x20] sm:$0xff]
      %v1494 = vld [vmem:[%s1488 + $0x28] sm:$0xff]
      %v1495 = vld [vmem:[%s1488 + $0x30] sm:$0xff]
      %v1496 = vld [vmem:[%s1488 + $0x38] sm:$0xff]
      %v1497 = vld [vmem:[%s1488 + $0x40] sm:$0xff]
      %v1498 = vld [vmem:[%s1488 + $0x48] sm:$0xff]
      %v1499 = vld [vmem:[%s1488 + $0x50] sm:$0xff]
      %v1500 = vld [vmem:[%s1488 + $0x58] sm:$0xff]
      %v1501 = vld [vmem:[%s1488 + $0x60] sm:$0xff]
      %v1502 = vld [vmem:[%s1488 + $0x68] sm:$0xff]
      %v1503 = vld [vmem:[%s1488 + $0x70] sm:$0xff]
      %v1504 = vld [vmem:[%s1488 + $0x78] sm:$0xff]
      %v1506 = vrot.slane %v1487, 1
      %v1524 = vunpack.c.l.b16 %v1489
      %v1525 = vunpack.c.h.b16 %v1489
      %v1526 = vunpack.c.l.b16 %v1490
      %v1527 = vunpack.c.h.b16 %v1490
      %v1528 = vunpack.c.l.b16 %v1491
      %v1529 = vunpack.c.h.b16 %v1491
      %v1530 = vunpack.c.l.b16 %v1492
      %v1531 = vunpack.c.h.b16 %v1492
      %v1532 = vunpack.c.l.b16 %v1493
      %v1533 = vunpack.c.h.b16 %v1493
      %v1534 = vunpack.c.l.b16 %v1494
      %v1535 = vunpack.c.h.b16 %v1494
      %v1536 = vunpack.c.l.b16 %v1495
      %v1537 = vunpack.c.h.b16 %v1495
      %v1538 = vunpack.c.l.b16 %v1496
      %v1539 = vunpack.c.h.b16 %v1496
      %v1540 = vunpack.c.l.b16 %v1497
      %v1541 = vunpack.c.h.b16 %v1497
      %v1542 = vunpack.c.l.b16 %v1498
      %v1543 = vunpack.c.h.b16 %v1498
      %v1544 = vunpack.c.l.b16 %v1499
      %v1545 = vunpack.c.h.b16 %v1499
      %v1546 = vunpack.c.l.b16 %v1500
      %v1547 = vunpack.c.h.b16 %v1500
      %v1548 = vunpack.c.l.b16 %v1501
      %v1549 = vunpack.c.h.b16 %v1501
      %v1550 = vunpack.c.l.b16 %v1502
      %v1551 = vunpack.c.h.b16 %v1502
      %v1552 = vunpack.c.l.b16 %v1503
      %v1553 = vunpack.c.h.b16 %v1503
      %v1554 = vunpack.c.l.b16 %v1504
      %v1555 = vunpack.c.h.b16 %v1504
      %v1556 = vpack.c.b16 %v1526, %v1524
      %v1557 = vpack.c.b16 %v1527, %v1525
      %v1558 = vpack.c.b16 %v1530, %v1528
      %v1559 = vpack.c.b16 %v1531, %v1529
      %v1560 = vpack.c.b16 %v1534, %v1532
      %v1561 = vpack.c.b16 %v1535, %v1533
      %v1562 = vpack.c.b16 %v1538, %v1536
      %v1563 = vpack.c.b16 %v1539, %v1537
      %v1564 = vpack.c.b16 %v1542, %v1540
      %v1565 = vpack.c.b16 %v1543, %v1541
      %v1566 = vpack.c.b16 %v1546, %v1544
      %v1567 = vpack.c.b16 %v1547, %v1545
      %v1568 = vpack.c.b16 %v1550, %v1548
      %v1569 = vpack.c.b16 %v1551, %v1549
      %v1570 = vpack.c.b16 %v1554, %v1552
      %v1571 = vpack.c.b16 %v1555, %v1553
      %1588 = vmatprep.subr.bf16.mxu0 %v1557
      %1589 = vmatpush1.bf16.msra.mxu0 %v1556
      %1590 = vmatprep.subr.bf16.mxu0 %v1559
      %1591 = vmatpush1.bf16.msra.mxu0 %v1558
      %1592 = vmatprep.subr.bf16.mxu0 %v1561
      %1593 = vmatpush1.bf16.msra.mxu0 %v1560
      %1594 = vmatprep.subr.bf16.mxu0 %v1563
      %1595 = vmatpush1.bf16.msra.mxu0 %v1562
      %1596 = vmatprep.subr.bf16.mxu0 %v1565
      %1597 = vmatpush1.bf16.msra.mxu0 %v1564
      %1598 = vmatprep.subr.bf16.mxu0 %v1567
      %1599 = vmatpush1.bf16.msra.mxu0 %v1566
      %1600 = vmatprep.subr.bf16.mxu0 %v1569
      %1601 = vmatpush1.bf16.msra.mxu0 %v1568
      %1602 = vmatprep.subr.bf16.mxu0 %v1571
      %1603 = vmatpush1.bf16.msra.mxu0 %v1570
      %1604 = vmatprep.subr.bf16.mxu0 0
      %1605 = vmatpush1.bf16.msra.mxu0 0
      %1606 = vmatprep.subr.bf16.mxu0 0
      %1607 = vmatpush1.bf16.msra.mxu0 0
      %1608 = vmatprep.subr.bf16.mxu0 0
      %1609 = vmatpush1.bf16.msra.mxu0 0
      %1610 = vmatprep.subr.bf16.mxu0 0
      %1611 = vmatpush1.bf16.msra.mxu0 0
      %1612 = vmatprep.subr.bf16.mxu0 0
      %1613 = vmatpush1.bf16.msra.mxu0 0
      %1614 = vmatprep.subr.bf16.mxu0 0
      %1615 = vmatpush1.bf16.msra.mxu0 0
      %1616 = vmatprep.subr.bf16.mxu0 0
      %1617 = vmatpush1.bf16.msra.mxu0 0
      %1618 = vmatprep.subr.bf16.mxu0 0
      %1619 = vmatpush1.bf16.msra.mxu0 0
      %1620 = vmatprep.mubr.bf16.mxu0 0
      %1621 = vmatmul.mubr.bf16.gmra.mrb[0].mxu0 %v1506
      %v1622 = vpop.f32.mrb[0].mxu0
      %v1623 = vadd.f32 0.0, %v1622
      %v1624 = vpop.f32.mrb[0].mxu0
      %v1625 = vadd.f32 0.0, %v1624
      %v1626 = vpop.f32.mrb[0].mxu0
      %v1627 = vpop.f32.mrb[0].mxu0
      %1628 = vdwg.mxu0
      %v1629 = vadd.f32 %v1480, %v1623
      %v1630 = vadd.f32 %v1482, %v1625
      %v1631 = vld [vmem:[#allocation2] sm:$0xf8]
      %v1632 = vpack.c.bf16 %v1631, %v1631
      %s1633 = scalar_lea.vmem %s5, 384
      %v1634 = vld [vmem:[%s1633] sm:$0xff]
      %v1635 = vld [vmem:[%s1633 + $0x8] sm:$0xff]
      %v1636 = vld [vmem:[%s1633 + $0x10] sm:$0xff]
      %v1637 = vld [vmem:[%s1633 + $0x18] sm:$0xff]
      %v1638 = vld [vmem:[%s1633 + $0x20] sm:$0xff]
      %v1639 = vld [vmem:[%s1633 + $0x28] sm:$0xff]
      %v1640 = vld [vmem:[%s1633 + $0x30] sm:$0xff]
      %v1641 = vld [vmem:[%s1633 + $0x38] sm:$0xff]
      %v1642 = vld [vmem:[%s1633 + $0x40] sm:$0xff]
      %v1643 = vld [vmem:[%s1633 + $0x48] sm:$0xff]
      %v1644 = vld [vmem:[%s1633 + $0x50] sm:$0xff]
      %v1645 = vld [vmem:[%s1633 + $0x58] sm:$0xff]
      %v1646 = vld [vmem:[%s1633 + $0x60] sm:$0xff]
      %v1647 = vld [vmem:[%s1633 + $0x68] sm:$0xff]
      %v1648 = vld [vmem:[%s1633 + $0x70] sm:$0xff]
      %v1649 = vld [vmem:[%s1633 + $0x78] sm:$0xff]
      %v1651 = vshrl.u32 %v1632, 16
      %v1653 = vrot.slane %v1651, 1
      %v1654 = vshll.u32 %v1632, 16
      %v1656 = vrot.slane %v1654, 2
      %v1657 = vor.u32 %v1653, %v1656
      %v1675 = vunpack.c.l.b16 %v1634
      %v1676 = vunpack.c.h.b16 %v1634
      %v1677 = vunpack.c.l.b16 %v1635
      %v1678 = vunpack.c.h.b16 %v1635
      %v1679 = vunpack.c.l.b16 %v1636
      %v1680 = vunpack.c.h.b16 %v1636
      %v1681 = vunpack.c.l.b16 %v1637
      %v1682 = vunpack.c.h.b16 %v1637
      %v1683 = vunpack.c.l.b16 %v1638
      %v1684 = vunpack.c.h.b16 %v1638
      %v1685 = vunpack.c.l.b16 %v1639
      %v1686 = vunpack.c.h.b16 %v1639
      %v1687 = vunpack.c.l.b16 %v1640
      %v1688 = vunpack.c.h.b16 %v1640
      %v1689 = vunpack.c.l.b16 %v1641
      %v1690 = vunpack.c.h.b16 %v1641
      %v1691 = vunpack.c.l.b16 %v1642
      %v1692 = vunpack.c.h.b16 %v1642
      %v1693 = vunpack.c.l.b16 %v1643
      %v1694 = vunpack.c.h.b16 %v1643
      %v1695 = vunpack.c.l.b16 %v1644
      %v1696 = vunpack.c.h.b16 %v1644
      %v1697 = vunpack.c.l.b16 %v1645
      %v1698 = vunpack.c.h.b16 %v1645
      %v1699 = vunpack.c.l.b16 %v1646
      %v1700 = vunpack.c.h.b16 %v1646
      %v1701 = vunpack.c.l.b16 %v1647
      %v1702 = vunpack.c.h.b16 %v1647
      %v1703 = vunpack.c.l.b16 %v1648
      %v1704 = vunpack.c.h.b16 %v1648
      %v1705 = vunpack.c.l.b16 %v1649
      %v1706 = vunpack.c.h.b16 %v1649
      %v1707 = vpack.c.b16 %v1677, %v1675
      %v1708 = vpack.c.b16 %v1678, %v1676
      %v1709 = vpack.c.b16 %v1681, %v1679
      %v1710 = vpack.c.b16 %v1682, %v1680
      %v1711 = vpack.c.b16 %v1685, %v1683
      %v1712 = vpack.c.b16 %v1686, %v1684
      %v1713 = vpack.c.b16 %v1689, %v1687
      %v1714 = vpack.c.b16 %v1690, %v1688
      %v1715 = vpack.c.b16 %v1693, %v1691
      %v1716 = vpack.c.b16 %v1694, %v1692
      %v1717 = vpack.c.b16 %v1697, %v1695
      %v1718 = vpack.c.b16 %v1698, %v1696
      %v1719 = vpack.c.b16 %v1701, %v1699
      %v1720 = vpack.c.b16 %v1702, %v1700
      %v1721 = vpack.c.b16 %v1705, %v1703
      %v1722 = vpack.c.b16 %v1706, %v1704
      %1739 = vmatprep.subr.bf16.mxu0 %v1708
      %1740 = vmatpush1.bf16.msra.mxu0 %v1707
      %1741 = vmatprep.subr.bf16.mxu0 %v1710
      %1742 = vmatpush1.bf16.msra.mxu0 %v1709
      %1743 = vmatprep.subr.bf16.mxu0 %v1712
      %1744 = vmatpush1.bf16.msra.mxu0 %v1711
      %1745 = vmatprep.subr.bf16.mxu0 %v1714
      %1746 = vmatpush1.bf16.msra.mxu0 %v1713
      %1747 = vmatprep.subr.bf16.mxu0 %v1716
      %1748 = vmatpush1.bf16.msra.mxu0 %v1715
      %1749 = vmatprep.subr.bf16.mxu0 %v1718
      %1750 = vmatpush1.bf16.msra.mxu0 %v1717
      %1751 = vmatprep.subr.bf16.mxu0 %v1720
      %1752 = vmatpush1.bf16.msra.mxu0 %v1719
      %1753 = vmatprep.subr.bf16.mxu0 %v1722
      %1754 = vmatpush1.bf16.msra.mxu0 %v1721
      %1755 = vmatprep.subr.bf16.mxu0 0
      %1756 = vmatpush1.bf16.msra.mxu0 0
      %1757 = vmatprep.subr.bf16.mxu0 0
      %1758 = vmatpush1.bf16.msra.mxu0 0
      %1759 = vmatprep.subr.bf16.mxu0 0
      %1760 = vmatpush1.bf16.msra.mxu0 0
      %1761 = vmatprep.subr.bf16.mxu0 0
      %1762 = vmatpush1.bf16.msra.mxu0 0
      %1763 = vmatprep.subr.bf16.mxu0 0
      %1764 = vmatpush1.bf16.msra.mxu0 0
      %1765 = vmatprep.subr.bf16.mxu0 0
      %1766 = vmatpush1.bf16.msra.mxu0 0
      %1767 = vmatprep.subr.bf16.mxu0 0
      %1768 = vmatpush1.bf16.msra.mxu0 0
      %1769 = vmatprep.subr.bf16.mxu0 0
      %1770 = vmatpush1.bf16.msra.mxu0 0
      %1771 = vmatprep.mubr.bf16.mxu0 0
      %1772 = vmatmul.mubr.bf16.gmra.mrb[0].mxu0 %v1657
      %v1773 = vpop.f32.mrb[0].mxu0
      %v1774 = vadd.f32 0.0, %v1773
      %v1775 = vpop.f32.mrb[0].mxu0
      %v1776 = vadd.f32 0.0, %v1775
      %v1777 = vpop.f32.mrb[0].mxu0
      %v1778 = vpop.f32.mrb[0].mxu0
      %1779 = vdwg.mxu0
      %v1780 = vadd.f32 %v1629, %v1774
      %v1781 = vadd.f32 %v1630, %v1776
      %v1782 = vld [vmem:[#allocation2] sm:$0xf0]
      %v1783 = vld [vmem:[#allocation2 + $0x10] sm:$0x1]
      %v1784 = vpack.c.bf16 %v1783, %v1782
      %s1785 = scalar_lea.vmem %s5, 512
      %v1786 = vld [vmem:[%s1785] sm:$0xff]
      %v1787 = vld [vmem:[%s1785 + $0x8] sm:$0xff]
      %v1788 = vld [vmem:[%s1785 + $0x10] sm:$0xff]
      %v1789 = vld [vmem:[%s1785 + $0x18] sm:$0xff]
      %v1790 = vld [vmem:[%s1785 + $0x20] sm:$0xff]
      %v1791 = vld [vmem:[%s1785 + $0x28] sm:$0xff]
      %v1792 = vld [vmem:[%s1785 + $0x30] sm:$0xff]
      %v1793 = vld [vmem:[%s1785 + $0x38] sm:$0xff]
      %v1794 = vld [vmem:[%s1785 + $0x40] sm:$0xff]
      %v1795 = vld [vmem:[%s1785 + $0x48] sm:$0xff]
      %v1796 = vld [vmem:[%s1785 + $0x50] sm:$0xff]
      %v1797 = vld [vmem:[%s1785 + $0x58] sm:$0xff]
      %v1798 = vld [vmem:[%s1785 + $0x60] sm:$0xff]
      %v1799 = vld [vmem:[%s1785 + $0x68] sm:$0xff]
      %v1800 = vld [vmem:[%s1785 + $0x70] sm:$0xff]
      %v1801 = vld [vmem:[%s1785 + $0x78] sm:$0xff]
      %v1803 = vrot.slane %v1784, 2
      %v1821 = vunpack.c.l.b16 %v1786
      %v1822 = vunpack.c.h.b16 %v1786
      %v1823 = vunpack.c.l.b16 %v1787
      %v1824 = vunpack.c.h.b16 %v1787
      %v1825 = vunpack.c.l.b16 %v1788
      %v1826 = vunpack.c.h.b16 %v1788
      %v1827 = vunpack.c.l.b16 %v1789
      %v1828 = vunpack.c.h.b16 %v1789
      %v1829 = vunpack.c.l.b16 %v1790
      %v1830 = vunpack.c.h.b16 %v1790
      %v1831 = vunpack.c.l.b16 %v1791
      %v1832 = vunpack.c.h.b16 %v1791
      %v1833 = vunpack.c.l.b16 %v1792
      %v1834 = vunpack.c.h.b16 %v1792
      %v1835 = vunpack.c.l.b16 %v1793
      %v1836 = vunpack.c.h.b16 %v1793
      %v1837 = vunpack.c.l.b16 %v1794
      %v1838 = vunpack.c.h.b16 %v1794
      %v1839 = vunpack.c.l.b16 %v1795
      %v1840 = vunpack.c.h.b16 %v1795
      %v1841 = vunpack.c.l.b16 %v1796
      %v1842 = vunpack.c.h.b16 %v1796
      %v1843 = vunpack.c.l.b16 %v1797
      %v1844 = vunpack.c.h.b16 %v1797
      %v1845 = vunpack.c.l.b16 %v1798
      %v1846 = vunpack.c.h.b16 %v1798
      %v1847 = vunpack.c.l.b16 %v1799
      %v1848 = vunpack.c.h.b16 %v1799
      %v1849 = vunpack.c.l.b16 %v1800
      %v1850 = vunpack.c.h.b16 %v1800
      %v1851 = vunpack.c.l.b16 %v1801
      %v1852 = vunpack.c.h.b16 %v1801
      %v1853 = vpack.c.b16 %v1823, %v1821
      %v1854 = vpack.c.b16 %v1824, %v1822
      %v1855 = vpack.c.b16 %v1827, %v1825
      %v1856 = vpack.c.b16 %v1828, %v1826
      %v1857 = vpack.c.b16 %v1831, %v1829
      %v1858 = vpack.c.b16 %v1832, %v1830
      %v1859 = vpack.c.b16 %v1835, %v1833
      %v1860 = vpack.c.b16 %v1836, %v1834
      %v1861 = vpack.c.b16 %v1839, %v1837
      %v1862 = vpack.c.b16 %v1840, %v1838
      %v1863 = vpack.c.b16 %v1843, %v1841
      %v1864 = vpack.c.b16 %v1844, %v1842
      %v1865 = vpack.c.b16 %v1847, %v1845
      %v1866 = vpack.c.b16 %v1848, %v1846
      %v1867 = vpack.c.b16 %v1851, %v1849
      %v1868 = vpack.c.b16 %v1852, %v1850
      %1885 = vmatprep.subr.bf16.mxu0 %v1854
      %1886 = vmatpush1.bf16.msra.mxu0 %v1853
      %1887 = vmatprep.subr.bf16.mxu0 %v1856
      %1888 = vmatpush1.bf16.msra.mxu0 %v1855
      %1889 = vmatprep.subr.bf16.mxu0 %v1858
      %1890 = vmatpush1.bf16.msra.mxu0 %v1857
      %1891 = vmatprep.subr.bf16.mxu0 %v1860
      %1892 = vmatpush1.bf16.msra.mxu0 %v1859
      %1893 = vmatprep.subr.bf16.mxu0 %v1862
      %1894 = vmatpush1.bf16.msra.mxu0 %v1861
      %1895 = vmatprep.subr.bf16.mxu0 %v1864
      %1896 = vmatpush1.bf16.msra.mxu0 %v1863
      %1897 = vmatprep.subr.bf16.mxu0 %v1866
      %1898 = vmatpush1.bf16.msra.mxu0 %v1865
      %1899 = vmatprep.subr.bf16.mxu0 %v1868
      %1900 = vmatpush1.bf16.msra.mxu0 %v1867
      %1901 = vmatprep.subr.bf16.mxu0 0
      %1902 = vmatpush1.bf16.msra.mxu0 0
      %1903 = vmatprep.subr.bf16.mxu0 0
      %1904 = vmatpush1.bf16.msra.mxu0 0
      %1905 = vmatprep.subr.bf16.mxu0 0
      %1906 = vmatpush1.bf16.msra.mxu0 0
      %1907 = vmatprep.subr.bf16.mxu0 0
      %1908 = vmatpush1.bf16.msra.mxu0 0
      %1909 = vmatprep.subr.bf16.mxu0 0
      %1910 = vmatpush1.bf16.msra.mxu0 0
      %1911 = vmatprep.subr.bf16.mxu0 0
      %1912 = vmatpush1.bf16.msra.mxu0 0
      %1913 = vmatprep.subr.bf16.mxu0 0
      %1914 = vmatpush1.bf16.msra.mxu0 0
      %1915 = vmatprep.subr.bf16.mxu0 0
      %1916 = vmatpush1.bf16.msra.mxu0 0
      %1917 = vmatprep.mubr.bf16.mxu0 0
      %1918 = vmatmul.mubr.bf16.gmra.mrb[0].mxu0 %v1803
      %v1919 = vpop.f32.mrb[0].mxu0
      %v1920 = vadd.f32 0.0, %v1919
      %v1921 = vpop.f32.mrb[0].mxu0
      %v1922 = vadd.f32 0.0, %v1921
      %v1923 = vpop.f32.mrb[0].mxu0
      %v1924 = vpop.f32.mrb[0].mxu0
      %1925 = vdwg.mxu0
      %v1926 = vadd.f32 %v1780, %v1920
      %v1927 = vadd.f32 %v1781, %v1922
      %v1928 = vld [vmem:[#allocation2] sm:$0xe0]
      %v1929 = vld [vmem:[#allocation2 + $0x10] sm:$0x3]
      %v1930 = vpack.c.bf16 %v1929, %v1928
      %s1931 = scalar_lea.vmem %s5, 640
      %v1932 = vld [vmem:[%s1931] sm:$0xff]
      %v1933 = vld [vmem:[%s1931 + $0x8] sm:$0xff]
      %v1934 = vld [vmem:[%s1931 + $0x10] sm:$0xff]
      %v1935 = vld [vmem:[%s1931 + $0x18] sm:$0xff]
      %v1936 = vld [vmem:[%s1931 + $0x20] sm:$0xff]
      %v1937 = vld [vmem:[%s1931 + $0x28] sm:$0xff]
      %v1938 = vld [vmem:[%s1931 + $0x30] sm:$0xff]
      %v1939 = vld [vmem:[%s1931 + $0x38] sm:$0xff]
      %v1940 = vld [vmem:[%s1931 + $0x40] sm:$0xff]
      %v1941 = vld [vmem:[%s1931 + $0x48] sm:$0xff]
      %v1942 = vld [vmem:[%s1931 + $0x50] sm:$0xff]
      %v1943 = vld [vmem:[%s1931 + $0x58] sm:$0xff]
      %v1944 = vld [vmem:[%s1931 + $0x60] sm:$0xff]
      %v1945 = vld [vmem:[%s1931 + $0x68] sm:$0xff]
      %v1946 = vld [vmem:[%s1931 + $0x70] sm:$0xff]
      %v1947 = vld [vmem:[%s1931 + $0x78] sm:$0xff]
      %v1949 = vshrl.u32 %v1930, 16
      %v1951 = vrot.slane %v1949, 2
      %v1952 = vshll.u32 %v1930, 16
      %v1954 = vrot.slane %v1952, 3
      %v1955 = vor.u32 %v1951, %v1954
      %v1973 = vunpack.c.l.b16 %v1932
      %v1974 = vunpack.c.h.b16 %v1932
      %v1975 = vunpack.c.l.b16 %v1933
      %v1976 = vunpack.c.h.b16 %v1933
      %v1977 = vunpack.c.l.b16 %v1934
      %v1978 = vunpack.c.h.b16 %v1934
      %v1979 = vunpack.c.l.b16 %v1935
      %v1980 = vunpack.c.h.b16 %v1935
      %v1981 = vunpack.c.l.b16 %v1936
      %v1982 = vunpack.c.h.b16 %v1936
      %v1983 = vunpack.c.l.b16 %v1937
      %v1984 = vunpack.c.h.b16 %v1937
      %v1985 = vunpack.c.l.b16 %v1938
      %v1986 = vunpack.c.h.b16 %v1938
      %v1987 = vunpack.c.l.b16 %v1939
      %v1988 = vunpack.c.h.b16 %v1939
      %v1989 = vunpack.c.l.b16 %v1940
      %v1990 = vunpack.c.h.b16 %v1940
      %v1991 = vunpack.c.l.b16 %v1941
      %v1992 = vunpack.c.h.b16 %v1941
      %v1993 = vunpack.c.l.b16 %v1942
      %v1994 = vunpack.c.h.b16 %v1942
      %v1995 = vunpack.c.l.b16 %v1943
      %v1996 = vunpack.c.h.b16 %v1943
      %v1997 = vunpack.c.l.b16 %v1944
      %v1998 = vunpack.c.h.b16 %v1944
      %v1999 = vunpack.c.l.b16 %v1945
      %v2000 = vunpack.c.h.b16 %v1945
      %v2001 = vunpack.c.l.b16 %v1946
      %v2002 = vunpack.c.h.b16 %v1946
      %v2003 = vunpack.c.l.b16 %v1947
      %v2004 = vunpack.c.h.b16 %v1947
      %v2005 = vpack.c.b16 %v1975, %v1973
      %v2006 = vpack.c.b16 %v1976, %v1974
      %v2007 = vpack.c.b16 %v1979, %v1977
      %v2008 = vpack.c.b16 %v1980, %v1978
      %v2009 = vpack.c.b16 %v1983, %v1981
      %v2010 = vpack.c.b16 %v1984, %v1982
      %v2011 = vpack.c.b16 %v1987, %v1985
      %v2012 = vpack.c.b16 %v1988, %v1986
      %v2013 = vpack.c.b16 %v1991, %v1989
      %v2014 = vpack.c.b16 %v1992, %v1990
      %v2015 = vpack.c.b16 %v1995, %v1993
      %v2016 = vpack.c.b16 %v1996, %v1994
      %v2017 = vpack.c.b16 %v1999, %v1997
      %v2018 = vpack.c.b16 %v2000, %v1998
      %v2019 = vpack.c.b16 %v2003, %v2001
      %v2020 = vpack.c.b16 %v2004, %v2002
      %2037 = vmatprep.subr.bf16.mxu0 %v2006
      %2038 = vmatpush1.bf16.msra.mxu0 %v2005
      %2039 = vmatprep.subr.bf16.mxu0 %v2008
      %2040 = vmatpush1.bf16.msra.mxu0 %v2007
      %2041 = vmatprep.subr.bf16.mxu0 %v2010
      %2042 = vmatpush1.bf16.msra.mxu0 %v2009
      %2043 = vmatprep.subr.bf16.mxu0 %v2012
      %2044 = vmatpush1.bf16.msra.mxu0 %v2011
      %2045 = vmatprep.subr.bf16.mxu0 %v2014
      %2046 = vmatpush1.bf16.msra.mxu0 %v2013
      %2047 = vmatprep.subr.bf16.mxu0 %v2016
      %2048 = vmatpush1.bf16.msra.mxu0 %v2015
      %2049 = vmatprep.subr.bf16.mxu0 %v2018
      %2050 = vmatpush1.bf16.msra.mxu0 %v2017
      %2051 = vmatprep.subr.bf16.mxu0 %v2020
      %2052 = vmatpush1.bf16.msra.mxu0 %v2019
      %2053 = vmatprep.subr.bf16.mxu0 0
      %2054 = vmatpush1.bf16.msra.mxu0 0
      %2055 = vmatprep.subr.bf16.mxu0 0
      %2056 = vmatpush1.bf16.msra.mxu0 0
      %2057 = vmatprep.subr.bf16.mxu0 0
      %2058 = vmatpush1.bf16.msra.mxu0 0
      %2059 = vmatprep.subr.bf16.mxu0 0
      %2060 = vmatpush1.bf16.msra.mxu0 0
      %2061 = vmatprep.subr.bf16.mxu0 0
      %2062 = vmatpush1.bf16.msra.mxu0 0
      %2063 = vmatprep.subr.bf16.mxu0 0
      %2064 = vmatpush1.bf16.msra.mxu0 0
      %2065 = vmatprep.subr.bf16.mxu0 0
      %2066 = vmatpush1.bf16.msra.mxu0 0
      %2067 = vmatprep.subr.bf16.mxu0 0
      %2068 = vmatpush1.bf16.msra.mxu0 0
      %2069 = vmatprep.mubr.bf16.mxu0 0
      %2070 = vmatmul.mubr.bf16.gmra.mrb[0].mxu0 %v1955
      %v2071 = vpop.f32.mrb[0].mxu0
      %v2072 = vadd.f32 0.0, %v2071
      %v2073 = vpop.f32.mrb[0].mxu0
      %v2074 = vadd.f32 0.0, %v2073
      %v2075 = vpop.f32.mrb[0].mxu0
      %v2076 = vpop.f32.mrb[0].mxu0
      %2077 = vdwg.mxu0
      %v2078 = vadd.f32 %v1926, %v2072
      %v2079 = vadd.f32 %v1927, %v2074
      %v2080 = vld [vmem:[#allocation2] sm:$0xc0]
      %v2081 = vld [vmem:[#allocation2 + $0x10] sm:$0x7]
      %v2082 = vpack.c.bf16 %v2081, %v2080
      %s2083 = scalar_lea.vmem %s5, 768
      %v2084 = vld [vmem:[%s2083] sm:$0xff]
      %v2085 = vld [vmem:[%s2083 + $0x8] sm:$0xff]
      %v2086 = vld [vmem:[%s2083 + $0x10] sm:$0xff]
      %v2087 = vld [vmem:[%s2083 + $0x18] sm:$0xff]
      %v2088 = vld [vmem:[%s2083 + $0x20] sm:$0xff]
      %v2089 = vld [vmem:[%s2083 + $0x28] sm:$0xff]
      %v2090 = vld [vmem:[%s2083 + $0x30] sm:$0xff]
      %v2091 = vld [vmem:[%s2083 + $0x38] sm:$0xff]
      %v2092 = vld [vmem:[%s2083 + $0x40] sm:$0xff]
      %v2093 = vld [vmem:[%s2083 + $0x48] sm:$0xff]
      %v2094 = vld [vmem:[%s2083 + $0x50] sm:$0xff]
      %v2095 = vld [vmem:[%s2083 + $0x58] sm:$0xff]
      %v2096 = vld [vmem:[%s2083 + $0x60] sm:$0xff]
      %v2097 = vld [vmem:[%s2083 + $0x68] sm:$0xff]
      %v2098 = vld [vmem:[%s2083 + $0x70] sm:$0xff]
      %v2099 = vld [vmem:[%s2083 + $0x78] sm:$0xff]
      %v2101 = vrot.slane %v2082, 3
      %v2119 = vunpack.c.l.b16 %v2084
      %v2120 = vunpack.c.h.b16 %v2084
      %v2121 = vunpack.c.l.b16 %v2085
      %v2122 = vunpack.c.h.b16 %v2085
      %v2123 = vunpack.c.l.b16 %v2086
      %v2124 = vunpack.c.h.b16 %v2086
      %v2125 = vunpack.c.l.b16 %v2087
      %v2126 = vunpack.c.h.b16 %v2087
      %v2127 = vunpack.c.l.b16 %v2088
      %v2128 = vunpack.c.h.b16 %v2088
      %v2129 = vunpack.c.l.b16 %v2089
      %v2130 = vunpack.c.h.b16 %v2089
      %v2131 = vunpack.c.l.b16 %v2090
      %v2132 = vunpack.c.h.b16 %v2090
      %v2133 = vunpack.c.l.b16 %v2091
      %v2134 = vunpack.c.h.b16 %v2091
      %v2135 = vunpack.c.l.b16 %v2092
      %v2136 = vunpack.c.h.b16 %v2092
      %v2137 = vunpack.c.l.b16 %v2093
      %v2138 = vunpack.c.h.b16 %v2093
      %v2139 = vunpack.c.l.b16 %v2094
      %v2140 = vunpack.c.h.b16 %v2094
      %v2141 = vunpack.c.l.b16 %v2095
      %v2142 = vunpack.c.h.b16 %v2095
      %v2143 = vunpack.c.l.b16 %v2096
      %v2144 = vunpack.c.h.b16 %v2096
      %v2145 = vunpack.c.l.b16 %v2097
      %v2146 = vunpack.c.h.b16 %v2097
      %v2147 = vunpack.c.l.b16 %v2098
      %v2148 = vunpack.c.h.b16 %v2098
      %v2149 = vunpack.c.l.b16 %v2099
      %v2150 = vunpack.c.h.b16 %v2099
      %v2151 = vpack.c.b16 %v2121, %v2119
      %v2152 = vpack.c.b16 %v2122, %v2120
      %v2153 = vpack.c.b16 %v2125, %v2123
      %v2154 = vpack.c.b16 %v2126, %v2124
      %v2155 = vpack.c.b16 %v2129, %v2127
      %v2156 = vpack.c.b16 %v2130, %v2128
      %v2157 = vpack.c.b16 %v2133, %v2131
      %v2158 = vpack.c.b16 %v2134, %v2132
      %v2159 = vpack.c.b16 %v2137, %v2135
      %v2160 = vpack.c.b16 %v2138, %v2136
      %v2161 = vpack.c.b16 %v2141, %v2139
      %v2162 = vpack.c.b16 %v2142, %v2140
      %v2163 = vpack.c.b16 %v2145, %v2143
      %v2164 = vpack.c.b16 %v2146, %v2144
      %v2165 = vpack.c.b16 %v2149, %v2147
      %v2166 = vpack.c.b16 %v2150, %v2148
      %2183 = vmatprep.subr.bf16.mxu0 %v2152
      %2184 = vmatpush1.bf16.msra.mxu0 %v2151
      %2185 = vmatprep.subr.bf16.mxu0 %v2154
      %2186 = vmatpush1.bf16.msra.mxu0 %v2153
      %2187 = vmatprep.subr.bf16.mxu0 %v2156
      %2188 = vmatpush1.bf16.msra.mxu0 %v2155
      %2189 = vmatprep.subr.bf16.mxu0 %v2158
      %2190 = vmatpush1.bf16.msra.mxu0 %v2157
      %2191 = vmatprep.subr.bf16.mxu0 %v2160
      %2192 = vmatpush1.bf16.msra.mxu0 %v2159
      %2193 = vmatprep.subr.bf16.mxu0 %v2162
      %2194 = vmatpush1.bf16.msra.mxu0 %v2161
      %2195 = vmatprep.subr.bf16.mxu0 %v2164
      %2196 = vmatpush1.bf16.msra.mxu0 %v2163
      %2197 = vmatprep.subr.bf16.mxu0 %v2166
      %2198 = vmatpush1.bf16.msra.mxu0 %v2165
      %2199 = vmatprep.subr.bf16.mxu0 0
      %2200 = vmatpush1.bf16.msra.mxu0 0
      %2201 = vmatprep.subr.bf16.mxu0 0
      %2202 = vmatpush1.bf16.msra.mxu0 0
      %2203 = vmatprep.subr.bf16.mxu0 0
      %2204 = vmatpush1.bf16.msra.mxu0 0
      %2205 = vmatprep.subr.bf16.mxu0 0
      %2206 = vmatpush1.bf16.msra.mxu0 0
      %2207 = vmatprep.subr.bf16.mxu0 0
      %2208 = vmatpush1.bf16.msra.mxu0 0
      %2209 = vmatprep.subr.bf16.mxu0 0
      %2210 = vmatpush1.bf16.msra.mxu0 0
      %2211 = vmatprep.subr.bf16.mxu0 0
      %2212 = vmatpush1.bf16.msra.mxu0 0
      %2213 = vmatprep.subr.bf16.mxu0 0
      %2214 = vmatpush1.bf16.msra.mxu0 0
      %2215 = vmatprep.mubr.bf16.mxu0 0
      %2216 = vmatmul.mubr.bf16.gmra.mrb[0].mxu0 %v2101
      %v2217 = vpop.f32.mrb[0].mxu0
      %v2218 = vadd.f32 0.0, %v2217
      %v2219 = vpop.f32.mrb[0].mxu0
      %v2220 = vadd.f32 0.0, %v2219
      %v2221 = vpop.f32.mrb[0].mxu0
      %v2222 = vpop.f32.mrb[0].mxu0
      %2223 = vdwg.mxu0
      %v2224 = vadd.f32 %v2078, %v2218
      %v2225 = vadd.f32 %v2079, %v2220
      %v2226 = vld [vmem:[%s6] sm:$0x3]
      %v2228 = vlaneseq
      %v2229 = vshrl.u32 %v2228, 7
      %v2230 = vsub.s32 0, %v2229
      %v2231 = vrot.slane %v2226, %v2230
      %v2232 = vlaneseq
      %v2233 = vshrl.u32 %v2232, 7
      %v2234 = vsub.s32 1, %v2233
      %v2235 = vrot.slane %v2226, %v2234
      %v2238 = vadd.f32 %v2224, %v2231
      %v2239 = vadd.f32 %v2225, %v2235
      %v2240 = vmax.f32 %v2238, 0.0
      %v2241 = vmax.f32 %v2239, 0.0
      %v2244 = vrot.slane %v2240, 5
      %v2245 = vrot.slane %v2241, 5
      %2248 = vst [vmem:[#allocation2] sm:$0xf8] %v2244
      %2249 = vst [vmem:[#allocation2 + $0x8] sm:$0xf8] %v2245
      %v2250 = vld [vmem:[%s8] sm:$0x1]
      %s2251 = scalar_lea.vmem [#allocation2], 3
      %v2252 = vld [vmem:[%s2251] ss:$8 sm:$0x3]
      %v2254 = vlaneseq
      %v2255 = vshrl.u32 %v2254, 7
      %v2256 = vsub.s32 0, %v2255
      %v2257 = vrot.slane %v2252, %v2256
      %v2258 = vlaneseq
      %v2259 = vshrl.u32 %v2258, 7
      %v2260 = vsub.s32 1, %v2259
      %v2261 = vrot.slane %v2252, %v2260
      %v2264 = vpack.c.bf16 %v2257, %v2257
      %v2265 = vpack.c.bf16 %v2261, %v2261
      %v2266 = vld [vmem:[%s7] sm:$0xf]
      %v2267 = vld [vmem:[%s7 + $0x4] sm:$0xf]
      %v2268 = vld [vmem:[%s7 + $0x8] sm:$0xf]
      %v2269 = vld [vmem:[%s7 + $0xc] sm:$0xf]
      %v2270 = vld [vmem:[%s7 + $0x10] sm:$0xf]
      %v2271 = vld [vmem:[%s7 + $0x14] sm:$0xf]
      %v2272 = vld [vmem:[%s7 + $0x18] sm:$0xf]
      %v2273 = vld [vmem:[%s7 + $0x1c] sm:$0xf]
      %v2274 = vld [vmem:[%s7 + $0x20] sm:$0xf]
      %v2275 = vld [vmem:[%s7 + $0x24] sm:$0xf]
      %v2276 = vld [vmem:[%s7 + $0x28] sm:$0xf]
      %v2277 = vld [vmem:[%s7 + $0x2c] sm:$0xf]
      %v2278 = vld [vmem:[%s7 + $0x30] sm:$0xf]
      %v2279 = vld [vmem:[%s7 + $0x34] sm:$0xf]
      %v2280 = vld [vmem:[%s7 + $0x38] sm:$0xf]
      %v2281 = vld [vmem:[%s7 + $0x3c] sm:$0xf]
      %v2282 = vld [vmem:[%s7 + $0x40] sm:$0xf]
      %v2283 = vld [vmem:[%s7 + $0x44] sm:$0xf]
      %v2284 = vld [vmem:[%s7 + $0x48] sm:$0xf]
      %v2285 = vld [vmem:[%s7 + $0x4c] sm:$0xf]
      %v2286 = vld [vmem:[%s7 + $0x50] sm:$0xf]
      %v2287 = vld [vmem:[%s7 + $0x54] sm:$0xf]
      %v2288 = vld [vmem:[%s7 + $0x58] sm:$0xf]
      %v2289 = vld [vmem:[%s7 + $0x5c] sm:$0xf]
      %v2290 = vld [vmem:[%s7 + $0x60] sm:$0xf]
      %v2291 = vld [vmem:[%s7 + $0x64] sm:$0xf]
      %v2292 = vld [vmem:[%s7 + $0x68] sm:$0xf]
      %v2293 = vld [vmem:[%s7 + $0x6c] sm:$0xf]
      %v2294 = vld [vmem:[%s7 + $0x70] sm:$0xf]
      %v2295 = vld [vmem:[%s7 + $0x74] sm:$0xf]
      %v2296 = vld [vmem:[%s7 + $0x78] sm:$0xf]
      %v2297 = vld [vmem:[%s7 + $0x7c] sm:$0xf]
      %v2330 = vunpack.c.l.b16 %v2266
      %v2331 = vunpack.c.l.b16 %v2267
      %v2332 = vunpack.c.l.b16 %v2268
      %v2333 = vunpack.c.l.b16 %v2269
      %v2334 = vunpack.c.l.b16 %v2270
      %v2335 = vunpack.c.l.b16 %v2271
      %v2336 = vunpack.c.l.b16 %v2272
      %v2337 = vunpack.c.l.b16 %v2273
      %v2338 = vunpack.c.l.b16 %v2274
      %v2339 = vunpack.c.l.b16 %v2275
      %v2340 = vunpack.c.l.b16 %v2276
      %v2341 = vunpack.c.l.b16 %v2277
      %v2342 = vunpack.c.l.b16 %v2278
      %v2343 = vunpack.c.l.b16 %v2279
      %v2344 = vunpack.c.l.b16 %v2280
      %v2345 = vunpack.c.l.b16 %v2281
      %v2346 = vunpack.c.l.b16 %v2282
      %v2347 = vunpack.c.l.b16 %v2283
      %v2348 = vunpack.c.l.b16 %v2284
      %v2349 = vunpack.c.l.b16 %v2285
      %v2350 = vunpack.c.l.b16 %v2286
      %v2351 = vunpack.c.l.b16 %v2287
      %v2352 = vunpack.c.l.b16 %v2288
      %v2353 = vunpack.c.l.b16 %v2289
      %v2354 = vunpack.c.l.b16 %v2290
      %v2355 = vunpack.c.l.b16 %v2291
      %v2356 = vunpack.c.l.b16 %v2292
      %v2357 = vunpack.c.l.b16 %v2293
      %v2358 = vunpack.c.l.b16 %v2294
      %v2359 = vunpack.c.l.b16 %v2295
      %v2360 = vunpack.c.l.b16 %v2296
      %v2361 = vunpack.c.l.b16 %v2297
      %v2362 = vpack.c.b16 %v2331, %v2330
      %v2363 = vpack.c.b16 %v2333, %v2332
      %v2364 = vpack.c.b16 %v2335, %v2334
      %v2365 = vpack.c.b16 %v2337, %v2336
      %v2366 = vpack.c.b16 %v2339, %v2338
      %v2367 = vpack.c.b16 %v2341, %v2340
      %v2368 = vpack.c.b16 %v2343, %v2342
      %v2369 = vpack.c.b16 %v2345, %v2344
      %v2370 = vpack.c.b16 %v2347, %v2346
      %v2371 = vpack.c.b16 %v2349, %v2348
      %v2372 = vpack.c.b16 %v2351, %v2350
      %v2373 = vpack.c.b16 %v2353, %v2352
      %v2374 = vpack.c.b16 %v2355, %v2354
      %v2375 = vpack.c.b16 %v2357, %v2356
      %v2376 = vpack.c.b16 %v2359, %v2358
      %v2377 = vpack.c.b16 %v2361, %v2360
      %2394 = vmatprep.subr.bf16.mxu0 0
      %2395 = vmatpush1.bf16.msra.mxu0 %v2362
      %2396 = vmatprep.subr.bf16.mxu0 0
      %2397 = vmatpush1.bf16.msra.mxu0 %v2363
      %2398 = vmatprep.subr.bf16.mxu0 0
      %2399 = vmatpush1.bf16.msra.mxu0 %v2364
      %2400 = vmatprep.subr.bf16.mxu0 0
      %2401 = vmatpush1.bf16.msra.mxu0 %v2365
      %2402 = vmatprep.subr.bf16.mxu0 0
      %2403 = vmatpush1.bf16.msra.mxu0 %v2366
      %2404 = vmatprep.subr.bf16.mxu0 0
      %2405 = vmatpush1.bf16.msra.mxu0 %v2367
      %2406 = vmatprep.subr.bf16.mxu0 0
      %2407 = vmatpush1.bf16.msra.mxu0 %v2368
      %2408 = vmatprep.subr.bf16.mxu0 0
      %2409 = vmatpush1.bf16.msra.mxu0 %v2369
      %2410 = vmatprep.subr.bf16.mxu0 0
      %2411 = vmatpush1.bf16.msra.mxu0 %v2370
      %2412 = vmatprep.subr.bf16.mxu0 0
      %2413 = vmatpush1.bf16.msra.mxu0 %v2371
      %2414 = vmatprep.subr.bf16.mxu0 0
      %2415 = vmatpush1.bf16.msra.mxu0 %v2372
      %2416 = vmatprep.subr.bf16.mxu0 0
      %2417 = vmatpush1.bf16.msra.mxu0 %v2373
      %2418 = vmatprep.subr.bf16.mxu0 0
      %2419 = vmatpush1.bf16.msra.mxu0 %v2374
      %2420 = vmatprep.subr.bf16.mxu0 0
      %2421 = vmatpush1.bf16.msra.mxu0 %v2375
      %2422 = vmatprep.subr.bf16.mxu0 0
      %2423 = vmatpush1.bf16.msra.mxu0 %v2376
      %2424 = vmatprep.subr.bf16.mxu0 0
      %2425 = vmatpush1.bf16.msra.mxu0 %v2377
      %2426 = vmatprep.mubr.bf16.mxu0 %v2265
      %2427 = vmatmul.mubr.bf16.gmra.mrb[0].mxu0 %v2264
      %v2428 = vpop.f32.mrb[0].mxu0
      %v2429 = vadd.f32 0.0, %v2428
      %v2430 = vpop.f32.mrb[0].mxu0
      %v2431 = vpop.f32.mrb[0].mxu0
      %v2432 = vpop.f32.mrb[0].mxu0
      %2433 = vdwg.mxu0
      %v2434 = vadd.f32 %v2250, %v2429
      %s2435 = scalar_lea.vmem [#allocation2], 4
      %v2436 = vld [vmem:[%s2435] ss:$8 sm:$0x3]
      %v2438 = vlaneseq
      %v2439 = vshrl.u32 %v2438, 7
      %v2440 = vsub.s32 0, %v2439
      %v2441 = vrot.slane %v2436, %v2440
      %v2442 = vlaneseq
      %v2443 = vshrl.u32 %v2442, 7
      %v2444 = vsub.s32 1, %v2443
      %v2445 = vrot.slane %v2436, %v2444
      %v2448 = vpack.c.bf16 %v2441, %v2441
      %v2449 = vpack.c.bf16 %v2445, %v2445
      %s2450 = scalar_lea.vmem %s7, 128
      %v2451 = vld [vmem:[%s2450] sm:$0xf]
      %v2452 = vld [vmem:[%s2450 + $0x4] sm:$0xf]
      %v2453 = vld [vmem:[%s2450 + $0x8] sm:$0xf]
      %v2454 = vld [vmem:[%s2450 + $0xc] sm:$0xf]
      %v2455 = vld [vmem:[%s2450 + $0x10] sm:$0xf]
      %v2456 = vld [vmem:[%s2450 + $0x14] sm:$0xf]
      %v2457 = vld [vmem:[%s2450 + $0x18] sm:$0xf]
      %v2458 = vld [vmem:[%s2450 + $0x1c] sm:$0xf]
      %v2459 = vld [vmem:[%s2450 + $0x20] sm:$0xf]
      %v2460 = vld [vmem:[%s2450 + $0x24] sm:$0xf]
      %v2461 = vld [vmem:[%s2450 + $0x28] sm:$0xf]
      %v2462 = vld [vmem:[%s2450 + $0x2c] sm:$0xf]
      %v2463 = vld [vmem:[%s2450 + $0x30] sm:$0xf]
      %v2464 = vld [vmem:[%s2450 + $0x34] sm:$0xf]
      %v2465 = vld [vmem:[%s2450 + $0x38] sm:$0xf]
      %v2466 = vld [vmem:[%s2450 + $0x3c] sm:$0xf]
      %v2467 = vld [vmem:[%s2450 + $0x40] sm:$0xf]
      %v2468 = vld [vmem:[%s2450 + $0x44] sm:$0xf]
      %v2469 = vld [vmem:[%s2450 + $0x48] sm:$0xf]
      %v2470 = vld [vmem:[%s2450 + $0x4c] sm:$0xf]
      %v2471 = vld [vmem:[%s2450 + $0x50] sm:$0xf]
      %v2472 = vld [vmem:[%s2450 + $0x54] sm:$0xf]
      %v2473 = vld [vmem:[%s2450 + $0x58] sm:$0xf]
      %v2474 = vld [vmem:[%s2450 + $0x5c] sm:$0xf]
      %v2475 = vld [vmem:[%s2450 + $0x60] sm:$0xf]
      %v2476 = vld [vmem:[%s2450 + $0x64] sm:$0xf]
      %v2477 = vld [vmem:[%s2450 + $0x68] sm:$0xf]
      %v2478 = vld [vmem:[%s2450 + $0x6c] sm:$0xf]
      %v2479 = vld [vmem:[%s2450 + $0x70] sm:$0xf]
      %v2480 = vld [vmem:[%s2450 + $0x74] sm:$0xf]
      %v2481 = vld [vmem:[%s2450 + $0x78] sm:$0xf]
      %v2482 = vld [vmem:[%s2450 + $0x7c] sm:$0xf]
      %v2515 = vunpack.c.l.b16 %v2451
      %v2516 = vunpack.c.l.b16 %v2452
      %v2517 = vunpack.c.l.b16 %v2453
      %v2518 = vunpack.c.l.b16 %v2454
      %v2519 = vunpack.c.l.b16 %v2455
      %v2520 = vunpack.c.l.b16 %v2456
      %v2521 = vunpack.c.l.b16 %v2457
      %v2522 = vunpack.c.l.b16 %v2458
      %v2523 = vunpack.c.l.b16 %v2459
      %v2524 = vunpack.c.l.b16 %v2460
      %v2525 = vunpack.c.l.b16 %v2461
      %v2526 = vunpack.c.l.b16 %v2462
      %v2527 = vunpack.c.l.b16 %v2463
      %v2528 = vunpack.c.l.b16 %v2464
      %v2529 = vunpack.c.l.b16 %v2465
      %v2530 = vunpack.c.l.b16 %v2466
      %v2531 = vunpack.c.l.b16 %v2467
      %v2532 = vunpack.c.l.b16 %v2468
      %v2533 = vunpack.c.l.b16 %v2469
      %v2534 = vunpack.c.l.b16 %v2470
      %v2535 = vunpack.c.l.b16 %v2471
      %v2536 = vunpack.c.l.b16 %v2472
      %v2537 = vunpack.c.l.b16 %v2473
      %v2538 = vunpack.c.l.b16 %v2474
      %v2539 = vunpack.c.l.b16 %v2475
      %v2540 = vunpack.c.l.b16 %v2476
      %v2541 = vunpack.c.l.b16 %v2477
      %v2542 = vunpack.c.l.b16 %v2478
      %v2543 = vunpack.c.l.b16 %v2479
      %v2544 = vunpack.c.l.b16 %v2480
      %v2545 = vunpack.c.l.b16 %v2481
      %v2546 = vunpack.c.l.b16 %v2482
      %v2547 = vpack.c.b16 %v2516, %v2515
      %v2548 = vpack.c.b16 %v2518, %v2517
      %v2549 = vpack.c.b16 %v2520, %v2519
      %v2550 = vpack.c.b16 %v2522, %v2521
      %v2551 = vpack.c.b16 %v2524, %v2523
      %v2552 = vpack.c.b16 %v2526, %v2525
      %v2553 = vpack.c.b16 %v2528, %v2527
      %v2554 = vpack.c.b16 %v2530, %v2529
      %v2555 = vpack.c.b16 %v2532, %v2531
      %v2556 = vpack.c.b16 %v2534, %v2533
      %v2557 = vpack.c.b16 %v2536, %v2535
      %v2558 = vpack.c.b16 %v2538, %v2537
      %v2559 = vpack.c.b16 %v2540, %v2539
      %v2560 = vpack.c.b16 %v2542, %v2541
      %v2561 = vpack.c.b16 %v2544, %v2543
      %v2562 = vpack.c.b16 %v2546, %v2545
      %2579 = vmatprep.subr.bf16.mxu0 0
      %2580 = vmatpush1.bf16.msra.mxu0 %v2547
      %2581 = vmatprep.subr.bf16.mxu0 0
      %2582 = vmatpush1.bf16.msra.mxu0 %v2548
      %2583 = vmatprep.subr.bf16.mxu0 0
      %2584 = vmatpush1.bf16.msra.mxu0 %v2549
      %2585 = vmatprep.subr.bf16.mxu0 0
      %2586 = vmatpush1.bf16.msra.mxu0 %v2550
      %2587 = vmatprep.subr.bf16.mxu0 0
      %2588 = vmatpush1.bf16.msra.mxu0 %v2551
      %2589 = vmatprep.subr.bf16.mxu0 0
      %2590 = vmatpush1.bf16.msra.mxu0 %v2552
      %2591 = vmatprep.subr.bf16.mxu0 0
      %2592 = vmatpush1.bf16.msra.mxu0 %v2553
      %2593 = vmatprep.subr.bf16.mxu0 0
      %2594 = vmatpush1.bf16.msra.mxu0 %v2554
      %2595 = vmatprep.subr.bf16.mxu0 0
      %2596 = vmatpush1.bf16.msra.mxu0 %v2555
      %2597 = vmatprep.subr.bf16.mxu0 0
      %2598 = vmatpush1.bf16.msra.mxu0 %v2556
      %2599 = vmatprep.subr.bf16.mxu0 0
      %2600 = vmatpush1.bf16.msra.mxu0 %v2557
      %2601 = vmatprep.subr.bf16.mxu0 0
      %2602 = vmatpush1.bf16.msra.mxu0 %v2558
      %2603 = vmatprep.subr.bf16.mxu0 0
      %2604 = vmatpush1.bf16.msra.mxu0 %v2559
      %2605 = vmatprep.subr.bf16.mxu0 0
      %2606 = vmatpush1.bf16.msra.mxu0 %v2560
      %2607 = vmatprep.subr.bf16.mxu0 0
      %2608 = vmatpush1.bf16.msra.mxu0 %v2561
      %2609 = vmatprep.subr.bf16.mxu0 0
      %2610 = vmatpush1.bf16.msra.mxu0 %v2562
      %2611 = vmatprep.mubr.bf16.mxu0 %v2449
      %2612 = vmatmul.mubr.bf16.gmra.mrb[0].mxu0 %v2448
      %v2613 = vpop.f32.mrb[0].mxu0
      %v2614 = vadd.f32 0.0, %v2613
      %v2615 = vpop.f32.mrb[0].mxu0
      %v2616 = vpop.f32.mrb[0].mxu0
      %v2617 = vpop.f32.mrb[0].mxu0
      %2618 = vdwg.mxu0
      %v2619 = vadd.f32 %v2434, %v2614
      %s2620 = scalar_lea.vmem [#allocation2], 5
      %v2621 = vld [vmem:[%s2620] ss:$8 sm:$0x3]
      %v2623 = vlaneseq
      %v2624 = vshrl.u32 %v2623, 7
      %v2625 = vsub.s32 0, %v2624
      %v2626 = vrot.slane %v2621, %v2625
      %v2627 = vlaneseq
      %v2628 = vshrl.u32 %v2627, 7
      %v2629 = vsub.s32 1, %v2628
      %v2630 = vrot.slane %v2621, %v2629
      %v2633 = vpack.c.bf16 %v2626, %v2626
      %v2634 = vpack.c.bf16 %v2630, %v2630
      %s2635 = scalar_lea.vmem %s7, 256
      %v2636 = vld [vmem:[%s2635] sm:$0xf]
      %v2637 = vld [vmem:[%s2635 + $0x4] sm:$0xf]
      %v2638 = vld [vmem:[%s2635 + $0x8] sm:$0xf]
      %v2639 = vld [vmem:[%s2635 + $0xc] sm:$0xf]
      %v2640 = vld [vmem:[%s2635 + $0x10] sm:$0xf]
      %v2641 = vld [vmem:[%s2635 + $0x14] sm:$0xf]
      %v2642 = vld [vmem:[%s2635 + $0x18] sm:$0xf]
      %v2643 = vld [vmem:[%s2635 + $0x1c] sm:$0xf]
      %v2644 = vld [vmem:[%s2635 + $0x20] sm:$0xf]
      %v2645 = vld [vmem:[%s2635 + $0x24] sm:$0xf]
      %v2646 = vld [vmem:[%s2635 + $0x28] sm:$0xf]
      %v2647 = vld [vmem:[%s2635 + $0x2c] sm:$0xf]
      %v2648 = vld [vmem:[%s2635 + $0x30] sm:$0xf]
      %v2649 = vld [vmem:[%s2635 + $0x34] sm:$0xf]
      %v2650 = vld [vmem:[%s2635 + $0x38] sm:$0xf]
      %v2651 = vld [vmem:[%s2635 + $0x3c] sm:$0xf]
      %v2652 = vld [vmem:[%s2635 + $0x40] sm:$0xf]
      %v2653 = vld [vmem:[%s2635 + $0x44] sm:$0xf]
      %v2654 = vld [vmem:[%s2635 + $0x48] sm:$0xf]
      %v2655 = vld [vmem:[%s2635 + $0x4c] sm:$0xf]
      %v2656 = vld [vmem:[%s2635 + $0x50] sm:$0xf]
      %v2657 = vld [vmem:[%s2635 + $0x54] sm:$0xf]
      %v2658 = vld [vmem:[%s2635 + $0x58] sm:$0xf]
      %v2659 = vld [vmem:[%s2635 + $0x5c] sm:$0xf]
      %v2660 = vld [vmem:[%s2635 + $0x60] sm:$0xf]
      %v2661 = vld [vmem:[%s2635 + $0x64] sm:$0xf]
      %v2662 = vld [vmem:[%s2635 + $0x68] sm:$0xf]
      %v2663 = vld [vmem:[%s2635 + $0x6c] sm:$0xf]
      %v2664 = vld [vmem:[%s2635 + $0x70] sm:$0xf]
      %v2665 = vld [vmem:[%s2635 + $0x74] sm:$0xf]
      %v2666 = vld [vmem:[%s2635 + $0x78] sm:$0xf]
      %v2667 = vld [vmem:[%s2635 + $0x7c] sm:$0xf]
      %v2700 = vunpack.c.l.b16 %v2636
      %v2701 = vunpack.c.l.b16 %v2637
      %v2702 = vunpack.c.l.b16 %v2638
      %v2703 = vunpack.c.l.b16 %v2639
      %v2704 = vunpack.c.l.b16 %v2640
      %v2705 = vunpack.c.l.b16 %v2641
      %v2706 = vunpack.c.l.b16 %v2642
      %v2707 = vunpack.c.l.b16 %v2643
      %v2708 = vunpack.c.l.b16 %v2644
      %v2709 = vunpack.c.l.b16 %v2645
      %v2710 = vunpack.c.l.b16 %v2646
      %v2711 = vunpack.c.l.b16 %v2647
      %v2712 = vunpack.c.l.b16 %v2648
      %v2713 = vunpack.c.l.b16 %v2649
      %v2714 = vunpack.c.l.b16 %v2650
      %v2715 = vunpack.c.l.b16 %v2651
      %v2716 = vunpack.c.l.b16 %v2652
      %v2717 = vunpack.c.l.b16 %v2653
      %v2718 = vunpack.c.l.b16 %v2654
      %v2719 = vunpack.c.l.b16 %v2655
      %v2720 = vunpack.c.l.b16 %v2656
      %v2721 = vunpack.c.l.b16 %v2657
      %v2722 = vunpack.c.l.b16 %v2658
      %v2723 = vunpack.c.l.b16 %v2659
      %v2724 = vunpack.c.l.b16 %v2660
      %v2725 = vunpack.c.l.b16 %v2661
      %v2726 = vunpack.c.l.b16 %v2662
      %v2727 = vunpack.c.l.b16 %v2663
      %v2728 = vunpack.c.l.b16 %v2664
      %v2729 = vunpack.c.l.b16 %v2665
      %v2730 = vunpack.c.l.b16 %v2666
      %v2731 = vunpack.c.l.b16 %v2667
      %v2732 = vpack.c.b16 %v2701, %v2700
      %v2733 = vpack.c.b16 %v2703, %v2702
      %v2734 = vpack.c.b16 %v2705, %v2704
      %v2735 = vpack.c.b16 %v2707, %v2706
      %v2736 = vpack.c.b16 %v2709, %v2708
      %v2737 = vpack.c.b16 %v2711, %v2710
      %v2738 = vpack.c.b16 %v2713, %v2712
      %v2739 = vpack.c.b16 %v2715, %v2714
      %v2740 = vpack.c.b16 %v2717, %v2716
      %v2741 = vpack.c.b16 %v2719, %v2718
      %v2742 = vpack.c.b16 %v2721, %v2720
      %v2743 = vpack.c.b16 %v2723, %v2722
      %v2744 = vpack.c.b16 %v2725, %v2724
      %v2745 = vpack.c.b16 %v2727, %v2726
      %v2746 = vpack.c.b16 %v2729, %v2728
      %v2747 = vpack.c.b16 %v2731, %v2730
      %2764 = vmatprep.subr.bf16.mxu0 0
      %2765 = vmatpush1.bf16.msra.mxu0 %v2732
      %2766 = vmatprep.subr.bf16.mxu0 0
      %2767 = vmatpush1.bf16.msra.mxu0 %v2733
      %2768 = vmatprep.subr.bf16.mxu0 0
      %2769 = vmatpush1.bf16.msra.mxu0 %v2734
      %2770 = vmatprep.subr.bf16.mxu0 0
      %2771 = vmatpush1.bf16.msra.mxu0 %v2735
      %2772 = vmatprep.subr.bf16.mxu0 0
      %2773 = vmatpush1.bf16.msra.mxu0 %v2736
      %2774 = vmatprep.subr.bf16.mxu0 0
      %2775 = vmatpush1.bf16.msra.mxu0 %v2737
      %2776 = vmatprep.subr.bf16.mxu0 0
      %2777 = vmatpush1.bf16.msra.mxu0 %v2738
      %2778 = vmatprep.subr.bf16.mxu0 0
      %2779 = vmatpush1.bf16.msra.mxu0 %v2739
      %2780 = vmatprep.subr.bf16.mxu0 0
      %2781 = vmatpush1.bf16.msra.mxu0 %v2740
      %2782 = vmatprep.subr.bf16.mxu0 0
      %2783 = vmatpush1.bf16.msra.mxu0 %v2741
      %2784 = vmatprep.subr.bf16.mxu0 0
      %2785 = vmatpush1.bf16.msra.mxu0 %v2742
      %2786 = vmatprep.subr.bf16.mxu0 0
      %2787 = vmatpush1.bf16.msra.mxu0 %v2743
      %2788 = vmatprep.subr.bf16.mxu0 0
      %2789 = vmatpush1.bf16.msra.mxu0 %v2744
      %2790 = vmatprep.subr.bf16.mxu0 0
      %2791 = vmatpush1.bf16.msra.mxu0 %v2745
      %2792 = vmatprep.subr.bf16.mxu0 0
      %2793 = vmatpush1.bf16.msra.mxu0 %v2746
      %2794 = vmatprep.subr.bf16.mxu0 0
      %2795 = vmatpush1.bf16.msra.mxu0 %v2747
      %2796 = vmatprep.mubr.bf16.mxu0 %v2634
      %2797 = vmatmul.mubr.bf16.gmra.mrb[0].mxu0 %v2633
      %v2798 = vpop.f32.mrb[0].mxu0
      %v2799 = vadd.f32 0.0, %v2798
      %v2800 = vpop.f32.mrb[0].mxu0
      %v2801 = vpop.f32.mrb[0].mxu0
      %v2802 = vpop.f32.mrb[0].mxu0
      %2803 = vdwg.mxu0
      %v2804 = vadd.f32 %v2619, %v2799
      %s2805 = scalar_lea.vmem [#allocation2], 6
      %v2806 = vld [vmem:[%s2805] ss:$8 sm:$0x3]
      %v2808 = vlaneseq
      %v2809 = vshrl.u32 %v2808, 7
      %v2810 = vsub.s32 0, %v2809
      %v2811 = vrot.slane %v2806, %v2810
      %v2812 = vlaneseq
      %v2813 = vshrl.u32 %v2812, 7
      %v2814 = vsub.s32 1, %v2813
      %v2815 = vrot.slane %v2806, %v2814
      %v2818 = vpack.c.bf16 %v2811, %v2811
      %v2819 = vpack.c.bf16 %v2815, %v2815
      %s2820 = scalar_lea.vmem %s7, 384
      %v2821 = vld [vmem:[%s2820] sm:$0xf]
      %v2822 = vld [vmem:[%s2820 + $0x4] sm:$0xf]
      %v2823 = vld [vmem:[%s2820 + $0x8] sm:$0xf]
      %v2824 = vld [vmem:[%s2820 + $0xc] sm:$0xf]
      %v2825 = vld [vmem:[%s2820 + $0x10] sm:$0xf]
      %v2826 = vld [vmem:[%s2820 + $0x14] sm:$0xf]
      %v2827 = vld [vmem:[%s2820 + $0x18] sm:$0xf]
      %v2828 = vld [vmem:[%s2820 + $0x1c] sm:$0xf]
      %v2829 = vld [vmem:[%s2820 + $0x20] sm:$0xf]
      %v2830 = vld [vmem:[%s2820 + $0x24] sm:$0xf]
      %v2831 = vld [vmem:[%s2820 + $0x28] sm:$0xf]
      %v2832 = vld [vmem:[%s2820 + $0x2c] sm:$0xf]
      %v2833 = vld [vmem:[%s2820 + $0x30] sm:$0xf]
      %v2834 = vld [vmem:[%s2820 + $0x34] sm:$0xf]
      %v2835 = vld [vmem:[%s2820 + $0x38] sm:$0xf]
      %v2836 = vld [vmem:[%s2820 + $0x3c] sm:$0xf]
      %v2837 = vld [vmem:[%s2820 + $0x40] sm:$0xf]
      %v2838 = vld [vmem:[%s2820 + $0x44] sm:$0xf]
      %v2839 = vld [vmem:[%s2820 + $0x48] sm:$0xf]
      %v2840 = vld [vmem:[%s2820 + $0x4c] sm:$0xf]
      %v2841 = vld [vmem:[%s2820 + $0x50] sm:$0xf]
      %v2842 = vld [vmem:[%s2820 + $0x54] sm:$0xf]
      %v2843 = vld [vmem:[%s2820 + $0x58] sm:$0xf]
      %v2844 = vld [vmem:[%s2820 + $0x5c] sm:$0xf]
      %v2845 = vld [vmem:[%s2820 + $0x60] sm:$0xf]
      %v2846 = vld [vmem:[%s2820 + $0x64] sm:$0xf]
      %v2847 = vld [vmem:[%s2820 + $0x68] sm:$0xf]
      %v2848 = vld [vmem:[%s2820 + $0x6c] sm:$0xf]
      %v2849 = vld [vmem:[%s2820 + $0x70] sm:$0xf]
      %v2850 = vld [vmem:[%s2820 + $0x74] sm:$0xf]
      %v2851 = vld [vmem:[%s2820 + $0x78] sm:$0xf]
      %v2852 = vld [vmem:[%s2820 + $0x7c] sm:$0xf]
      %v2885 = vunpack.c.l.b16 %v2821
      %v2886 = vunpack.c.l.b16 %v2822
      %v2887 = vunpack.c.l.b16 %v2823
      %v2888 = vunpack.c.l.b16 %v2824
      %v2889 = vunpack.c.l.b16 %v2825
      %v2890 = vunpack.c.l.b16 %v2826
      %v2891 = vunpack.c.l.b16 %v2827
      %v2892 = vunpack.c.l.b16 %v2828
      %v2893 = vunpack.c.l.b16 %v2829
      %v2894 = vunpack.c.l.b16 %v2830
      %v2895 = vunpack.c.l.b16 %v2831
      %v2896 = vunpack.c.l.b16 %v2832
      %v2897 = vunpack.c.l.b16 %v2833
      %v2898 = vunpack.c.l.b16 %v2834
      %v2899 = vunpack.c.l.b16 %v2835
      %v2900 = vunpack.c.l.b16 %v2836
      %v2901 = vunpack.c.l.b16 %v2837
      %v2902 = vunpack.c.l.b16 %v2838
      %v2903 = vunpack.c.l.b16 %v2839
      %v2904 = vunpack.c.l.b16 %v2840
      %v2905 = vunpack.c.l.b16 %v2841
      %v2906 = vunpack.c.l.b16 %v2842
      %v2907 = vunpack.c.l.b16 %v2843
      %v2908 = vunpack.c.l.b16 %v2844
      %v2909 = vunpack.c.l.b16 %v2845
      %v2910 = vunpack.c.l.b16 %v2846
      %v2911 = vunpack.c.l.b16 %v2847
      %v2912 = vunpack.c.l.b16 %v2848
      %v2913 = vunpack.c.l.b16 %v2849
      %v2914 = vunpack.c.l.b16 %v2850
      %v2915 = vunpack.c.l.b16 %v2851
      %v2916 = vunpack.c.l.b16 %v2852
      %v2917 = vpack.c.b16 %v2886, %v2885
      %v2918 = vpack.c.b16 %v2888, %v2887
      %v2919 = vpack.c.b16 %v2890, %v2889
      %v2920 = vpack.c.b16 %v2892, %v2891
      %v2921 = vpack.c.b16 %v2894, %v2893
      %v2922 = vpack.c.b16 %v2896, %v2895
      %v2923 = vpack.c.b16 %v2898, %v2897
      %v2924 = vpack.c.b16 %v2900, %v2899
      %v2925 = vpack.c.b16 %v2902, %v2901
      %v2926 = vpack.c.b16 %v2904, %v2903
      %v2927 = vpack.c.b16 %v2906, %v2905
      %v2928 = vpack.c.b16 %v2908, %v2907
      %v2929 = vpack.c.b16 %v2910, %v2909
      %v2930 = vpack.c.b16 %v2912, %v2911
      %v2931 = vpack.c.b16 %v2914, %v2913
      %v2932 = vpack.c.b16 %v2916, %v2915
      %2949 = vmatprep.subr.bf16.mxu0 0
      %2950 = vmatpush1.bf16.msra.mxu0 %v2917
      %2951 = vmatprep.subr.bf16.mxu0 0
      %2952 = vmatpush1.bf16.msra.mxu0 %v2918
      %2953 = vmatprep.subr.bf16.mxu0 0
      %2954 = vmatpush1.bf16.msra.mxu0 %v2919
      %2955 = vmatprep.subr.bf16.mxu0 0
      %2956 = vmatpush1.bf16.msra.mxu0 %v2920
      %2957 = vmatprep.subr.bf16.mxu0 0
      %2958 = vmatpush1.bf16.msra.mxu0 %v2921
      %2959 = vmatprep.subr.bf16.mxu0 0
      %2960 = vmatpush1.bf16.msra.mxu0 %v2922
      %2961 = vmatprep.subr.bf16.mxu0 0
      %2962 = vmatpush1.bf16.msra.mxu0 %v2923
      %2963 = vmatprep.subr.bf16.mxu0 0
      %2964 = vmatpush1.bf16.msra.mxu0 %v2924
      %2965 = vmatprep.subr.bf16.mxu0 0
      %2966 = vmatpush1.bf16.msra.mxu0 %v2925
      %2967 = vmatprep.subr.bf16.mxu0 0
      %2968 = vmatpush1.bf16.msra.mxu0 %v2926
      %2969 = vmatprep.subr.bf16.mxu0 0
      %2970 = vmatpush1.bf16.msra.mxu0 %v2927
      %2971 = vmatprep.subr.bf16.mxu0 0
      %2972 = vmatpush1.bf16.msra.mxu0 %v2928
      %2973 = vmatprep.subr.bf16.mxu0 0
      %2974 = vmatpush1.bf16.msra.mxu0 %v2929
      %2975 = vmatprep.subr.bf16.mxu0 0
      %2976 = vmatpush1.bf16.msra.mxu0 %v2930
      %2977 = vmatprep.subr.bf16.mxu0 0
      %2978 = vmatpush1.bf16.msra.mxu0 %v2931
      %2979 = vmatprep.subr.bf16.mxu0 0
      %2980 = vmatpush1.bf16.msra.mxu0 %v2932
      %2981 = vmatprep.mubr.bf16.mxu0 %v2819
      %2982 = vmatmul.mubr.bf16.gmra.mrb[0].mxu0 %v2818
      %v2983 = vpop.f32.mrb[0].mxu0
      %v2984 = vadd.f32 0.0, %v2983
      %v2985 = vpop.f32.mrb[0].mxu0
      %v2986 = vpop.f32.mrb[0].mxu0
      %v2987 = vpop.f32.mrb[0].mxu0
      %2988 = vdwg.mxu0
      %v2989 = vadd.f32 %v2804, %v2984
      %s2990 = scalar_lea.vmem [#allocation2], 7
      %v2991 = vld [vmem:[%s2990] ss:$8 sm:$0x3]
      %v2993 = vlaneseq
      %v2994 = vshrl.u32 %v2993, 7
      %v2995 = vsub.s32 0, %v2994
      %v2996 = vrot.slane %v2991, %v2995
      %v2997 = vlaneseq
      %v2998 = vshrl.u32 %v2997, 7
      %v2999 = vsub.s32 1, %v2998
      %v3000 = vrot.slane %v2991, %v2999
      %v3003 = vpack.c.bf16 %v2996, %v2996
      %v3004 = vpack.c.bf16 %v3000, %v3000
      %s3005 = scalar_lea.vmem %s7, 512
      %v3006 = vld [vmem:[%s3005] sm:$0xf]
      %v3007 = vld [vmem:[%s3005 + $0x4] sm:$0xf]
      %v3008 = vld [vmem:[%s3005 + $0x8] sm:$0xf]
      %v3009 = vld [vmem:[%s3005 + $0xc] sm:$0xf]
      %v3010 = vld [vmem:[%s3005 + $0x10] sm:$0xf]
      %v3011 = vld [vmem:[%s3005 + $0x14] sm:$0xf]
      %v3012 = vld [vmem:[%s3005 + $0x18] sm:$0xf]
      %v3013 = vld [vmem:[%s3005 + $0x1c] sm:$0xf]
      %v3014 = vld [vmem:[%s3005 + $0x20] sm:$0xf]
      %v3015 = vld [vmem:[%s3005 + $0x24] sm:$0xf]
      %v3016 = vld [vmem:[%s3005 + $0x28] sm:$0xf]
      %v3017 = vld [vmem:[%s3005 + $0x2c] sm:$0xf]
      %v3018 = vld [vmem:[%s3005 + $0x30] sm:$0xf]
      %v3019 = vld [vmem:[%s3005 + $0x34] sm:$0xf]
      %v3020 = vld [vmem:[%s3005 + $0x38] sm:$0xf]
      %v3021 = vld [vmem:[%s3005 + $0x3c] sm:$0xf]
      %v3022 = vld [vmem:[%s3005 + $0x40] sm:$0xf]
      %v3023 = vld [vmem:[%s3005 + $0x44] sm:$0xf]
      %v3024 = vld [vmem:[%s3005 + $0x48] sm:$0xf]
      %v3025 = vld [vmem:[%s3005 + $0x4c] sm:$0xf]
      %v3026 = vld [vmem:[%s3005 + $0x50] sm:$0xf]
      %v3027 = vld [vmem:[%s3005 + $0x54] sm:$0xf]
      %v3028 = vld [vmem:[%s3005 + $0x58] sm:$0xf]
      %v3029 = vld [vmem:[%s3005 + $0x5c] sm:$0xf]
      %v3030 = vld [vmem:[%s3005 + $0x60] sm:$0xf]
      %v3031 = vld [vmem:[%s3005 + $0x64] sm:$0xf]
      %v3032 = vld [vmem:[%s3005 + $0x68] sm:$0xf]
      %v3033 = vld [vmem:[%s3005 + $0x6c] sm:$0xf]
      %v3034 = vld [vmem:[%s3005 + $0x70] sm:$0xf]
      %v3035 = vld [vmem:[%s3005 + $0x74] sm:$0xf]
      %v3036 = vld [vmem:[%s3005 + $0x78] sm:$0xf]
      %v3037 = vld [vmem:[%s3005 + $0x7c] sm:$0xf]
      %v3070 = vunpack.c.l.b16 %v3006
      %v3071 = vunpack.c.l.b16 %v3007
      %v3072 = vunpack.c.l.b16 %v3008
      %v3073 = vunpack.c.l.b16 %v3009
      %v3074 = vunpack.c.l.b16 %v3010
      %v3075 = vunpack.c.l.b16 %v3011
      %v3076 = vunpack.c.l.b16 %v3012
      %v3077 = vunpack.c.l.b16 %v3013
      %v3078 = vunpack.c.l.b16 %v3014
      %v3079 = vunpack.c.l.b16 %v3015
      %v3080 = vunpack.c.l.b16 %v3016
      %v3081 = vunpack.c.l.b16 %v3017
      %v3082 = vunpack.c.l.b16 %v3018
      %v3083 = vunpack.c.l.b16 %v3019
      %v3084 = vunpack.c.l.b16 %v3020
      %v3085 = vunpack.c.l.b16 %v3021
      %v3086 = vunpack.c.l.b16 %v3022
      %v3087 = vunpack.c.l.b16 %v3023
      %v3088 = vunpack.c.l.b16 %v3024
      %v3089 = vunpack.c.l.b16 %v3025
      %v3090 = vunpack.c.l.b16 %v3026
      %v3091 = vunpack.c.l.b16 %v3027
      %v3092 = vunpack.c.l.b16 %v3028
      %v3093 = vunpack.c.l.b16 %v3029
      %v3094 = vunpack.c.l.b16 %v3030
      %v3095 = vunpack.c.l.b16 %v3031
      %v3096 = vunpack.c.l.b16 %v3032
      %v3097 = vunpack.c.l.b16 %v3033
      %v3098 = vunpack.c.l.b16 %v3034
      %v3099 = vunpack.c.l.b16 %v3035
      %v3100 = vunpack.c.l.b16 %v3036
      %v3101 = vunpack.c.l.b16 %v3037
      %v3102 = vpack.c.b16 %v3071, %v3070
      %v3103 = vpack.c.b16 %v3073, %v3072
      %v3104 = vpack.c.b16 %v3075, %v3074
      %v3105 = vpack.c.b16 %v3077, %v3076
      %v3106 = vpack.c.b16 %v3079, %v3078
      %v3107 = vpack.c.b16 %v3081, %v3080
      %v3108 = vpack.c.b16 %v3083, %v3082
      %v3109 = vpack.c.b16 %v3085, %v3084
      %v3110 = vpack.c.b16 %v3087, %v3086
      %v3111 = vpack.c.b16 %v3089, %v3088
      %v3112 = vpack.c.b16 %v3091, %v3090
      %v3113 = vpack.c.b16 %v3093, %v3092
      %v3114 = vpack.c.b16 %v3095, %v3094
      %v3115 = vpack.c.b16 %v3097, %v3096
      %v3116 = vpack.c.b16 %v3099, %v3098
      %v3117 = vpack.c.b16 %v3101, %v3100
      %3134 = vmatprep.subr.bf16.mxu0 0
      %3135 = vmatpush1.bf16.msra.mxu0 %v3102
      %3136 = vmatprep.subr.bf16.mxu0 0
      %3137 = vmatpush1.bf16.msra.mxu0 %v3103
      %3138 = vmatprep.subr.bf16.mxu0 0
      %3139 = vmatpush1.bf16.msra.mxu0 %v3104
      %3140 = vmatprep.subr.bf16.mxu0 0
      %3141 = vmatpush1.bf16.msra.mxu0 %v3105
      %3142 = vmatprep.subr.bf16.mxu0 0
      %3143 = vmatpush1.bf16.msra.mxu0 %v3106
      %3144 = vmatprep.subr.bf16.mxu0 0
      %3145 = vmatpush1.bf16.msra.mxu0 %v3107
      %3146 = vmatprep.subr.bf16.mxu0 0
      %3147 = vmatpush1.bf16.msra.mxu0 %v3108
      %3148 = vmatprep.subr.bf16.mxu0 0
      %3149 = vmatpush1.bf16.msra.mxu0 %v3109
      %3150 = vmatprep.subr.bf16.mxu0 0
      %3151 = vmatpush1.bf16.msra.mxu0 %v3110
      %3152 = vmatprep.subr.bf16.mxu0 0
      %3153 = vmatpush1.bf16.msra.mxu0 %v3111
      %3154 = vmatprep.subr.bf16.mxu0 0
      %3155 = vmatpush1.bf16.msra.mxu0 %v3112
      %3156 = vmatprep.subr.bf16.mxu0 0
      %3157 = vmatpush1.bf16.msra.mxu0 %v3113
      %3158 = vmatprep.subr.bf16.mxu0 0
      %3159 = vmatpush1.bf16.msra.mxu0 %v3114
      %3160 = vmatprep.subr.bf16.mxu0 0
      %3161 = vmatpush1.bf16.msra.mxu0 %v3115
      %3162 = vmatprep.subr.bf16.mxu0 0
      %3163 = vmatpush1.bf16.msra.mxu0 %v3116
      %3164 = vmatprep.subr.bf16.mxu0 0
      %3165 = vmatpush1.bf16.msra.mxu0 %v3117
      %3166 = vmatprep.mubr.bf16.mxu0 %v3004
      %3167 = vmatmul.mubr.bf16.gmra.mrb[0].mxu0 %v3003
      %v3168 = vpop.f32.mrb[0].mxu0
      %v3169 = vadd.f32 0.0, %v3168
      %v3170 = vpop.f32.mrb[0].mxu0
      %v3171 = vpop.f32.mrb[0].mxu0
      %v3172 = vpop.f32.mrb[0].mxu0
      %3173 = vdwg.mxu0
      %v3174 = vadd.f32 %v2989, %v3169
      %v3175 = vpack.c.bf16 %v3174, %v3174
      %v3176 = vld [vmem:[%s9] sm:$0xff]
      %v3177 = vld [vmem:[%s9 + $0x8] sm:$0xff]
      %v3178 = vld [vmem:[%s9 + $0x10] sm:$0xf]
      %v3179 = vld [vmem:[%s9 + $0x14] sm:$0xff]
      %v3180 = vld [vmem:[%s9 + $0x1c] sm:$0xff]
      %v3181 = vld [vmem:[%s9 + $0x24] sm:$0xf]
      %v3182 = vld [vmem:[%s10] sm:$0x1f]
      %v3189 = vunpack.c.l.b16 %v3176
      %v3190 = vunpack.c.h.b16 %v3176
      %v3191 = vunpack.c.l.b16 %v3177
      %v3192 = vunpack.c.h.b16 %v3177
      %v3193 = vunpack.c.l.b16 %v3178
      %v3194 = vunpack.c.l.b16 %v3179
      %v3195 = vunpack.c.h.b16 %v3179
      %v3196 = vunpack.c.l.b16 %v3180
      %v3197 = vunpack.c.h.b16 %v3180
      %v3198 = vunpack.c.l.b16 %v3181
      %v3199 = vpack.c.b16 %v3194, %v3189
      %v3200 = vpack.c.b16 %v3195, %v3190
      %v3201 = vpack.c.b16 %v3196, %v3191
      %v3202 = vpack.c.b16 %v3197, %v3192
      %v3203 = vpack.c.b16 %v3198, %v3193
      %v3210 = vlaneseq
      %v3211 = vshrl.u32 %v3210, 7
      %v3212 = vsub.s32 0, %v3211
      %v3213 = vrot.slane %v3182, %v3212
      %v3214 = vlaneseq
      %v3215 = vshrl.u32 %v3214, 7
      %v3216 = vsub.s32 1, %v3215
      %v3217 = vrot.slane %v3182, %v3216
      %v3218 = vlaneseq
      %v3219 = vshrl.u32 %v3218, 7
      %v3220 = vsub.s32 2, %v3219
      %v3221 = vrot.slane %v3182, %v3220
      %v3222 = vlaneseq
      %v3223 = vshrl.u32 %v3222, 7
      %v3224 = vsub.s32 3, %v3223
      %v3225 = vrot.slane %v3182, %v3224
      %v3226 = vlaneseq
      %v3227 = vshrl.u32 %v3226, 7
      %v3228 = vsub.s32 4, %v3227
      %v3229 = vrot.slane %v3182, %v3228
      %vm3235 = vcmask 130048
      %v3237 = vsel %vm3235, %v3175, 0
      %3239 = vmatprep.subr.bf16.mxu0 %v3200
      %3240 = vmatpush1.bf16.msra.mxu0 %v3199
      %3241 = vmatprep.subr.bf16.mxu0 0
      %3242 = vmatpush1.bf16.msra.mxu0 0
      %3243 = vmatprep.subr.bf16.mxu0 0
      %3244 = vmatpush1.bf16.msra.mxu0 0
      %3245 = vmatprep.subr.bf16.mxu0 0
      %3246 = vmatpush1.bf16.msra.mxu0 0
      %3247 = vmatprep.subr.bf16.mxu0 0
      %3248 = vmatpush1.bf16.msra.mxu0 0
      %3249 = vmatprep.subr.bf16.mxu0 0
      %3250 = vmatpush1.bf16.msra.mxu0 0
      %3251 = vmatprep.subr.bf16.mxu0 0
      %3252 = vmatpush1.bf16.msra.mxu0 0
      %3253 = vmatprep.subr.bf16.mxu0 0
      %3254 = vmatpush1.bf16.msra.mxu0 0
      %3255 = vmatprep.subr.bf16.mxu0 0
      %3256 = vmatpush1.bf16.msra.mxu0 0
      %3257 = vmatprep.subr.bf16.mxu0 0
      %3258 = vmatpush1.bf16.msra.mxu0 0
      %3259 = vmatprep.subr.bf16.mxu0 0
      %3260 = vmatpush1.bf16.msra.mxu0 0
      %3261 = vmatprep.subr.bf16.mxu0 0
      %3262 = vmatpush1.bf16.msra.mxu0 0
      %3263 = vmatprep.subr.bf16.mxu0 0
      %3264 = vmatpush1.bf16.msra.mxu0 0
      %3265 = vmatprep.subr.bf16.mxu0 0
      %3266 = vmatpush1.bf16.msra.mxu0 0
      %3267 = vmatprep.subr.bf16.mxu0 0
      %3268 = vmatpush1.bf16.msra.mxu0 0
      %3269 = vmatprep.subr.bf16.mxu0 0
      %3270 = vmatpush1.bf16.msra.mxu0 0
      %3271 = vmatprep.mubr.bf16.mxu0 0
      %3272 = vmatmul.mubr.bf16.gmra.mrb[0].mxu0 %v3237
      %v3273 = vpop.f32.mrb[0].mxu0
      %v3274 = vadd.f32 %v3213, %v3273
      %v3275 = vpop.f32.mrb[0].mxu0
      %v3276 = vadd.f32 %v3217, %v3275
      %v3277 = vpop.f32.mrb[0].mxu0
      %v3278 = vpop.f32.mrb[0].mxu0
      %3279 = vdwg.mxu0
      %3280 = vmatprep.subr.bf16.mxu0 %v3202
      %3281 = vmatpush1.bf16.msra.mxu0 %v3201
      %3282 = vmatprep.subr.bf16.mxu0 0
      %3283 = vmatpush1.bf16.msra.mxu0 0
      %3284 = vmatprep.subr.bf16.mxu0 0
      %3285 = vmatpush1.bf16.msra.mxu0 0
      %3286 = vmatprep.subr.bf16.mxu0 0
      %3287 = vmatpush1.bf16.msra.mxu0 0
      %3288 = vmatprep.subr.bf16.mxu0 0
      %3289 = vmatpush1.bf16.msra.mxu0 0
      %3290 = vmatprep.subr.bf16.mxu0 0
      %3291 = vmatpush1.bf16.msra.mxu0 0
      %3292 = vmatprep.subr.bf16.mxu0 0
      %3293 = vmatpush1.bf16.msra.mxu0 0
      %3294 = vmatprep.subr.bf16.mxu0 0
      %3295 = vmatpush1.bf16.msra.mxu0 0
      %3296 = vmatprep.subr.bf16.mxu0 0
      %3297 = vmatpush1.bf16.msra.mxu0 0
      %3298 = vmatprep.subr.bf16.mxu0 0
      %3299 = vmatpush1.bf16.msra.mxu0 0
      %3300 = vmatprep.subr.bf16.mxu0 0
      %3301 = vmatpush1.bf16.msra.mxu0 0
      %3302 = vmatprep.subr.bf16.mxu0 0
      %3303 = vmatpush1.bf16.msra.mxu0 0
      %3304 = vmatprep.subr.bf16.mxu0 0
      %3305 = vmatpush1.bf16.msra.mxu0 0
      %3306 = vmatprep.subr.bf16.mxu0 0
      %3307 = vmatpush1.bf16.msra.mxu0 0
      %3308 = vmatprep.subr.bf16.mxu0 0
      %3309 = vmatpush1.bf16.msra.mxu0 0
      %3310 = vmatprep.subr.bf16.mxu0 0
      %3311 = vmatpush1.bf16.msra.mxu0 0
      %3312 = vmatprep.mubr.bf16.mxu0 0
      %3313 = vmatmul.mubr.bf16.gmra.mrb[0].mxu0 %v3237
      %v3314 = vpop.f32.mrb[0].mxu0
      %v3315 = vadd.f32 %v3221, %v3314
      %v3316 = vpop.f32.mrb[0].mxu0
      %v3317 = vadd.f32 %v3225, %v3316
      %v3318 = vpop.f32.mrb[0].mxu0
      %v3319 = vpop.f32.mrb[0].mxu0
      %3320 = vdwg.mxu0
      %3321 = vmatprep.subr.bf16.mxu0 0
      %3322 = vmatpush1.bf16.msra.mxu0 %v3203
      %3323 = vmatprep.subr.bf16.mxu0 0
      %3324 = vmatpush1.bf16.msra.mxu0 0
      %3325 = vmatprep.subr.bf16.mxu0 0
      %3326 = vmatpush1.bf16.msra.mxu0 0
      %3327 = vmatprep.subr.bf16.mxu0 0
      %3328 = vmatpush1.bf16.msra.mxu0 0
      %3329 = vmatprep.subr.bf16.mxu0 0
      %3330 = vmatpush1.bf16.msra.mxu0 0
      %3331 = vmatprep.subr.bf16.mxu0 0
      %3332 = vmatpush1.bf16.msra.mxu0 0
      %3333 = vmatprep.subr.bf16.mxu0 0
      %3334 = vmatpush1.bf16.msra.mxu0 0
      %3335 = vmatprep.subr.bf16.mxu0 0
      %3336 = vmatpush1.bf16.msra.mxu0 0
      %3337 = vmatprep.subr.bf16.mxu0 0
      %3338 = vmatpush1.bf16.msra.mxu0 0
      %3339 = vmatprep.subr.bf16.mxu0 0
      %3340 = vmatpush1.bf16.msra.mxu0 0
      %3341 = vmatprep.subr.bf16.mxu0 0
      %3342 = vmatpush1.bf16.msra.mxu0 0
      %3343 = vmatprep.subr.bf16.mxu0 0
      %3344 = vmatpush1.bf16.msra.mxu0 0
      %3345 = vmatprep.subr.bf16.mxu0 0
      %3346 = vmatpush1.bf16.msra.mxu0 0
      %3347 = vmatprep.subr.bf16.mxu0 0
      %3348 = vmatpush1.bf16.msra.mxu0 0
      %3349 = vmatprep.subr.bf16.mxu0 0
      %3350 = vmatpush1.bf16.msra.mxu0 0
      %3351 = vmatprep.subr.bf16.mxu0 0
      %3352 = vmatpush1.bf16.msra.mxu0 0
      %3353 = vmatprep.mubr.bf16.mxu0 0
      %3354 = vmatmul.mubr.bf16.gmra.mrb[0].mxu0 %v3237
      %v3355 = vpop.f32.mrb[0].mxu0
      %v3356 = vadd.f32 %v3229, %v3355
      %v3357 = vpop.f32.mrb[0].mxu0
      %v3358 = vpop.f32.mrb[0].mxu0
      %v3359 = vpop.f32.mrb[0].mxu0
      %3360 = vdwg.mxu0
      %v3361 = vmax.f32 %v3274, 0.0
      %v3362 = vmax.f32 %v3276, 0.0
      %v3363 = vmax.f32 %v3315, 0.0
      %v3364 = vmax.f32 %v3317, 0.0
      %v3365 = vmax.f32 %v3356, 0.0
      %3366 = vst [vmem:[#allocation2 + $0x3] sm:$0x1] %v3361
      %3367 = vst [vmem:[#allocation2 + $0x4] sm:$0x1] %v3362
      %3368 = vst [vmem:[#allocation2 + $0x5] sm:$0x1] %v3363
      %3369 = vst [vmem:[#allocation2 + $0x6] sm:$0x1] %v3364
      %3370 = vst [vmem:[#allocation2 + $0x7] sm:$0x1] %v3365
      %v3371 = vld [vmem:[#allocation2] sm:$0x3e]
      %v3372 = vpack.c.bf16 %v3371, %v3371
      %v3373 = vld [vmem:[%s11] sm:$0xf]
      %v3374 = vld [vmem:[%s11 + $0x4] sm:$0xf]
      %v3375 = vld [vmem:[%s11 + $0x8] sm:$0xf]
      %v3376 = vld [vmem:[%s11 + $0xc] sm:$0xf]
      %v3377 = vld [vmem:[%s11 + $0x10] sm:$0xf]
      %v3378 = vld [vmem:[%s11 + $0x14] sm:$0xf]
      %v3379 = vld [vmem:[%s11 + $0x18] sm:$0xf]
      %v3380 = vld [vmem:[%s11 + $0x1c] sm:$0xf]
      %v3381 = vld [vmem:[%s11 + $0x20] sm:$0xf]
      %v3382 = vld [vmem:[%s11 + $0x24] sm:$0xf]
      %v3383 = vld [vmem:[%s11 + $0x28] sm:$0xf]
      %v3384 = vld [vmem:[%s11 + $0x2c] sm:$0xf]
      %v3385 = vld [vmem:[%s11 + $0x30] sm:$0xf]
      %v3386 = vld [vmem:[%s11 + $0x34] sm:$0xf]
      %v3387 = vld [vmem:[%s11 + $0x38] sm:$0xf]
      %v3388 = vld [vmem:[%s11 + $0x3c] sm:$0xf]
      %v3389 = vld [vmem:[#allocation2] sm:$0x7c]
      %v3390 = vpack.c.bf16 %v3389, %v3389
      %s3391 = scalar_lea.vmem %s11, 64
      %v3392 = vld [vmem:[%s3391] sm:$0xf]
      %v3393 = vld [vmem:[%s3391 + $0x4] sm:$0xf]
      %v3394 = vld [vmem:[%s3391 + $0x8] sm:$0xf]
      %v3395 = vld [vmem:[%s3391 + $0xc] sm:$0xf]
      %v3396 = vld [vmem:[%s3391 + $0x10] sm:$0xf]
      %v3397 = vld [vmem:[%s3391 + $0x14] sm:$0xf]
      %v3398 = vld [vmem:[%s3391 + $0x18] sm:$0xf]
      %v3399 = vld [vmem:[%s3391 + $0x1c] sm:$0xf]
      %v3400 = vld [vmem:[%s3391 + $0x20] sm:$0xf]
      %v3401 = vld [vmem:[%s3391 + $0x24] sm:$0xf]
      %v3402 = vld [vmem:[%s3391 + $0x28] sm:$0xf]
      %v3403 = vld [vmem:[%s3391 + $0x2c] sm:$0xf]
      %v3404 = vld [vmem:[%s3391 + $0x30] sm:$0xf]
      %v3405 = vld [vmem:[%s3391 + $0x34] sm:$0xf]
      %v3406 = vld [vmem:[%s3391 + $0x38] sm:$0xf]
      %v3407 = vld [vmem:[%s3391 + $0x3c] sm:$0xf]
      %v3409 = vrot.slane %v3390, 1
      %v3427 = vunpack.c.l.b16 %v3392
      %v3428 = vunpack.c.l.b16 %v3393
      %v3429 = vunpack.c.l.b16 %v3394
      %v3430 = vunpack.c.l.b16 %v3395
      %v3431 = vunpack.c.l.b16 %v3396
      %v3432 = vunpack.c.l.b16 %v3397
      %v3433 = vunpack.c.l.b16 %v3398
      %v3434 = vunpack.c.l.b16 %v3399
      %v3435 = vunpack.c.l.b16 %v3400
      %v3436 = vunpack.c.l.b16 %v3401
      %v3437 = vunpack.c.l.b16 %v3402
      %v3438 = vunpack.c.l.b16 %v3403
      %v3439 = vunpack.c.l.b16 %v3404
      %v3440 = vunpack.c.l.b16 %v3405
      %v3441 = vunpack.c.l.b16 %v3406
      %v3442 = vunpack.c.l.b16 %v3407
      %v3443 = vpack.c.b16 %v3428, %v3427
      %v3444 = vpack.c.b16 %v3430, %v3429
      %v3445 = vpack.c.b16 %v3432, %v3431
      %v3446 = vpack.c.b16 %v3434, %v3433
      %v3447 = vpack.c.b16 %v3436, %v3435
      %v3448 = vpack.c.b16 %v3438, %v3437
      %v3449 = vpack.c.b16 %v3440, %v3439
      %v3450 = vpack.c.b16 %v3442, %v3441
      %3459 = vmatprep.subr.bf16.mxu0 0
      %3460 = vmatpush1.bf16.msra.mxu0 %v3443
      %3461 = vmatprep.subr.bf16.mxu0 0
      %3462 = vmatpush1.bf16.msra.mxu0 %v3444
      %3463 = vmatprep.subr.bf16.mxu0 0
      %3464 = vmatpush1.bf16.msra.mxu0 %v3445
      %3465 = vmatprep.subr.bf16.mxu0 0
      %3466 = vmatpush1.bf16.msra.mxu0 %v3446
      %3467 = vmatprep.subr.bf16.mxu0 0
      %3468 = vmatpush1.bf16.msra.mxu0 %v3447
      %3469 = vmatprep.subr.bf16.mxu0 0
      %3470 = vmatpush1.bf16.msra.mxu0 %v3448
      %3471 = vmatprep.subr.bf16.mxu0 0
      %3472 = vmatpush1.bf16.msra.mxu0 %v3449
      %3473 = vmatprep.subr.bf16.mxu0 0
      %3474 = vmatpush1.bf16.msra.mxu0 %v3450
      %3475 = vmatprep.subr.bf16.mxu0 0
      %3476 = vmatpush1.bf16.msra.mxu0 0
      %3477 = vmatprep.subr.bf16.mxu0 0
      %3478 = vmatpush1.bf16.msra.mxu0 0
      %3479 = vmatprep.subr.bf16.mxu0 0
      %3480 = vmatpush1.bf16.msra.mxu0 0
      %3481 = vmatprep.subr.bf16.mxu0 0
      %3482 = vmatpush1.bf16.msra.mxu0 0
      %3483 = vmatprep.subr.bf16.mxu0 0
      %3484 = vmatpush1.bf16.msra.mxu0 0
      %3485 = vmatprep.subr.bf16.mxu0 0
      %3486 = vmatpush1.bf16.msra.mxu0 0
      %3487 = vmatprep.subr.bf16.mxu0 0
      %3488 = vmatpush1.bf16.msra.mxu0 0
      %3489 = vmatprep.subr.bf16.mxu0 0
      %3490 = vmatpush1.bf16.msra.mxu0 0
      %3491 = vmatprep.mubr.bf16.mxu0 0
      %3492 = vmatmul.mubr.bf16.gmra.mrb[0].mxu0 %v3409
      %v3493 = vpop.f32.mrb[0].mxu0
      %v3494 = vadd.f32 0.0, %v3493
      %v3495 = vpop.f32.mrb[0].mxu0
      %v3496 = vpop.f32.mrb[0].mxu0
      %v3497 = vpop.f32.mrb[0].mxu0
      %3498 = vdwg.mxu0
      %v3500 = vshrl.u32 %v3372, 16
      %v3502 = vshll.u32 %v3372, 16
      %v3504 = vrot.slane %v3502, 1
      %v3505 = vor.u32 %v3500, %v3504
      %v3523 = vunpack.c.l.b16 %v3373
      %v3524 = vunpack.c.l.b16 %v3374
      %v3525 = vunpack.c.l.b16 %v3375
      %v3526 = vunpack.c.l.b16 %v3376
      %v3527 = vunpack.c.l.b16 %v3377
      %v3528 = vunpack.c.l.b16 %v3378
      %v3529 = vunpack.c.l.b16 %v3379
      %v3530 = vunpack.c.l.b16 %v3380
      %v3531 = vunpack.c.l.b16 %v3381
      %v3532 = vunpack.c.l.b16 %v3382
      %v3533 = vunpack.c.l.b16 %v3383
      %v3534 = vunpack.c.l.b16 %v3384
      %v3535 = vunpack.c.l.b16 %v3385
      %v3536 = vunpack.c.l.b16 %v3386
      %v3537 = vunpack.c.l.b16 %v3387
      %v3538 = vunpack.c.l.b16 %v3388
      %v3539 = vpack.c.b16 %v3524, %v3523
      %v3540 = vpack.c.b16 %v3526, %v3525
      %v3541 = vpack.c.b16 %v3528, %v3527
      %v3542 = vpack.c.b16 %v3530, %v3529
      %v3543 = vpack.c.b16 %v3532, %v3531
      %v3544 = vpack.c.b16 %v3534, %v3533
      %v3545 = vpack.c.b16 %v3536, %v3535
      %v3546 = vpack.c.b16 %v3538, %v3537
      %3555 = vmatprep.subr.bf16.mxu0 0
      %3556 = vmatpush1.bf16.msra.mxu0 %v3539
      %3557 = vmatprep.subr.bf16.mxu0 0
      %3558 = vmatpush1.bf16.msra.mxu0 %v3540
      %3559 = vmatprep.subr.bf16.mxu0 0
      %3560 = vmatpush1.bf16.msra.mxu0 %v3541
      %3561 = vmatprep.subr.bf16.mxu0 0
      %3562 = vmatpush1.bf16.msra.mxu0 %v3542
      %3563 = vmatprep.subr.bf16.mxu0 0
      %3564 = vmatpush1.bf16.msra.mxu0 %v3543
      %3565 = vmatprep.subr.bf16.mxu0 0
      %3566 = vmatpush1.bf16.msra.mxu0 %v3544
      %3567 = vmatprep.subr.bf16.mxu0 0
      %3568 = vmatpush1.bf16.msra.mxu0 %v3545
      %3569 = vmatprep.subr.bf16.mxu0 0
      %3570 = vmatpush1.bf16.msra.mxu0 %v3546
      %3571 = vmatprep.subr.bf16.mxu0 0
      %3572 = vmatpush1.bf16.msra.mxu0 0
      %3573 = vmatprep.subr.bf16.mxu0 0
      %3574 = vmatpush1.bf16.msra.mxu0 0
      %3575 = vmatprep.subr.bf16.mxu0 0
      %3576 = vmatpush1.bf16.msra.mxu0 0
      %3577 = vmatprep.subr.bf16.mxu0 0
      %3578 = vmatpush1.bf16.msra.mxu0 0
      %3579 = vmatprep.subr.bf16.mxu0 0
      %3580 = vmatpush1.bf16.msra.mxu0 0
      %3581 = vmatprep.subr.bf16.mxu0 0
      %3582 = vmatpush1.bf16.msra.mxu0 0
      %3583 = vmatprep.subr.bf16.mxu0 0
      %3584 = vmatpush1.bf16.msra.mxu0 0
      %3585 = vmatprep.subr.bf16.mxu0 0
      %3586 = vmatpush1.bf16.msra.mxu0 0
      %3587 = vmatprep.mubr.bf16.mxu0 0
      %3588 = vmatmul.mubr.bf16.gmra.mrb[0].mxu0 %v3505
      %v3589 = vpop.f32.mrb[0].mxu0
      %v3590 = vadd.f32 %v3494, %v3589
      %v3591 = vpop.f32.mrb[0].mxu0
      %v3592 = vpop.f32.mrb[0].mxu0
      %v3593 = vpop.f32.mrb[0].mxu0
      %3594 = vdwg.mxu0
      %v3595 = vld [vmem:[#allocation2] sm:$0xf8]
      %v3596 = vpack.c.bf16 %v3595, %v3595
      %s3597 = scalar_lea.vmem %s11, 128
      %v3598 = vld [vmem:[%s3597] sm:$0xf]
      %v3599 = vld [vmem:[%s3597 + $0x4] sm:$0xf]
      %v3600 = vld [vmem:[%s3597 + $0x8] sm:$0xf]
      %v3601 = vld [vmem:[%s3597 + $0xc] sm:$0xf]
      %v3602 = vld [vmem:[%s3597 + $0x10] sm:$0xf]
      %v3603 = vld [vmem:[%s3597 + $0x14] sm:$0xf]
      %v3604 = vld [vmem:[%s3597 + $0x18] sm:$0xf]
      %v3605 = vld [vmem:[%s3597 + $0x1c] sm:$0xf]
      %v3606 = vld [vmem:[%s3597 + $0x20] sm:$0xf]
      %v3607 = vld [vmem:[%s3597 + $0x24] sm:$0xf]
      %v3608 = vld [vmem:[%s3597 + $0x28] sm:$0xf]
      %v3609 = vld [vmem:[%s3597 + $0x2c] sm:$0xf]
      %v3610 = vld [vmem:[%s3597 + $0x30] sm:$0xf]
      %v3611 = vld [vmem:[%s3597 + $0x34] sm:$0xf]
      %v3612 = vld [vmem:[%s3597 + $0x38] sm:$0xf]
      %v3613 = vld [vmem:[%s3597 + $0x3c] sm:$0xf]
      %v3615 = vshrl.u32 %v3596, 16
      %v3617 = vrot.slane %v3615, 1
      %v3618 = vshll.u32 %v3596, 16
      %v3620 = vrot.slane %v3618, 2
      %v3621 = vor.u32 %v3617, %v3620
      %v3639 = vunpack.c.l.b16 %v3598
      %v3640 = vunpack.c.l.b16 %v3599
      %v3641 = vunpack.c.l.b16 %v3600
      %v3642 = vunpack.c.l.b16 %v3601
      %v3643 = vunpack.c.l.b16 %v3602
      %v3644 = vunpack.c.l.b16 %v3603
      %v3645 = vunpack.c.l.b16 %v3604
      %v3646 = vunpack.c.l.b16 %v3605
      %v3647 = vunpack.c.l.b16 %v3606
      %v3648 = vunpack.c.l.b16 %v3607
      %v3649 = vunpack.c.l.b16 %v3608
      %v3650 = vunpack.c.l.b16 %v3609
      %v3651 = vunpack.c.l.b16 %v3610
      %v3652 = vunpack.c.l.b16 %v3611
      %v3653 = vunpack.c.l.b16 %v3612
      %v3654 = vunpack.c.l.b16 %v3613
      %v3655 = vpack.c.b16 %v3640, %v3639
      %v3656 = vpack.c.b16 %v3642, %v3641
      %v3657 = vpack.c.b16 %v3644, %v3643
      %v3658 = vpack.c.b16 %v3646, %v3645
      %v3659 = vpack.c.b16 %v3648, %v3647
      %v3660 = vpack.c.b16 %v3650, %v3649
      %v3661 = vpack.c.b16 %v3652, %v3651
      %v3662 = vpack.c.b16 %v3654, %v3653
      %3671 = vmatprep.subr.bf16.mxu0 0
      %3672 = vmatpush1.bf16.msra.mxu0 %v3655
      %3673 = vmatprep.subr.bf16.mxu0 0
      %3674 = vmatpush1.bf16.msra.mxu0 %v3656
      %3675 = vmatprep.subr.bf16.mxu0 0
      %3676 = vmatpush1.bf16.msra.mxu0 %v3657
      %3677 = vmatprep.subr.bf16.mxu0 0
      %3678 = vmatpush1.bf16.msra.mxu0 %v3658
      %3679 = vmatprep.subr.bf16.mxu0 0
      %3680 = vmatpush1.bf16.msra.mxu0 %v3659
      %3681 = vmatprep.subr.bf16.mxu0 0
      %3682 = vmatpush1.bf16.msra.mxu0 %v3660
      %3683 = vmatprep.subr.bf16.mxu0 0
      %3684 = vmatpush1.bf16.msra.mxu0 %v3661
      %3685 = vmatprep.subr.bf16.mxu0 0
      %3686 = vmatpush1.bf16.msra.mxu0 %v3662
      %3687 = vmatprep.subr.bf16.mxu0 0
      %3688 = vmatpush1.bf16.msra.mxu0 0
      %3689 = vmatprep.subr.bf16.mxu0 0
      %3690 = vmatpush1.bf16.msra.mxu0 0
      %3691 = vmatprep.subr.bf16.mxu0 0
      %3692 = vmatpush1.bf16.msra.mxu0 0
      %3693 = vmatprep.subr.bf16.mxu0 0
      %3694 = vmatpush1.bf16.msra.mxu0 0
      %3695 = vmatprep.subr.bf16.mxu0 0
      %3696 = vmatpush1.bf16.msra.mxu0 0
      %3697 = vmatprep.subr.bf16.mxu0 0
      %3698 = vmatpush1.bf16.msra.mxu0 0
      %3699 = vmatprep.subr.bf16.mxu0 0
      %3700 = vmatpush1.bf16.msra.mxu0 0
      %3701 = vmatprep.subr.bf16.mxu0 0
      %3702 = vmatpush1.bf16.msra.mxu0 0
      %3703 = vmatprep.mubr.bf16.mxu0 0
      %3704 = vmatmul.mubr.bf16.gmra.mrb[0].mxu0 %v3621
      %v3705 = vpop.f32.mrb[0].mxu0
      %v3706 = vadd.f32 0.0, %v3705
      %v3707 = vpop.f32.mrb[0].mxu0
      %v3708 = vpop.f32.mrb[0].mxu0
      %v3709 = vpop.f32.mrb[0].mxu0
      %3710 = vdwg.mxu0
      %v3711 = vadd.f32 %v3590, %v3706
      %v3712 = vld [vmem:[#allocation2] sm:$0xf0]
      %v3713 = vld [vmem:[#allocation2 + $0x10] sm:$0x1]
      %v3714 = vpack.c.bf16 %v3713, %v3712
      %s3715 = scalar_lea.vmem %s11, 192
      %v3716 = vld [vmem:[%s3715] sm:$0xf]
      %v3717 = vld [vmem:[%s3715 + $0x4] sm:$0xf]
      %v3718 = vld [vmem:[%s3715 + $0x8] sm:$0xf]
      %v3719 = vld [vmem:[%s3715 + $0xc] sm:$0xf]
      %v3720 = vld [vmem:[%s3715 + $0x10] sm:$0xf]
      %v3721 = vld [vmem:[%s3715 + $0x14] sm:$0xf]
      %v3722 = vld [vmem:[%s3715 + $0x18] sm:$0xf]
      %v3723 = vld [vmem:[%s3715 + $0x1c] sm:$0xf]
      %v3724 = vld [vmem:[%s3715 + $0x20] sm:$0xf]
      %v3725 = vld [vmem:[%s3715 + $0x24] sm:$0xf]
      %v3726 = vld [vmem:[%s3715 + $0x28] sm:$0xf]
      %v3727 = vld [vmem:[%s3715 + $0x2c] sm:$0xf]
      %v3728 = vld [vmem:[%s3715 + $0x30] sm:$0xf]
      %v3729 = vld [vmem:[%s3715 + $0x34] sm:$0xf]
      %v3730 = vld [vmem:[%s3715 + $0x38] sm:$0xf]
      %v3731 = vld [vmem:[%s3715 + $0x3c] sm:$0xf]
      %v3733 = vrot.slane %v3714, 2
      %v3751 = vunpack.c.l.b16 %v3716
      %v3752 = vunpack.c.l.b16 %v3717
      %v3753 = vunpack.c.l.b16 %v3718
      %v3754 = vunpack.c.l.b16 %v3719
      %v3755 = vunpack.c.l.b16 %v3720
      %v3756 = vunpack.c.l.b16 %v3721
      %v3757 = vunpack.c.l.b16 %v3722
      %v3758 = vunpack.c.l.b16 %v3723
      %v3759 = vunpack.c.l.b16 %v3724
      %v3760 = vunpack.c.l.b16 %v3725
      %v3761 = vunpack.c.l.b16 %v3726
      %v3762 = vunpack.c.l.b16 %v3727
      %v3763 = vunpack.c.l.b16 %v3728
      %v3764 = vunpack.c.l.b16 %v3729
      %v3765 = vunpack.c.l.b16 %v3730
      %v3766 = vunpack.c.l.b16 %v3731
      %v3767 = vpack.c.b16 %v3752, %v3751
      %v3768 = vpack.c.b16 %v3754, %v3753
      %v3769 = vpack.c.b16 %v3756, %v3755
      %v3770 = vpack.c.b16 %v3758, %v3757
      %v3771 = vpack.c.b16 %v3760, %v3759
      %v3772 = vpack.c.b16 %v3762, %v3761
      %v3773 = vpack.c.b16 %v3764, %v3763
      %v3774 = vpack.c.b16 %v3766, %v3765
      %3783 = vmatprep.subr.bf16.mxu0 0
      %3784 = vmatpush1.bf16.msra.mxu0 %v3767
      %3785 = vmatprep.subr.bf16.mxu0 0
      %3786 = vmatpush1.bf16.msra.mxu0 %v3768
      %3787 = vmatprep.subr.bf16.mxu0 0
      %3788 = vmatpush1.bf16.msra.mxu0 %v3769
      %3789 = vmatprep.subr.bf16.mxu0 0
      %3790 = vmatpush1.bf16.msra.mxu0 %v3770
      %3791 = vmatprep.subr.bf16.mxu0 0
      %3792 = vmatpush1.bf16.msra.mxu0 %v3771
      %3793 = vmatprep.subr.bf16.mxu0 0
      %3794 = vmatpush1.bf16.msra.mxu0 %v3772
      %3795 = vmatprep.subr.bf16.mxu0 0
      %3796 = vmatpush1.bf16.msra.mxu0 %v3773
      %3797 = vmatprep.subr.bf16.mxu0 0
      %3798 = vmatpush1.bf16.msra.mxu0 %v3774
      %3799 = vmatprep.subr.bf16.mxu0 0
      %3800 = vmatpush1.bf16.msra.mxu0 0
      %3801 = vmatprep.subr.bf16.mxu0 0
      %3802 = vmatpush1.bf16.msra.mxu0 0
      %3803 = vmatprep.subr.bf16.mxu0 0
      %3804 = vmatpush1.bf16.msra.mxu0 0
      %3805 = vmatprep.subr.bf16.mxu0 0
      %3806 = vmatpush1.bf16.msra.mxu0 0
      %3807 = vmatprep.subr.bf16.mxu0 0
      %3808 = vmatpush1.bf16.msra.mxu0 0
      %3809 = vmatprep.subr.bf16.mxu0 0
      %3810 = vmatpush1.bf16.msra.mxu0 0
      %3811 = vmatprep.subr.bf16.mxu0 0
      %3812 = vmatpush1.bf16.msra.mxu0 0
      %3813 = vmatprep.subr.bf16.mxu0 0
      %3814 = vmatpush1.bf16.msra.mxu0 0
      %3815 = vmatprep.mubr.bf16.mxu0 0
      %3816 = vmatmul.mubr.bf16.gmra.mrb[0].mxu0 %v3733
      %v3817 = vpop.f32.mrb[0].mxu0
      %v3818 = vadd.f32 0.0, %v3817
      %v3819 = vpop.f32.mrb[0].mxu0
      %v3820 = vpop.f32.mrb[0].mxu0
      %v3821 = vpop.f32.mrb[0].mxu0
      %3822 = vdwg.mxu0
      %v3823 = vadd.f32 %v3711, %v3818
      %v3824 = vld [vmem:[#allocation2] sm:$0xe0]
      %v3825 = vld [vmem:[#allocation2 + $0x10] sm:$0x3]
      %v3826 = vpack.c.bf16 %v3825, %v3824
      %s3827 = scalar_lea.vmem %s11, 256
      %v3828 = vld [vmem:[%s3827] sm:$0xf]
      %v3829 = vld [vmem:[%s3827 + $0x4] sm:$0xf]
      %v3830 = vld [vmem:[%s3827 + $0x8] sm:$0xf]
      %v3831 = vld [vmem:[%s3827 + $0xc] sm:$0xf]
      %v3832 = vld [vmem:[%s3827 + $0x10] sm:$0xf]
      %v3833 = vld [vmem:[%s3827 + $0x14] sm:$0xf]
      %v3834 = vld [vmem:[%s3827 + $0x18] sm:$0xf]
      %v3835 = vld [vmem:[%s3827 + $0x1c] sm:$0xf]
      %v3836 = vld [vmem:[%s3827 + $0x20] sm:$0xf]
      %v3837 = vld [vmem:[%s3827 + $0x24] sm:$0xf]
      %v3838 = vld [vmem:[%s3827 + $0x28] sm:$0xf]
      %v3839 = vld [vmem:[%s3827 + $0x2c] sm:$0xf]
      %v3840 = vld [vmem:[%s3827 + $0x30] sm:$0xf]
      %v3841 = vld [vmem:[%s3827 + $0x34] sm:$0xf]
      %v3842 = vld [vmem:[%s3827 + $0x38] sm:$0xf]
      %v3843 = vld [vmem:[%s3827 + $0x3c] sm:$0xf]
      %v3845 = vshrl.u32 %v3826, 16
      %v3847 = vrot.slane %v3845, 2
      %v3848 = vshll.u32 %v3826, 16
      %v3850 = vrot.slane %v3848, 3
      %v3851 = vor.u32 %v3847, %v3850
      %v3869 = vunpack.c.l.b16 %v3828
      %v3870 = vunpack.c.l.b16 %v3829
      %v3871 = vunpack.c.l.b16 %v3830
      %v3872 = vunpack.c.l.b16 %v3831
      %v3873 = vunpack.c.l.b16 %v3832
      %v3874 = vunpack.c.l.b16 %v3833
      %v3875 = vunpack.c.l.b16 %v3834
      %v3876 = vunpack.c.l.b16 %v3835
      %v3877 = vunpack.c.l.b16 %v3836
      %v3878 = vunpack.c.l.b16 %v3837
      %v3879 = vunpack.c.l.b16 %v3838
      %v3880 = vunpack.c.l.b16 %v3839
      %v3881 = vunpack.c.l.b16 %v3840
      %v3882 = vunpack.c.l.b16 %v3841
      %v3883 = vunpack.c.l.b16 %v3842
      %v3884 = vunpack.c.l.b16 %v3843
      %v3885 = vpack.c.b16 %v3870, %v3869
      %v3886 = vpack.c.b16 %v3872, %v3871
      %v3887 = vpack.c.b16 %v3874, %v3873
      %v3888 = vpack.c.b16 %v3876, %v3875
      %v3889 = vpack.c.b16 %v3878, %v3877
      %v3890 = vpack.c.b16 %v3880, %v3879
      %v3891 = vpack.c.b16 %v3882, %v3881
      %v3892 = vpack.c.b16 %v3884, %v3883
      %3901 = vmatprep.subr.bf16.mxu0 0
      %3902 = vmatpush1.bf16.msra.mxu0 %v3885
      %3903 = vmatprep.subr.bf16.mxu0 0
      %3904 = vmatpush1.bf16.msra.mxu0 %v3886
      %3905 = vmatprep.subr.bf16.mxu0 0
      %3906 = vmatpush1.bf16.msra.mxu0 %v3887
      %3907 = vmatprep.subr.bf16.mxu0 0
      %3908 = vmatpush1.bf16.msra.mxu0 %v3888
      %3909 = vmatprep.subr.bf16.mxu0 0
      %3910 = vmatpush1.bf16.msra.mxu0 %v3889
      %3911 = vmatprep.subr.bf16.mxu0 0
      %3912 = vmatpush1.bf16.msra.mxu0 %v3890
      %3913 = vmatprep.subr.bf16.mxu0 0
      %3914 = vmatpush1.bf16.msra.mxu0 %v3891
      %3915 = vmatprep.subr.bf16.mxu0 0
      %3916 = vmatpush1.bf16.msra.mxu0 %v3892
      %3917 = vmatprep.subr.bf16.mxu0 0
      %3918 = vmatpush1.bf16.msra.mxu0 0
      %3919 = vmatprep.subr.bf16.mxu0 0
      %3920 = vmatpush1.bf16.msra.mxu0 0
      %3921 = vmatprep.subr.bf16.mxu0 0
      %3922 = vmatpush1.bf16.msra.mxu0 0
      %3923 = vmatprep.subr.bf16.mxu0 0
      %3924 = vmatpush1.bf16.msra.mxu0 0
      %3925 = vmatprep.subr.bf16.mxu0 0
      %3926 = vmatpush1.bf16.msra.mxu0 0
      %3927 = vmatprep.subr.bf16.mxu0 0
      %3928 = vmatpush1.bf16.msra.mxu0 0
      %3929 = vmatprep.subr.bf16.mxu0 0
      %3930 = vmatpush1.bf16.msra.mxu0 0
      %3931 = vmatprep.subr.bf16.mxu0 0
      %3932 = vmatpush1.bf16.msra.mxu0 0
      %3933 = vmatprep.mubr.bf16.mxu0 0
      %3934 = vmatmul.mubr.bf16.gmra.mrb[0].mxu0 %v3851
      %v3935 = vpop.f32.mrb[0].mxu0
      %v3936 = vadd.f32 0.0, %v3935
      %v3937 = vpop.f32.mrb[0].mxu0
      %v3938 = vpop.f32.mrb[0].mxu0
      %v3939 = vpop.f32.mrb[0].mxu0
      %3940 = vdwg.mxu0
      %v3941 = vadd.f32 %v3823, %v3936
      %v3942 = vld [vmem:[%s12] sm:$0x1]
      %v3944 = vlaneseq
      %v3945 = vshrl.u32 %v3944, 7
      %v3946 = vsub.s32 0, %v3945
      %v3947 = vrot.slane %v3942, %v3946
      %v3949 = vadd.f32 %v3941, %v3947
      %v3950 = vmax.f32 %v3949, 0.0
      %v3952 = vrot.slane %v3950, 5
      %3954 = vst.msk [vmem:[#allocation2] sm:$0xf8] %vm762, %v3952
      %v3955 = vld [vmem:[#allocation2] sm:$0x7c]
      %v3956 = vpack.c.bf16 %v3955, %v3955
      %v3957 = vld [vmem:[%s13] sm:$0xf]
      %v3958 = vld [vmem:[%s13 + $0x4] sm:$0xf]
      %v3959 = vld [vmem:[%s13 + $0x8] sm:$0xf]
      %v3960 = vld [vmem:[%s13 + $0xc] sm:$0xf]
      %v3961 = vld [vmem:[%s13 + $0x10] sm:$0xf]
      %v3962 = vld [vmem:[%s13 + $0x14] sm:$0xf]
      %v3963 = vld [vmem:[%s13 + $0x18] sm:$0xf]
      %v3964 = vld [vmem:[%s13 + $0x1c] sm:$0xf]
      %v3965 = vld [vmem:[#allocation2] sm:$0xf8]
      %v3966 = vpack.c.bf16 %v3965, %v3965
      %s3967 = scalar_lea.vmem %s13, 32
      %v3968 = vld [vmem:[%s3967] sm:$0xf]
      %v3969 = vld [vmem:[%s3967 + $0x4] sm:$0xf]
      %v3970 = vld [vmem:[%s3967 + $0x8] sm:$0xf]
      %v3971 = vld [vmem:[%s3967 + $0xc] sm:$0xf]
      %v3972 = vld [vmem:[%s3967 + $0x10] sm:$0xf]
      %v3973 = vld [vmem:[%s3967 + $0x14] sm:$0xf]
      %v3974 = vld [vmem:[%s3967 + $0x18] sm:$0xf]
      %v3975 = vld [vmem:[%s3967 + $0x1c] sm:$0xf]
      %v3977 = vshrl.u32 %v3966, 16
      %v3979 = vrot.slane %v3977, 1
      %v3980 = vshll.u32 %v3966, 16
      %v3982 = vrot.slane %v3980, 2
      %v3983 = vor.u32 %v3979, %v3982
      %v3992 = vunpack.c.l.b16 %v3968
      %v3993 = vunpack.c.l.b16 %v3969
      %v3994 = vunpack.c.l.b16 %v3970
      %v3995 = vunpack.c.l.b16 %v3971
      %v3996 = vunpack.c.l.b16 %v3972
      %v3997 = vunpack.c.l.b16 %v3973
      %v3998 = vunpack.c.l.b16 %v3974
      %v3999 = vunpack.c.l.b16 %v3975
      %v4000 = vpack.c.b16 %v3993, %v3992
      %v4001 = vpack.c.b16 %v3995, %v3994
      %v4002 = vpack.c.b16 %v3997, %v3996
      %v4003 = vpack.c.b16 %v3999, %v3998
      %v4009 = vsel %vm811, %v3983, 0
      %4011 = vmatprep.subr.bf16.mxu0 0
      %4012 = vmatpush1.bf16.msra.mxu0 %v4000
      %4013 = vmatprep.subr.bf16.mxu0 0
      %4014 = vmatpush1.bf16.msra.mxu0 %v4001
      %4015 = vmatprep.subr.bf16.mxu0 0
      %4016 = vmatpush1.bf16.msra.mxu0 %v4002
      %4017 = vmatprep.subr.bf16.mxu0 0
      %4018 = vmatpush1.bf16.msra.mxu0 %v4003
      %4019 = vmatprep.subr.bf16.mxu0 0
      %4020 = vmatpush1.bf16.msra.mxu0 0
      %4021 = vmatprep.subr.bf16.mxu0 0
      %4022 = vmatpush1.bf16.msra.mxu0 0
      %4023 = vmatprep.subr.bf16.mxu0 0
      %4024 = vmatpush1.bf16.msra.mxu0 0
      %4025 = vmatprep.subr.bf16.mxu0 0
      %4026 = vmatpush1.bf16.msra.mxu0 0
      %4027 = vmatprep.subr.bf16.mxu0 0
      %4028 = vmatpush1.bf16.msra.mxu0 0
      %4029 = vmatprep.subr.bf16.mxu0 0
      %4030 = vmatpush1.bf16.msra.mxu0 0
      %4031 = vmatprep.subr.bf16.mxu0 0
      %4032 = vmatpush1.bf16.msra.mxu0 0
      %4033 = vmatprep.subr.bf16.mxu0 0
      %4034 = vmatpush1.bf16.msra.mxu0 0
      %4035 = vmatprep.subr.bf16.mxu0 0
      %4036 = vmatpush1.bf16.msra.mxu0 0
      %4037 = vmatprep.subr.bf16.mxu0 0
      %4038 = vmatpush1.bf16.msra.mxu0 0
      %4039 = vmatprep.subr.bf16.mxu0 0
      %4040 = vmatpush1.bf16.msra.mxu0 0
      %4041 = vmatprep.subr.bf16.mxu0 0
      %4042 = vmatpush1.bf16.msra.mxu0 0
      %4043 = vmatprep.mubr.bf16.mxu0 0
      %4044 = vmatmul.mubr.bf16.gmra.mrb[0].mxu0 %v4009
      %v4045 = vpop.f32.mrb[0].mxu0
      %v4046 = vadd.f32 0.0, %v4045
      %v4047 = vpop.f32.mrb[0].mxu0
      %v4048 = vpop.f32.mrb[0].mxu0
      %v4049 = vpop.f32.mrb[0].mxu0
      %4050 = vdwg.mxu0
      %v4052 = vrot.slane %v3956, 1
      %v4061 = vunpack.c.l.b16 %v3957
      %v4062 = vunpack.c.l.b16 %v3958
      %v4063 = vunpack.c.l.b16 %v3959
      %v4064 = vunpack.c.l.b16 %v3960
      %v4065 = vunpack.c.l.b16 %v3961
      %v4066 = vunpack.c.l.b16 %v3962
      %v4067 = vunpack.c.l.b16 %v3963
      %v4068 = vunpack.c.l.b16 %v3964
      %v4069 = vpack.c.b16 %v4062, %v4061
      %v4070 = vpack.c.b16 %v4064, %v4063
      %v4071 = vpack.c.b16 %v4066, %v4065
      %v4072 = vpack.c.b16 %v4068, %v4067
      %v4078 = vsel %vm811, %v4052, 0
      %4080 = vmatprep.subr.bf16.mxu0 0
      %4081 = vmatpush1.bf16.msra.mxu0 %v4069
      %4082 = vmatprep.subr.bf16.mxu0 0
      %4083 = vmatpush1.bf16.msra.mxu0 %v4070
      %4084 = vmatprep.subr.bf16.mxu0 0
      %4085 = vmatpush1.bf16.msra.mxu0 %v4071
      %4086 = vmatprep.subr.bf16.mxu0 0
      %4087 = vmatpush1.bf16.msra.mxu0 %v4072
      %4088 = vmatprep.subr.bf16.mxu0 0
      %4089 = vmatpush1.bf16.msra.mxu0 0
      %4090 = vmatprep.subr.bf16.mxu0 0
      %4091 = vmatpush1.bf16.msra.mxu0 0
      %4092 = vmatprep.subr.bf16.mxu0 0
      %4093 = vmatpush1.bf16.msra.mxu0 0
      %4094 = vmatprep.subr.bf16.mxu0 0
      %4095 = vmatpush1.bf16.msra.mxu0 0
      %4096 = vmatprep.subr.bf16.mxu0 0
      %4097 = vmatpush1.bf16.msra.mxu0 0
      %4098 = vmatprep.subr.bf16.mxu0 0
      %4099 = vmatpush1.bf16.msra.mxu0 0
      %4100 = vmatprep.subr.bf16.mxu0 0
      %4101 = vmatpush1.bf16.msra.mxu0 0
      %4102 = vmatprep.subr.bf16.mxu0 0
      %4103 = vmatpush1.bf16.msra.mxu0 0
      %4104 = vmatprep.subr.bf16.mxu0 0
      %4105 = vmatpush1.bf16.msra.mxu0 0
      %4106 = vmatprep.subr.bf16.mxu0 0
      %4107 = vmatpush1.bf16.msra.mxu0 0
      %4108 = vmatprep.subr.bf16.mxu0 0
      %4109 = vmatpush1.bf16.msra.mxu0 0
      %4110 = vmatprep.subr.bf16.mxu0 0
      %4111 = vmatpush1.bf16.msra.mxu0 0
      %4112 = vmatprep.mubr.bf16.mxu0 0
      %4113 = vmatmul.mubr.bf16.gmra.mrb[0].mxu0 %v4078
      %v4114 = vpop.f32.mrb[0].mxu0
      %v4115 = vadd.f32 %v4046, %v4114
      %v4116 = vpop.f32.mrb[0].mxu0
      %v4117 = vpop.f32.mrb[0].mxu0
      %v4118 = vpop.f32.mrb[0].mxu0
      %4119 = vdwg.mxu0
      %v4120 = vld [vmem:[#allocation2] sm:$0xf0]
      %v4121 = vld [vmem:[#allocation2 + $0x10] sm:$0x1]
      %v4122 = vpack.c.bf16 %v4121, %v4120
      %s4123 = scalar_lea.vmem %s13, 64
      %v4124 = vld [vmem:[%s4123] sm:$0xf]
      %v4125 = vld [vmem:[%s4123 + $0x4] sm:$0xf]
      %v4126 = vld [vmem:[%s4123 + $0x8] sm:$0xf]
      %v4127 = vld [vmem:[%s4123 + $0xc] sm:$0xf]
      %v4128 = vld [vmem:[%s4123 + $0x10] sm:$0xf]
      %v4129 = vld [vmem:[%s4123 + $0x14] sm:$0xf]
      %v4130 = vld [vmem:[%s4123 + $0x18] sm:$0xf]
      %v4131 = vld [vmem:[%s4123 + $0x1c] sm:$0xf]
      %v4133 = vrot.slane %v4122, 2
      %v4142 = vunpack.c.l.b16 %v4124
      %v4143 = vunpack.c.l.b16 %v4125
      %v4144 = vunpack.c.l.b16 %v4126
      %v4145 = vunpack.c.l.b16 %v4127
      %v4146 = vunpack.c.l.b16 %v4128
      %v4147 = vunpack.c.l.b16 %v4129
      %v4148 = vunpack.c.l.b16 %v4130
      %v4149 = vunpack.c.l.b16 %v4131
      %v4150 = vpack.c.b16 %v4143, %v4142
      %v4151 = vpack.c.b16 %v4145, %v4144
      %v4152 = vpack.c.b16 %v4147, %v4146
      %v4153 = vpack.c.b16 %v4149, %v4148
      %v4159 = vsel %vm811, %v4133, 0
      %4161 = vmatprep.subr.bf16.mxu0 0
      %4162 = vmatpush1.bf16.msra.mxu0 %v4150
      %4163 = vmatprep.subr.bf16.mxu0 0
      %4164 = vmatpush1.bf16.msra.mxu0 %v4151
      %4165 = vmatprep.subr.bf16.mxu0 0
      %4166 = vmatpush1.bf16.msra.mxu0 %v4152
      %4167 = vmatprep.subr.bf16.mxu0 0
      %4168 = vmatpush1.bf16.msra.mxu0 %v4153
      %4169 = vmatprep.subr.bf16.mxu0 0
      %4170 = vmatpush1.bf16.msra.mxu0 0
      %4171 = vmatprep.subr.bf16.mxu0 0
      %4172 = vmatpush1.bf16.msra.mxu0 0
      %4173 = vmatprep.subr.bf16.mxu0 0
      %4174 = vmatpush1.bf16.msra.mxu0 0
      %4175 = vmatprep.subr.bf16.mxu0 0
      %4176 = vmatpush1.bf16.msra.mxu0 0
      %4177 = vmatprep.subr.bf16.mxu0 0
      %4178 = vmatpush1.bf16.msra.mxu0 0
      %4179 = vmatprep.subr.bf16.mxu0 0
      %4180 = vmatpush1.bf16.msra.mxu0 0
      %4181 = vmatprep.subr.bf16.mxu0 0
      %4182 = vmatpush1.bf16.msra.mxu0 0
      %4183 = vmatprep.subr.bf16.mxu0 0
      %4184 = vmatpush1.bf16.msra.mxu0 0
      %4185 = vmatprep.subr.bf16.mxu0 0
      %4186 = vmatpush1.bf16.msra.mxu0 0
      %4187 = vmatprep.subr.bf16.mxu0 0
      %4188 = vmatpush1.bf16.msra.mxu0 0
      %4189 = vmatprep.subr.bf16.mxu0 0
      %4190 = vmatpush1.bf16.msra.mxu0 0
      %4191 = vmatprep.subr.bf16.mxu0 0
      %4192 = vmatpush1.bf16.msra.mxu0 0
      %4193 = vmatprep.mubr.bf16.mxu0 0
      %4194 = vmatmul.mubr.bf16.gmra.mrb[0].mxu0 %v4159
      %v4195 = vpop.f32.mrb[0].mxu0
      %v4196 = vadd.f32 0.0, %v4195
      %v4197 = vpop.f32.mrb[0].mxu0
      %v4198 = vpop.f32.mrb[0].mxu0
      %v4199 = vpop.f32.mrb[0].mxu0
      %4200 = vdwg.mxu0
      %v4201 = vadd.f32 %v4115, %v4196
      %v4202 = vld [vmem:[%s14] sm:$0x1]
      %v4204 = vlaneseq
      %v4205 = vshrl.u32 %v4204, 7
      %v4206 = vsub.s32 0, %v4205
      %v4207 = vrot.slane %v4202, %v4206
      %v4209 = vadd.f32 %v4201, %v4207
      %v4210 = vtanh.pop %v4209
      %vm4211 = vcmask 413696
      %4212 = vst.msk [vmem:[%s489] sm:$0x1f] %vm4211, %v4210
      %p4213 = scmp.lt.s32.totalorder %s26, 1
      %s4214 = scalar_select %p4213, %s26, 1
      %s4215 = smul.addr %s4214, 8
      %s4216 = scalar_lea.vmem %s15, %s4215
      // Predicated region
      $region81: #{_lambda_.1} parent=79 // pred_check
        %p4217 = pneg %p364
      $region82: #{_lambda_.1} parent=79 // pred_check_branch
        %4219 = sbr.rel (%p4217) target = $region84
      $region83: #{_lambda_.1} parent=79 // pred_region
        _
      $region84: #{_lambda_.1} parent=79 // pred_fallthru
        _
    $region80: #{_lambda_.1} parent=5 // pred_fallthru
      _
    %p4220 = scmp.le.s32.totalorder 2, %s21
    // Predicated region
    $region85: #{_lambda_.1} parent=5 // pred_check
      %p4221 = pneg %p4220
    $region86: #{_lambda_.1} parent=5 // pred_check_branch
      %4223 = sbr.rel (%p4221) target = $region88
    $region87: #{_lambda_.1} parent=5 // pred_region
      %s4224 = ssub.s32 %s21, 2
      // Predicated region
      $region89: #{_lambda_.1} parent=87 // pred_check
        %p4225 = pneg %p370
      $region90: #{_lambda_.1} parent=87 // pred_check_branch
        %4227 = sbr.rel (%p4225) target = $region92
      $region91: #{_lambda_.1} parent=87 // pred_region
        %p4228 = scmp.lt.s32.totalorder %s27, 1
        %s4229 = scalar_select %p4228, %s27, 1
        %s4230 = smul.addr %s4229, 8
        %s4231 = scalar_lea.vmem %s15, %s4230
      $region92: #{_lambda_.1} parent=87 // pred_fallthru
        _
    $region88: #{_lambda_.1} parent=5 // pred_fallthru
      _
  $region6: #{_lambda_.1} parent=0 // loop_footer
    %s25 = sadd.s32 1, %s21
  $region7: #{_lambda_.1} parent=0 // loop_footer_branch
    %20 = sbr.rel target = $region3
  $region8: #{_lambda_.1} parent=0 // loop_exit
    _

</llo_original>
